<compile_context>
chip_gen: v7x
topology: tpu7x:2x2x1
jax: 0.10.0
libtpu: 0.0.40
codegen_flags: <defaults>
</compile_context>

<pallas_src>
import functools

import jax
import jax.numpy as jnp
from jax.experimental import pallas as pl
from jax.experimental.pallas import tpu as pltpu


def gru_context_kernel(obs_ref, act_ref, w_io_ref, w_ia_ref, w_hh_ref,
                       b_rzn_ref, b_hn_ref, w_head_ref, b_head_ref,
                       out_ref, gi_r_ref, gi_z_ref, gi_n_ref, *, T, B):
    """Single-invocation kernel: hoisted input projection + GRU recurrence + head.

    obs_ref : (T*B, obs_dim)   time-major flattened observations (B padded to 8k)
    act_ref : (T*B, act_dim)   time-major flattened actions
    w_io    : (3, obs_dim, H)  input->hidden weights (obs part), gates (r,z,n)
    w_ia    : (3, act_dim, H)  input->hidden weights (act part)
    w_hh    : (3, H, H)        hidden->hidden weights
    b_rzn   : (3, 1, H)        biases: r,z = b_ih+b_hh pre-summed; n = b_ih only
    b_hn    : (1, H)           hidden bias of the n gate (kept separate)
    w_head  : (H, C), b_head : (1, C)
    out_ref : (B, C)
    gi_*    : (T*B, H) f32 VMEM scratch holding the hoisted input projection.
    """
    H = w_hh_ref.shape[-1]
    mxu_dtype = w_hh_ref.dtype

    obs2d = obs_ref[...].astype(mxu_dtype)
    act2d = act_ref[...].astype(mxu_dtype)

    # ---- Phase 1: hoisted input projection (off the serial critical path) ----
    # One big (T*B, D) matmul per gate instead of T tiny ones inside the loop.
    gi_refs = (gi_r_ref, gi_z_ref, gi_n_ref)
    for g in range(3):  # static gate index -> leading-axis ref index, no lane slicing
        gi = (jnp.dot(obs2d, w_io_ref[g], preferred_element_type=jnp.float32)
              + jnp.dot(act2d, w_ia_ref[g], preferred_element_type=jnp.float32)
              + b_rzn_ref[g])
        gi_refs[g][...] = gi

    # ---- Phase 2: sequential GRU recurrence (only h @ W_hh per step) ----
    w_r = w_hh_ref[0]
    w_z = w_hh_ref[1]
    w_n = w_hh_ref[2]
    b_hn = b_hn_ref[...]

    def step(t, h):
        hm = h.astype(mxu_dtype)
        gh_r = jnp.dot(hm, w_r, preferred_element_type=jnp.float32)
        gh_z = jnp.dot(hm, w_z, preferred_element_type=jnp.float32)
        gh_n = jnp.dot(hm, w_n, preferred_element_type=jnp.float32) + b_hn
        # B is a multiple of 8 (wrapper pads), so this slice starts on a
        # sublane-tile boundary -> pure addressing, no cross-sublane shuffle.
        rows = pl.ds(pl.multiple_of(t * B, 8), B)
        r = jax.nn.sigmoid(gi_r_ref[rows, :] + gh_r)
        z = jax.nn.sigmoid(gi_z_ref[rows, :] + gh_z)
        n = jnp.tanh(gi_n_ref[rows, :] + r * gh_n)
        return (1.0 - z) * n + z * h                 # f32 gate math / blend

    h0 = jnp.zeros((B, H), jnp.float32)              # hidden=None -> zeros
    h_T = jax.lax.fori_loop(0, T, step, h0, unroll=True)

    # ---- Phase 3: context head: relu(h_T) @ W_head + b_head ----
    ctx = (jnp.dot(jax.nn.relu(h_T).astype(mxu_dtype), w_head_ref[...],
                   preferred_element_type=jnp.float32)
           + b_head_ref[...])
    out_ref[...] = ctx.astype(out_ref.dtype)


def context_model_forward(obs, acts, kp):
    """obs: (B, T, obs_dim), acts: (B, T, act_dim) -> context_pred (B, C)."""
    B, T, obs_dim = obs.shape
    act_dim = acts.shape[-1]
    H = kp["w_hh"].shape[-1]
    C = kp["w_head"].shape[-1]

    # Pad batch to a multiple of 8 so each timestep occupies whole sublane
    # tiles (padded rows are independent garbage and are sliced off below).
    B_pad = max(8, ((B + 7) // 8) * 8)

    # Time-major (row = t*B_pad + b): all rows of one timestep are a contiguous,
    # tile-aligned slice of the hoisted projection.  No concat, no in-kernel reshape.
    obs_tm = jnp.transpose(obs, (1, 0, 2)).astype(jnp.float32)   # (T, B, obs_dim)
    act_tm = jnp.transpose(acts, (1, 0, 2)).astype(jnp.float32)  # (T, B, act_dim)
    if B_pad != B:
        pad = ((0, 0), (0, B_pad - B), (0, 0))
        obs_tm = jnp.pad(obs_tm, pad)
        act_tm = jnp.pad(act_tm, pad)
    obs_tm = obs_tm.reshape(T * B_pad, obs_dim)
    act_tm = act_tm.reshape(T * B_pad, act_dim)

    kernel = functools.partial(gru_context_kernel, T=T, B=B_pad)
    out = pl.pallas_call(
        kernel,
        out_shape=jax.ShapeDtypeStruct((B_pad, C), jnp.float32),
        # No grid: single invocation, every operand is a full VMEM block fetched once.
        scratch_shapes=[
            pltpu.VMEM((T * B_pad, H), jnp.float32),   # gi_r
            pltpu.VMEM((T * B_pad, H), jnp.float32),   # gi_z
            pltpu.VMEM((T * B_pad, H), jnp.float32),   # gi_n
        ],
    )(obs_tm, act_tm, kp["w_io"], kp["w_ia"], kp["w_hh"],
      kp["b_rzn"], kp["b_hn"], kp["w_head"], kp["b_head"])
    return out[:B]


# ----------------------------- parameter handling -----------------------------

def init_torch_params(key, obs_dim, act_dim, hidden_dim, context_dim):
    """Parameters in torch.nn.GRUCell / nn.Linear layout (rows = (r, z, n))."""
    d_in = obs_dim + act_dim
    ks = jax.random.split(key, 6)
    s = 0.1
    return {
        "gru_w_ih": s * jax.random.normal(ks[0], (3 * hidden_dim, d_in), jnp.float32),
        "gru_w_hh": s * jax.random.normal(ks[1], (3 * hidden_dim, hidden_dim), jnp.float32),
        "gru_b_ih": s * jax.random.normal(ks[2], (3 * hidden_dim,), jnp.float32),
        "gru_b_hh": s * jax.random.normal(ks[3], (3 * hidden_dim,), jnp.float32),
        "head_w": s * jax.random.normal(ks[4], (context_dim, hidden_dim), jnp.float32),
        "head_b": s * jax.random.normal(ks[5], (context_dim,), jnp.float32),
    }


def pack_params(tp, obs_dim, mxu_dtype=jnp.float32):
    """Convert torch-layout params to the kernel layout.

    Set mxu_dtype=jnp.bfloat16 on v6e/v7x to feed the MXU bf16 operands
    (accumulation / gate math stay f32 inside the kernel).
    """
    H = tp["gru_w_hh"].shape[1]

    def split_gates(a, axis):
        return jnp.stack(jnp.split(a, 3, axis=axis), axis=0)   # -> (3, ...)

    w_ih_g = split_gates(tp["gru_w_ih"].T, axis=-1)             # (3, D_in, H)
    w_hh_g = split_gates(tp["gru_w_hh"].T, axis=-1)             # (3, H, H)
    b_ih_g = split_gates(tp["gru_b_ih"], axis=0).reshape(3, 1, H)
    b_hh_g = split_gates(tp["gru_b_hh"], axis=0).reshape(3, 1, H)

    # Pre-sum biases for r and z; n keeps b_hh_n separate (r * (W_hn h + b_hn)).
    b_rzn = jnp.concatenate([b_ih_g[:2] + b_hh_g[:2], b_ih_g[2:3]], axis=0)  # (3,1,H)
    b_hn = b_hh_g[2]                                                         # (1, H)

    return {
        "w_io": w_ih_g[:, :obs_dim, :].astype(mxu_dtype),       # (3, obs_dim, H)
        "w_ia": w_ih_g[:, obs_dim:, :].astype(mxu_dtype),       # (3, act_dim, H)
        "w_hh": w_hh_g.astype(mxu_dtype),                       # (3, H, H)
        "b_rzn": b_rzn.astype(jnp.float32),
        "b_hn": b_hn.astype(jnp.float32),
        "w_head": tp["head_w"].T.astype(mxu_dtype),             # (H, C)
        "b_head": tp["head_b"].reshape(1, -1).astype(jnp.float32),
    }


# ----------------------------- pure-JAX reference ------------------------------

def ref_forward(obs, acts, tp):
    """Pure-JAX mirror of the PyTorch ContextModel.forward (torch layouts)."""
    hi = jax.lax.Precision.HIGHEST   # true-f32 reference matmuls
    x = jnp.concatenate([obs, acts], axis=-1).astype(jnp.float32)
    B, T, _ = x.shape
    H = tp["gru_w_hh"].shape[1]
    h = jnp.zeros((B, H), jnp.float32)
    for t in range(T):
        gi = jnp.dot(x[:, t], tp["gru_w_ih"].T, precision=hi) + tp["gru_b_ih"]
        gh = jnp.dot(h, tp["gru_w_hh"].T, precision=hi) + tp["gru_b_hh"]
        r = jax.nn.sigmoid(gi[:, :H] + gh[:, :H])
        z = jax.nn.sigmoid(gi[:, H:2 * H] + gh[:, H:2 * H])
        n = jnp.tanh(gi[:, 2 * H:] + r * gh[:, 2 * H:])
        h = (1.0 - z) * n + z * h
    return jnp.dot(jax.nn.relu(h), tp["head_w"].T, precision=hi) + tp["head_b"]


if __name__ == "__main__":
    B, T = 2, 8
    obs_dim, act_dim = 12, 4
    hidden_dim, context_dim = 32, 8

    key = jax.random.PRNGKey(0)
    k_obs, k_act, k_par = jax.random.split(key, 3)
    obs = jax.random.normal(k_obs, (B, T, obs_dim), jnp.float32)
    acts = jax.random.normal(k_act, (B, T, act_dim), jnp.float32)

    tp = init_torch_params(k_par, obs_dim, act_dim, hidden_dim, context_dim)
    kp = pack_params(tp, obs_dim)               # f32 MXU operands (tight check)

    out = context_model_forward(obs, acts, kp)
    out = jax.block_until_ready(out)

    ref = ref_forward(obs, acts, tp)
    assert out.shape == (B, context_dim)
    # Tolerance covers MXU f32 multi-pass rounding; semantic bugs are O(1e-1).
    assert jnp.allclose(out, ref, atol=1e-3, rtol=1e-3), "mismatch vs reference"

    print("KERNEL_OK")
</pallas_src>

<mosaic_0001>
module attributes {stable_mosaic.version = 11 : i64} {
  func.func @gru_context_kernel(%arg0: memref<64x12xf32, #tpu.memory_space<vmem>>, %arg1: memref<64x4xf32, #tpu.memory_space<vmem>>, %arg2: memref<3x12x32xf32, #tpu.memory_space<vmem>>, %arg3: memref<3x4x32xf32, #tpu.memory_space<vmem>>, %arg4: memref<3x32x32xf32, #tpu.memory_space<vmem>>, %arg5: memref<3x1x32xf32, #tpu.memory_space<vmem>>, %arg6: memref<1x32xf32, #tpu.memory_space<vmem>>, %arg7: memref<32x8xf32, #tpu.memory_space<vmem>>, %arg8: memref<1x8xf32, #tpu.memory_space<vmem>>, %arg9: memref<8x8xf32, #tpu.memory_space<vmem>>, %arg10: memref<64x32xf32, #tpu.memory_space<vmem>>, %arg11: memref<64x32xf32, #tpu.memory_space<vmem>>, %arg12: memref<64x32xf32, #tpu.memory_space<vmem>>) attributes {dimension_semantics = [], scalar_prefetch = 0 : i64, scratch_operands = 3 : i64, tpu.core_type = #tpu.core_type<tc>} {
    %c0 = arith.constant 0 : index
    %c0_0 = arith.constant 0 : index
    %0 = vector.load %arg0[%c0, %c0_0] : memref<64x12xf32, #tpu.memory_space<vmem>>, vector<64x12xf32>
    %c0_1 = arith.constant 0 : index
    %c0_2 = arith.constant 0 : index
    %1 = vector.load %arg1[%c0_1, %c0_2] : memref<64x4xf32, #tpu.memory_space<vmem>>, vector<64x4xf32>
    %c0_3 = arith.constant 0 : index
    %c0_4 = arith.constant 0 : index
    %c0_5 = arith.constant 0 : index
    %2 = vector.load %arg2[%c0_3, %c0_4, %c0_5] : memref<3x12x32xf32, #tpu.memory_space<vmem>>, vector<1x12x32xf32>
    %3 = vector.shape_cast %2 : vector<1x12x32xf32> to vector<12x32xf32>
    %cst = arith.constant dense<0.000000e+00> : vector<64x32xf32>
    %4 = tpu.matmul %0, %3, %cst {dimension_numbers = #tpu.dot_dimension_numbers<[1], [0], [0], [1], [0, 0, 1, 1], [], []>} : vector<64x12xf32>, vector<12x32xf32>, vector<64x32xf32> -> vector<64x32xf32>
    %c0_6 = arith.constant 0 : index
    %c0_7 = arith.constant 0 : index
    %c0_8 = arith.constant 0 : index
    %5 = vector.load %arg3[%c0_6, %c0_7, %c0_8] : memref<3x4x32xf32, #tpu.memory_space<vmem>>, vector<1x4x32xf32>
    %6 = vector.shape_cast %5 : vector<1x4x32xf32> to vector<4x32xf32>
    %cst_9 = arith.constant dense<0.000000e+00> : vector<64x32xf32>
    %7 = tpu.matmul %1, %6, %cst_9 {dimension_numbers = #tpu.dot_dimension_numbers<[1], [0], [0], [1], [0, 0, 1, 1], [], []>} : vector<64x4xf32>, vector<4x32xf32>, vector<64x32xf32> -> vector<64x32xf32>
    %8 = arith.addf %4, %7 : vector<64x32xf32>
    %c0_10 = arith.constant 0 : index
    %c0_11 = arith.constant 0 : index
    %c0_12 = arith.constant 0 : index
    %9 = vector.load %arg5[%c0_10, %c0_11, %c0_12] : memref<3x1x32xf32, #tpu.memory_space<vmem>>, vector<1x1x32xf32>
    %10 = vector.shape_cast %9 : vector<1x1x32xf32> to vector<1x32xf32>
    %11 = vector.broadcast %10 : vector<1x32xf32> to vector<64x32xf32>
    %12 = arith.addf %8, %11 : vector<64x32xf32>
    %c0_13 = arith.constant 0 : index
    %c0_14 = arith.constant 0 : index
    %13 = vector.load %arg10[%c0_13, %c0_14] : memref<64x32xf32, #tpu.memory_space<vmem>>, vector<64x32xf32>
    tpu.vector_store %arg10[%c0_13, %c0_14], %12 {strides = array<i32>} : memref<64x32xf32, #tpu.memory_space<vmem>>, vector<64x32xf32>,
    %c1 = arith.constant 1 : index
    %c0_15 = arith.constant 0 : index
    %c0_16 = arith.constant 0 : index
    %14 = vector.load %arg2[%c1, %c0_15, %c0_16] : memref<3x12x32xf32, #tpu.memory_space<vmem>>, vector<1x12x32xf32>
    %15 = vector.shape_cast %14 : vector<1x12x32xf32> to vector<12x32xf32>
    %cst_17 = arith.constant dense<0.000000e+00> : vector<64x32xf32>
    %16 = tpu.matmul %0, %15, %cst_17 {dimension_numbers = #tpu.dot_dimension_numbers<[1], [0], [0], [1], [0, 0, 1, 1], [], []>} : vector<64x12xf32>, vector<12x32xf32>, vector<64x32xf32> -> vector<64x32xf32>
    %c1_18 = arith.constant 1 : index
    %c0_19 = arith.constant 0 : index
    %c0_20 = arith.constant 0 : index
    %17 = vector.load %arg3[%c1_18, %c0_19, %c0_20] : memref<3x4x32xf32, #tpu.memory_space<vmem>>, vector<1x4x32xf32>
    %18 = vector.shape_cast %17 : vector<1x4x32xf32> to vector<4x32xf32>
    %cst_21 = arith.constant dense<0.000000e+00> : vector<64x32xf32>
    %19 = tpu.matmul %1, %18, %cst_21 {dimension_numbers = #tpu.dot_dimension_numbers<[1], [0], [0], [1], [0, 0, 1, 1], [], []>} : vector<64x4xf32>, vector<4x32xf32>, vector<64x32xf32> -> vector<64x32xf32>
    %20 = arith.addf %16, %19 : vector<64x32xf32>
    %c1_22 = arith.constant 1 : index
    %c0_23 = arith.constant 0 : index
    %c0_24 = arith.constant 0 : index
    %21 = vector.load %arg5[%c1_22, %c0_23, %c0_24] : memref<3x1x32xf32, #tpu.memory_space<vmem>>, vector<1x1x32xf32>
    %22 = vector.shape_cast %21 : vector<1x1x32xf32> to vector<1x32xf32>
    %23 = vector.broadcast %22 : vector<1x32xf32> to vector<64x32xf32>
    %24 = arith.addf %20, %23 : vector<64x32xf32>
    %c0_25 = arith.constant 0 : index
    %c0_26 = arith.constant 0 : index
    %25 = vector.load %arg11[%c0_25, %c0_26] : memref<64x32xf32, #tpu.memory_space<vmem>>, vector<64x32xf32>
    tpu.vector_store %arg11[%c0_25, %c0_26], %24 {strides = array<i32>} : memref<64x32xf32, #tpu.memory_space<vmem>>, vector<64x32xf32>,
    %c2 = arith.constant 2 : index
    %c0_27 = arith.constant 0 : index
    %c0_28 = arith.constant 0 : index
    %26 = vector.load %arg2[%c2, %c0_27, %c0_28] : memref<3x12x32xf32, #tpu.memory_space<vmem>>, vector<1x12x32xf32>
    %27 = vector.shape_cast %26 : vector<1x12x32xf32> to vector<12x32xf32>
    %cst_29 = arith.constant dense<0.000000e+00> : vector<64x32xf32>
    %28 = tpu.matmul %0, %27, %cst_29 {dimension_numbers = #tpu.dot_dimension_numbers<[1], [0], [0], [1], [0, 0, 1, 1], [], []>} : vector<64x12xf32>, vector<12x32xf32>, vector<64x32xf32> -> vector<64x32xf32>
    %c2_30 = arith.constant 2 : index
    %c0_31 = arith.constant 0 : index
    %c0_32 = arith.constant 0 : index
    %29 = vector.load %arg3[%c2_30, %c0_31, %c0_32] : memref<3x4x32xf32, #tpu.memory_space<vmem>>, vector<1x4x32xf32>
    %30 = vector.shape_cast %29 : vector<1x4x32xf32> to vector<4x32xf32>
    %cst_33 = arith.constant dense<0.000000e+00> : vector<64x32xf32>
    %31 = tpu.matmul %1, %30, %cst_33 {dimension_numbers = #tpu.dot_dimension_numbers<[1], [0], [0], [1], [0, 0, 1, 1], [], []>} : vector<64x4xf32>, vector<4x32xf32>, vector<64x32xf32> -> vector<64x32xf32>
    %32 = arith.addf %28, %31 : vector<64x32xf32>
    %c2_34 = arith.constant 2 : index
    %c0_35 = arith.constant 0 : index
    %c0_36 = arith.constant 0 : index
    %33 = vector.load %arg5[%c2_34, %c0_35, %c0_36] : memref<3x1x32xf32, #tpu.memory_space<vmem>>, vector<1x1x32xf32>
    %34 = vector.shape_cast %33 : vector<1x1x32xf32> to vector<1x32xf32>
    %35 = vector.broadcast %34 : vector<1x32xf32> to vector<64x32xf32>
    %36 = arith.addf %32, %35 : vector<64x32xf32>
    %c0_37 = arith.constant 0 : index
    %c0_38 = arith.constant 0 : index
    %37 = vector.load %arg12[%c0_37, %c0_38] : memref<64x32xf32, #tpu.memory_space<vmem>>, vector<64x32xf32>
    tpu.vector_store %arg12[%c0_37, %c0_38], %36 {strides = array<i32>} : memref<64x32xf32, #tpu.memory_space<vmem>>, vector<64x32xf32>,
    %c0_39 = arith.constant 0 : index
    %c0_40 = arith.constant 0 : index
    %c0_41 = arith.constant 0 : index
    %38 = vector.load %arg4[%c0_39, %c0_40, %c0_41] : memref<3x32x32xf32, #tpu.memory_space<vmem>>, vector<1x32x32xf32>
    %39 = vector.shape_cast %38 : vector<1x32x32xf32> to vector<32x32xf32>
    %c1_42 = arith.constant 1 : index
    %c0_43 = arith.constant 0 : index
    %c0_44 = arith.constant 0 : index
    %40 = vector.load %arg4[%c1_42, %c0_43, %c0_44] : memref<3x32x32xf32, #tpu.memory_space<vmem>>, vector<1x32x32xf32>
    %41 = vector.shape_cast %40 : vector<1x32x32xf32> to vector<32x32xf32>
    %c2_45 = arith.constant 2 : index
    %c0_46 = arith.constant 0 : index
    %c0_47 = arith.constant 0 : index
    %42 = vector.load %arg4[%c2_45, %c0_46, %c0_47] : memref<3x32x32xf32, #tpu.memory_space<vmem>>, vector<1x32x32xf32>
    %43 = vector.shape_cast %42 : vector<1x32x32xf32> to vector<32x32xf32>
    %c0_48 = arith.constant 0 : index
    %c0_49 = arith.constant 0 : index
    %44 = vector.load %arg6[%c0_48, %c0_49] : memref<1x32xf32, #tpu.memory_space<vmem>>, vector<1x32xf32>
    %cst_50 = arith.constant 0.000000e+00 : f32
    %45 = vector.broadcast %cst_50 : f32 to vector<8x32xf32>
    %c0_i32 = arith.constant 0 : i32
    %cst_51 = arith.constant dense<0.000000e+00> : vector<8x32xf32>
    %46 = tpu.matmul %45, %39, %cst_51 {dimension_numbers = #tpu.dot_dimension_numbers<[1], [0], [0], [1], [0, 0, 1, 1], [], []>} : vector<8x32xf32>, vector<32x32xf32>, vector<8x32xf32> -> vector<8x32xf32>
    %cst_52 = arith.constant dense<0.000000e+00> : vector<8x32xf32>
    %47 = tpu.matmul %45, %41, %cst_52 {dimension_numbers = #tpu.dot_dimension_numbers<[1], [0], [0], [1], [0, 0, 1, 1], [], []>} : vector<8x32xf32>, vector<32x32xf32>, vector<8x32xf32> -> vector<8x32xf32>
    %cst_53 = arith.constant dense<0.000000e+00> : vector<8x32xf32>
    %48 = tpu.matmul %45, %43, %cst_53 {dimension_numbers = #tpu.dot_dimension_numbers<[1], [0], [0], [1], [0, 0, 1, 1], [], []>} : vector<8x32xf32>, vector<32x32xf32>, vector<8x32xf32> -> vector<8x32xf32>
    %49 = vector.broadcast %44 : vector<1x32xf32> to vector<8x32xf32>
    %50 = arith.addf %48, %49 : vector<8x32xf32>
    %c8_i32 = arith.constant 8 : i32
    %51 = arith.muli %c0_i32, %c8_i32 : i32
    %52 = tpu.assume_multiple %51, 8 : i32
    %53 = arith.index_cast %52 : i32 to index
    %c0_54 = arith.constant 0 : index
    %54 = vector.load %arg10[%53, %c0_54] : memref<64x32xf32, #tpu.memory_space<vmem>>, vector<8x32xf32>
    %55 = arith.addf %54, %46 : vector<8x32xf32>
    %56 = arith.negf %55 : vector<8x32xf32>
    %57 = math.exp %56 : vector<8x32xf32>
    %cst_55 = arith.constant 1.000000e+00 : f32
    %58 = vector.broadcast %cst_55 : f32 to vector<8x32xf32>
    %59 = arith.addf %58, %57 : vector<8x32xf32>
    %60 = arith.divf %58, %59 : vector<8x32xf32>
    %61 = arith.index_cast %52 : i32 to index
    %c0_56 = arith.constant 0 : index
    %62 = vector.load %arg11[%61, %c0_56] : memref<64x32xf32, #tpu.memory_space<vmem>>, vector<8x32xf32>
    %63 = arith.addf %62, %47 : vector<8x32xf32>
    %64 = arith.negf %63 : vector<8x32xf32>
    %65 = math.exp %64 : vector<8x32xf32>
    %cst_57 = arith.constant 1.000000e+00 : f32
    %66 = vector.broadcast %cst_57 : f32 to vector<8x32xf32>
    %67 = arith.addf %66, %65 : vector<8x32xf32>
    %68 = arith.divf %66, %67 : vector<8x32xf32>
    %69 = arith.index_cast %52 : i32 to index
    %c0_58 = arith.constant 0 : index
    %70 = vector.load %arg12[%69, %c0_58] : memref<64x32xf32, #tpu.memory_space<vmem>>, vector<8x32xf32>
    %71 = arith.mulf %60, %50 : vector<8x32xf32>
    %72 = arith.addf %70, %71 : vector<8x32xf32>
    %73 = math.tanh %72 : vector<8x32xf32>
    %cst_59 = arith.constant 1.000000e+00 : f32
    %74 = vector.broadcast %cst_59 : f32 to vector<8x32xf32>
    %75 = arith.subf %74, %68 : vector<8x32xf32>
    %76 = arith.mulf %75, %73 : vector<8x32xf32>
    %77 = arith.mulf %68, %45 : vector<8x32xf32>
    %78 = arith.addf %76, %77 : vector<8x32xf32>
    %c1_i32 = arith.constant 1 : i32
    %cst_60 = arith.constant dense<0.000000e+00> : vector<8x32xf32>
    %79 = tpu.matmul %78, %39, %cst_60 {dimension_numbers = #tpu.dot_dimension_numbers<[1], [0], [0], [1], [0, 0, 1, 1], [], []>} : vector<8x32xf32>, vector<32x32xf32>, vector<8x32xf32> -> vector<8x32xf32>
    %cst_61 = arith.constant dense<0.000000e+00> : vector<8x32xf32>
    %80 = tpu.matmul %78, %41, %cst_61 {dimension_numbers = #tpu.dot_dimension_numbers<[1], [0], [0], [1], [0, 0, 1, 1], [], []>} : vector<8x32xf32>, vector<32x32xf32>, vector<8x32xf32> -> vector<8x32xf32>
    %cst_62 = arith.constant dense<0.000000e+00> : vector<8x32xf32>
    %81 = tpu.matmul %78, %43, %cst_62 {dimension_numbers = #tpu.dot_dimension_numbers<[1], [0], [0], [1], [0, 0, 1, 1], [], []>} : vector<8x32xf32>, vector<32x32xf32>, vector<8x32xf32> -> vector<8x32xf32>
    %82 = vector.broadcast %44 : vector<1x32xf32> to vector<8x32xf32>
    %83 = arith.addf %81, %82 : vector<8x32xf32>
    %c8_i32_63 = arith.constant 8 : i32
    %84 = arith.muli %c1_i32, %c8_i32_63 : i32
    %85 = tpu.assume_multiple %84, 8 : i32
    %86 = arith.index_cast %85 : i32 to index
    %c0_64 = arith.constant 0 : index
    %87 = vector.load %arg10[%86, %c0_64] : memref<64x32xf32, #tpu.memory_space<vmem>>, vector<8x32xf32>
    %88 = arith.addf %87, %79 : vector<8x32xf32>
    %89 = arith.negf %88 : vector<8x32xf32>
    %90 = math.exp %89 : vector<8x32xf32>
    %cst_65 = arith.constant 1.000000e+00 : f32
    %91 = vector.broadcast %cst_65 : f32 to vector<8x32xf32>
    %92 = arith.addf %91, %90 : vector<8x32xf32>
    %93 = arith.divf %91, %92 : vector<8x32xf32>
    %94 = arith.index_cast %85 : i32 to index
    %c0_66 = arith.constant 0 : index
    %95 = vector.load %arg11[%94, %c0_66] : memref<64x32xf32, #tpu.memory_space<vmem>>, vector<8x32xf32>
    %96 = arith.addf %95, %80 : vector<8x32xf32>
    %97 = arith.negf %96 : vector<8x32xf32>
    %98 = math.exp %97 : vector<8x32xf32>
    %cst_67 = arith.constant 1.000000e+00 : f32
    %99 = vector.broadcast %cst_67 : f32 to vector<8x32xf32>
    %100 = arith.addf %99, %98 : vector<8x32xf32>
    %101 = arith.divf %99, %100 : vector<8x32xf32>
    %102 = arith.index_cast %85 : i32 to index
    %c0_68 = arith.constant 0 : index
    %103 = vector.load %arg12[%102, %c0_68] : memref<64x32xf32, #tpu.memory_space<vmem>>, vector<8x32xf32>
    %104 = arith.mulf %93, %83 : vector<8x32xf32>
    %105 = arith.addf %103, %104 : vector<8x32xf32>
    %106 = math.tanh %105 : vector<8x32xf32>
    %cst_69 = arith.constant 1.000000e+00 : f32
    %107 = vector.broadcast %cst_69 : f32 to vector<8x32xf32>
    %108 = arith.subf %107, %101 : vector<8x32xf32>
    %109 = arith.mulf %108, %106 : vector<8x32xf32>
    %110 = arith.mulf %101, %78 : vector<8x32xf32>
    %111 = arith.addf %109, %110 : vector<8x32xf32>
    %c2_i32 = arith.constant 2 : i32
    %cst_70 = arith.constant dense<0.000000e+00> : vector<8x32xf32>
    %112 = tpu.matmul %111, %39, %cst_70 {dimension_numbers = #tpu.dot_dimension_numbers<[1], [0], [0], [1], [0, 0, 1, 1], [], []>} : vector<8x32xf32>, vector<32x32xf32>, vector<8x32xf32> -> vector<8x32xf32>
    %cst_71 = arith.constant dense<0.000000e+00> : vector<8x32xf32>
    %113 = tpu.matmul %111, %41, %cst_71 {dimension_numbers = #tpu.dot_dimension_numbers<[1], [0], [0], [1], [0, 0, 1, 1], [], []>} : vector<8x32xf32>, vector<32x32xf32>, vector<8x32xf32> -> vector<8x32xf32>
    %cst_72 = arith.constant dense<0.000000e+00> : vector<8x32xf32>
    %114 = tpu.matmul %111, %43, %cst_72 {dimension_numbers = #tpu.dot_dimension_numbers<[1], [0], [0], [1], [0, 0, 1, 1], [], []>} : vector<8x32xf32>, vector<32x32xf32>, vector<8x32xf32> -> vector<8x32xf32>
    %115 = vector.broadcast %44 : vector<1x32xf32> to vector<8x32xf32>
    %116 = arith.addf %114, %115 : vector<8x32xf32>
    %c8_i32_73 = arith.constant 8 : i32
    %117 = arith.muli %c2_i32, %c8_i32_73 : i32
    %118 = tpu.assume_multiple %117, 8 : i32
    %119 = arith.index_cast %118 : i32 to index
    %c0_74 = arith.constant 0 : index
    %120 = vector.load %arg10[%119, %c0_74] : memref<64x32xf32, #tpu.memory_space<vmem>>, vector<8x32xf32>
    %121 = arith.addf %120, %112 : vector<8x32xf32>
    %122 = arith.negf %121 : vector<8x32xf32>
    %123 = math.exp %122 : vector<8x32xf32>
    %cst_75 = arith.constant 1.000000e+00 : f32
    %124 = vector.broadcast %cst_75 : f32 to vector<8x32xf32>
    %125 = arith.addf %124, %123 : vector<8x32xf32>
    %126 = arith.divf %124, %125 : vector<8x32xf32>
    %127 = arith.index_cast %118 : i32 to index
    %c0_76 = arith.constant 0 : index
    %128 = vector.load %arg11[%127, %c0_76] : memref<64x32xf32, #tpu.memory_space<vmem>>, vector<8x32xf32>
    %129 = arith.addf %128, %113 : vector<8x32xf32>
    %130 = arith.negf %129 : vector<8x32xf32>
    %131 = math.exp %130 : vector<8x32xf32>
    %cst_77 = arith.constant 1.000000e+00 : f32
    %132 = vector.broadcast %cst_77 : f32 to vector<8x32xf32>
    %133 = arith.addf %132, %131 : vector<8x32xf32>
    %134 = arith.divf %132, %133 : vector<8x32xf32>
    %135 = arith.index_cast %118 : i32 to index
    %c0_78 = arith.constant 0 : index
    %136 = vector.load %arg12[%135, %c0_78] : memref<64x32xf32, #tpu.memory_space<vmem>>, vector<8x32xf32>
    %137 = arith.mulf %126, %116 : vector<8x32xf32>
    %138 = arith.addf %136, %137 : vector<8x32xf32>
    %139 = math.tanh %138 : vector<8x32xf32>
    %cst_79 = arith.constant 1.000000e+00 : f32
    %140 = vector.broadcast %cst_79 : f32 to vector<8x32xf32>
    %141 = arith.subf %140, %134 : vector<8x32xf32>
    %142 = arith.mulf %141, %139 : vector<8x32xf32>
    %143 = arith.mulf %134, %111 : vector<8x32xf32>
    %144 = arith.addf %142, %143 : vector<8x32xf32>
    %c3_i32 = arith.constant 3 : i32
    %cst_80 = arith.constant dense<0.000000e+00> : vector<8x32xf32>
    %145 = tpu.matmul %144, %39, %cst_80 {dimension_numbers = #tpu.dot_dimension_numbers<[1], [0], [0], [1], [0, 0, 1, 1], [], []>} : vector<8x32xf32>, vector<32x32xf32>, vector<8x32xf32> -> vector<8x32xf32>
    %cst_81 = arith.constant dense<0.000000e+00> : vector<8x32xf32>
    %146 = tpu.matmul %144, %41, %cst_81 {dimension_numbers = #tpu.dot_dimension_numbers<[1], [0], [0], [1], [0, 0, 1, 1], [], []>} : vector<8x32xf32>, vector<32x32xf32>, vector<8x32xf32> -> vector<8x32xf32>
    %cst_82 = arith.constant dense<0.000000e+00> : vector<8x32xf32>
    %147 = tpu.matmul %144, %43, %cst_82 {dimension_numbers = #tpu.dot_dimension_numbers<[1], [0], [0], [1], [0, 0, 1, 1], [], []>} : vector<8x32xf32>, vector<32x32xf32>, vector<8x32xf32> -> vector<8x32xf32>
    %148 = vector.broadcast %44 : vector<1x32xf32> to vector<8x32xf32>
    %149 = arith.addf %147, %148 : vector<8x32xf32>
    %c8_i32_83 = arith.constant 8 : i32
    %150 = arith.muli %c3_i32, %c8_i32_83 : i32
    %151 = tpu.assume_multiple %150, 8 : i32
    %152 = arith.index_cast %151 : i32 to index
    %c0_84 = arith.constant 0 : index
    %153 = vector.load %arg10[%152, %c0_84] : memref<64x32xf32, #tpu.memory_space<vmem>>, vector<8x32xf32>
    %154 = arith.addf %153, %145 : vector<8x32xf32>
    %155 = arith.negf %154 : vector<8x32xf32>
    %156 = math.exp %155 : vector<8x32xf32>
    %cst_85 = arith.constant 1.000000e+00 : f32
    %157 = vector.broadcast %cst_85 : f32 to vector<8x32xf32>
    %158 = arith.addf %157, %156 : vector<8x32xf32>
    %159 = arith.divf %157, %158 : vector<8x32xf32>
    %160 = arith.index_cast %151 : i32 to index
    %c0_86 = arith.constant 0 : index
    %161 = vector.load %arg11[%160, %c0_86] : memref<64x32xf32, #tpu.memory_space<vmem>>, vector<8x32xf32>
    %162 = arith.addf %161, %146 : vector<8x32xf32>
    %163 = arith.negf %162 : vector<8x32xf32>
    %164 = math.exp %163 : vector<8x32xf32>
    %cst_87 = arith.constant 1.000000e+00 : f32
    %165 = vector.broadcast %cst_87 : f32 to vector<8x32xf32>
    %166 = arith.addf %165, %164 : vector<8x32xf32>
    %167 = arith.divf %165, %166 : vector<8x32xf32>
    %168 = arith.index_cast %151 : i32 to index
    %c0_88 = arith.constant 0 : index
    %169 = vector.load %arg12[%168, %c0_88] : memref<64x32xf32, #tpu.memory_space<vmem>>, vector<8x32xf32>
    %170 = arith.mulf %159, %149 : vector<8x32xf32>
    %171 = arith.addf %169, %170 : vector<8x32xf32>
    %172 = math.tanh %171 : vector<8x32xf32>
    %cst_89 = arith.constant 1.000000e+00 : f32
    %173 = vector.broadcast %cst_89 : f32 to vector<8x32xf32>
    %174 = arith.subf %173, %167 : vector<8x32xf32>
    %175 = arith.mulf %174, %172 : vector<8x32xf32>
    %176 = arith.mulf %167, %144 : vector<8x32xf32>
    %177 = arith.addf %175, %176 : vector<8x32xf32>
    %c4_i32 = arith.constant 4 : i32
    %cst_90 = arith.constant dense<0.000000e+00> : vector<8x32xf32>
    %178 = tpu.matmul %177, %39, %cst_90 {dimension_numbers = #tpu.dot_dimension_numbers<[1], [0], [0], [1], [0, 0, 1, 1], [], []>} : vector<8x32xf32>, vector<32x32xf32>, vector<8x32xf32> -> vector<8x32xf32>
    %cst_91 = arith.constant dense<0.000000e+00> : vector<8x32xf32>
    %179 = tpu.matmul %177, %41, %cst_91 {dimension_numbers = #tpu.dot_dimension_numbers<[1], [0], [0], [1], [0, 0, 1, 1], [], []>} : vector<8x32xf32>, vector<32x32xf32>, vector<8x32xf32> -> vector<8x32xf32>
    %cst_92 = arith.constant dense<0.000000e+00> : vector<8x32xf32>
    %180 = tpu.matmul %177, %43, %cst_92 {dimension_numbers = #tpu.dot_dimension_numbers<[1], [0], [0], [1], [0, 0, 1, 1], [], []>} : vector<8x32xf32>, vector<32x32xf32>, vector<8x32xf32> -> vector<8x32xf32>
    %181 = vector.broadcast %44 : vector<1x32xf32> to vector<8x32xf32>
    %182 = arith.addf %180, %181 : vector<8x32xf32>
    %c8_i32_93 = arith.constant 8 : i32
    %183 = arith.muli %c4_i32, %c8_i32_93 : i32
    %184 = tpu.assume_multiple %183, 8 : i32
    %185 = arith.index_cast %184 : i32 to index
    %c0_94 = arith.constant 0 : index
    %186 = vector.load %arg10[%185, %c0_94] : memref<64x32xf32, #tpu.memory_space<vmem>>, vector<8x32xf32>
    %187 = arith.addf %186, %178 : vector<8x32xf32>
    %188 = arith.negf %187 : vector<8x32xf32>
    %189 = math.exp %188 : vector<8x32xf32>
    %cst_95 = arith.constant 1.000000e+00 : f32
    %190 = vector.broadcast %cst_95 : f32 to vector<8x32xf32>
    %191 = arith.addf %190, %189 : vector<8x32xf32>
    %192 = arith.divf %190, %191 : vector<8x32xf32>
    %193 = arith.index_cast %184 : i32 to index
    %c0_96 = arith.constant 0 : index
    %194 = vector.load %arg11[%193, %c0_96] : memref<64x32xf32, #tpu.memory_space<vmem>>, vector<8x32xf32>
    %195 = arith.addf %194, %179 : vector<8x32xf32>
    %196 = arith.negf %195 : vector<8x32xf32>
    %197 = math.exp %196 : vector<8x32xf32>
    %cst_97 = arith.constant 1.000000e+00 : f32
    %198 = vector.broadcast %cst_97 : f32 to vector<8x32xf32>
    %199 = arith.addf %198, %197 : vector<8x32xf32>
    %200 = arith.divf %198, %199 : vector<8x32xf32>
    %201 = arith.index_cast %184 : i32 to index
    %c0_98 = arith.constant 0 : index
    %202 = vector.load %arg12[%201, %c0_98] : memref<64x32xf32, #tpu.memory_space<vmem>>, vector<8x32xf32>
    %203 = arith.mulf %192, %182 : vector<8x32xf32>
    %204 = arith.addf %202, %203 : vector<8x32xf32>
    %205 = math.tanh %204 : vector<8x32xf32>
    %cst_99 = arith.constant 1.000000e+00 : f32
    %206 = vector.broadcast %cst_99 : f32 to vector<8x32xf32>
    %207 = arith.subf %206, %200 : vector<8x32xf32>
    %208 = arith.mulf %207, %205 : vector<8x32xf32>
    %209 = arith.mulf %200, %177 : vector<8x32xf32>
    %210 = arith.addf %208, %209 : vector<8x32xf32>
    %c5_i32 = arith.constant 5 : i32
    %cst_100 = arith.constant dense<0.000000e+00> : vector<8x32xf32>
    %211 = tpu.matmul %210, %39, %cst_100 {dimension_numbers = #tpu.dot_dimension_numbers<[1], [0], [0], [1], [0, 0, 1, 1], [], []>} : vector<8x32xf32>, vector<32x32xf32>, vector<8x32xf32> -> vector<8x32xf32>
    %cst_101 = arith.constant dense<0.000000e+00> : vector<8x32xf32>
    %212 = tpu.matmul %210, %41, %cst_101 {dimension_numbers = #tpu.dot_dimension_numbers<[1], [0], [0], [1], [0, 0, 1, 1], [], []>} : vector<8x32xf32>, vector<32x32xf32>, vector<8x32xf32> -> vector<8x32xf32>
    %cst_102 = arith.constant dense<0.000000e+00> : vector<8x32xf32>
    %213 = tpu.matmul %210, %43, %cst_102 {dimension_numbers = #tpu.dot_dimension_numbers<[1], [0], [0], [1], [0, 0, 1, 1], [], []>} : vector<8x32xf32>, vector<32x32xf32>, vector<8x32xf32> -> vector<8x32xf32>
    %214 = vector.broadcast %44 : vector<1x32xf32> to vector<8x32xf32>
    %215 = arith.addf %213, %214 : vector<8x32xf32>
    %c8_i32_103 = arith.constant 8 : i32
    %216 = arith.muli %c5_i32, %c8_i32_103 : i32
    %217 = tpu.assume_multiple %216, 8 : i32
    %218 = arith.index_cast %217 : i32 to index
    %c0_104 = arith.constant 0 : index
    %219 = vector.load %arg10[%218, %c0_104] : memref<64x32xf32, #tpu.memory_space<vmem>>, vector<8x32xf32>
    %220 = arith.addf %219, %211 : vector<8x32xf32>
    %221 = arith.negf %220 : vector<8x32xf32>
    %222 = math.exp %221 : vector<8x32xf32>
    %cst_105 = arith.constant 1.000000e+00 : f32
    %223 = vector.broadcast %cst_105 : f32 to vector<8x32xf32>
    %224 = arith.addf %223, %222 : vector<8x32xf32>
    %225 = arith.divf %223, %224 : vector<8x32xf32>
    %226 = arith.index_cast %217 : i32 to index
    %c0_106 = arith.constant 0 : index
    %227 = vector.load %arg11[%226, %c0_106] : memref<64x32xf32, #tpu.memory_space<vmem>>, vector<8x32xf32>
    %228 = arith.addf %227, %212 : vector<8x32xf32>
    %229 = arith.negf %228 : vector<8x32xf32>
    %230 = math.exp %229 : vector<8x32xf32>
    %cst_107 = arith.constant 1.000000e+00 : f32
    %231 = vector.broadcast %cst_107 : f32 to vector<8x32xf32>
    %232 = arith.addf %231, %230 : vector<8x32xf32>
    %233 = arith.divf %231, %232 : vector<8x32xf32>
    %234 = arith.index_cast %217 : i32 to index
    %c0_108 = arith.constant 0 : index
    %235 = vector.load %arg12[%234, %c0_108] : memref<64x32xf32, #tpu.memory_space<vmem>>, vector<8x32xf32>
    %236 = arith.mulf %225, %215 : vector<8x32xf32>
    %237 = arith.addf %235, %236 : vector<8x32xf32>
    %238 = math.tanh %237 : vector<8x32xf32>
    %cst_109 = arith.constant 1.000000e+00 : f32
    %239 = vector.broadcast %cst_109 : f32 to vector<8x32xf32>
    %240 = arith.subf %239, %233 : vector<8x32xf32>
    %241 = arith.mulf %240, %238 : vector<8x32xf32>
    %242 = arith.mulf %233, %210 : vector<8x32xf32>
    %243 = arith.addf %241, %242 : vector<8x32xf32>
    %c6_i32 = arith.constant 6 : i32
    %cst_110 = arith.constant dense<0.000000e+00> : vector<8x32xf32>
    %244 = tpu.matmul %243, %39, %cst_110 {dimension_numbers = #tpu.dot_dimension_numbers<[1], [0], [0], [1], [0, 0, 1, 1], [], []>} : vector<8x32xf32>, vector<32x32xf32>, vector<8x32xf32> -> vector<8x32xf32>
    %cst_111 = arith.constant dense<0.000000e+00> : vector<8x32xf32>
    %245 = tpu.matmul %243, %41, %cst_111 {dimension_numbers = #tpu.dot_dimension_numbers<[1], [0], [0], [1], [0, 0, 1, 1], [], []>} : vector<8x32xf32>, vector<32x32xf32>, vector<8x32xf32> -> vector<8x32xf32>
    %cst_112 = arith.constant dense<0.000000e+00> : vector<8x32xf32>
    %246 = tpu.matmul %243, %43, %cst_112 {dimension_numbers = #tpu.dot_dimension_numbers<[1], [0], [0], [1], [0, 0, 1, 1], [], []>} : vector<8x32xf32>, vector<32x32xf32>, vector<8x32xf32> -> vector<8x32xf32>
    %247 = vector.broadcast %44 : vector<1x32xf32> to vector<8x32xf32>
    %248 = arith.addf %246, %247 : vector<8x32xf32>
    %c8_i32_113 = arith.constant 8 : i32
    %249 = arith.muli %c6_i32, %c8_i32_113 : i32
    %250 = tpu.assume_multiple %249, 8 : i32
    %251 = arith.index_cast %250 : i32 to index
    %c0_114 = arith.constant 0 : index
    %252 = vector.load %arg10[%251, %c0_114] : memref<64x32xf32, #tpu.memory_space<vmem>>, vector<8x32xf32>
    %253 = arith.addf %252, %244 : vector<8x32xf32>
    %254 = arith.negf %253 : vector<8x32xf32>
    %255 = math.exp %254 : vector<8x32xf32>
    %cst_115 = arith.constant 1.000000e+00 : f32
    %256 = vector.broadcast %cst_115 : f32 to vector<8x32xf32>
    %257 = arith.addf %256, %255 : vector<8x32xf32>
    %258 = arith.divf %256, %257 : vector<8x32xf32>
    %259 = arith.index_cast %250 : i32 to index
    %c0_116 = arith.constant 0 : index
    %260 = vector.load %arg11[%259, %c0_116] : memref<64x32xf32, #tpu.memory_space<vmem>>, vector<8x32xf32>
    %261 = arith.addf %260, %245 : vector<8x32xf32>
    %262 = arith.negf %261 : vector<8x32xf32>
    %263 = math.exp %262 : vector<8x32xf32>
    %cst_117 = arith.constant 1.000000e+00 : f32
    %264 = vector.broadcast %cst_117 : f32 to vector<8x32xf32>
    %265 = arith.addf %264, %263 : vector<8x32xf32>
    %266 = arith.divf %264, %265 : vector<8x32xf32>
    %267 = arith.index_cast %250 : i32 to index
    %c0_118 = arith.constant 0 : index
    %268 = vector.load %arg12[%267, %c0_118] : memref<64x32xf32, #tpu.memory_space<vmem>>, vector<8x32xf32>
    %269 = arith.mulf %258, %248 : vector<8x32xf32>
    %270 = arith.addf %268, %269 : vector<8x32xf32>
    %271 = math.tanh %270 : vector<8x32xf32>
    %cst_119 = arith.constant 1.000000e+00 : f32
    %272 = vector.broadcast %cst_119 : f32 to vector<8x32xf32>
    %273 = arith.subf %272, %266 : vector<8x32xf32>
    %274 = arith.mulf %273, %271 : vector<8x32xf32>
    %275 = arith.mulf %266, %243 : vector<8x32xf32>
    %276 = arith.addf %274, %275 : vector<8x32xf32>
    %c7_i32 = arith.constant 7 : i32
    %cst_120 = arith.constant dense<0.000000e+00> : vector<8x32xf32>
    %277 = tpu.matmul %276, %39, %cst_120 {dimension_numbers = #tpu.dot_dimension_numbers<[1], [0], [0], [1], [0, 0, 1, 1], [], []>} : vector<8x32xf32>, vector<32x32xf32>, vector<8x32xf32> -> vector<8x32xf32>
    %cst_121 = arith.constant dense<0.000000e+00> : vector<8x32xf32>
    %278 = tpu.matmul %276, %41, %cst_121 {dimension_numbers = #tpu.dot_dimension_numbers<[1], [0], [0], [1], [0, 0, 1, 1], [], []>} : vector<8x32xf32>, vector<32x32xf32>, vector<8x32xf32> -> vector<8x32xf32>
    %cst_122 = arith.constant dense<0.000000e+00> : vector<8x32xf32>
    %279 = tpu.matmul %276, %43, %cst_122 {dimension_numbers = #tpu.dot_dimension_numbers<[1], [0], [0], [1], [0, 0, 1, 1], [], []>} : vector<8x32xf32>, vector<32x32xf32>, vector<8x32xf32> -> vector<8x32xf32>
    %280 = vector.broadcast %44 : vector<1x32xf32> to vector<8x32xf32>
    %281 = arith.addf %279, %280 : vector<8x32xf32>
    %c8_i32_123 = arith.constant 8 : i32
    %282 = arith.muli %c7_i32, %c8_i32_123 : i32
    %283 = tpu.assume_multiple %282, 8 : i32
    %284 = arith.index_cast %283 : i32 to index
    %c0_124 = arith.constant 0 : index
    %285 = vector.load %arg10[%284, %c0_124] : memref<64x32xf32, #tpu.memory_space<vmem>>, vector<8x32xf32>
    %286 = arith.addf %285, %277 : vector<8x32xf32>
    %287 = arith.negf %286 : vector<8x32xf32>
    %288 = math.exp %287 : vector<8x32xf32>
    %cst_125 = arith.constant 1.000000e+00 : f32
    %289 = vector.broadcast %cst_125 : f32 to vector<8x32xf32>
    %290 = arith.addf %289, %288 : vector<8x32xf32>
    %291 = arith.divf %289, %290 : vector<8x32xf32>
    %292 = arith.index_cast %283 : i32 to index
    %c0_126 = arith.constant 0 : index
    %293 = vector.load %arg11[%292, %c0_126] : memref<64x32xf32, #tpu.memory_space<vmem>>, vector<8x32xf32>
    %294 = arith.addf %293, %278 : vector<8x32xf32>
    %295 = arith.negf %294 : vector<8x32xf32>
    %296 = math.exp %295 : vector<8x32xf32>
    %cst_127 = arith.constant 1.000000e+00 : f32
    %297 = vector.broadcast %cst_127 : f32 to vector<8x32xf32>
    %298 = arith.addf %297, %296 : vector<8x32xf32>
    %299 = arith.divf %297, %298 : vector<8x32xf32>
    %300 = arith.index_cast %283 : i32 to index
    %c0_128 = arith.constant 0 : index
    %301 = vector.load %arg12[%300, %c0_128] : memref<64x32xf32, #tpu.memory_space<vmem>>, vector<8x32xf32>
    %302 = arith.mulf %291, %281 : vector<8x32xf32>
    %303 = arith.addf %301, %302 : vector<8x32xf32>
    %304 = math.tanh %303 : vector<8x32xf32>
    %cst_129 = arith.constant 1.000000e+00 : f32
    %305 = vector.broadcast %cst_129 : f32 to vector<8x32xf32>
    %306 = arith.subf %305, %299 : vector<8x32xf32>
    %307 = arith.mulf %306, %304 : vector<8x32xf32>
    %308 = arith.mulf %299, %276 : vector<8x32xf32>
    %309 = arith.addf %307, %308 : vector<8x32xf32>
    %c8_i32_130 = arith.constant 8 : i32
    %cst_131 = arith.constant 0.000000e+00 : f32
    %310 = vector.broadcast %cst_131 : f32 to vector<8x32xf32>
    %311 = arith.maximumf %309, %310 : vector<8x32xf32>
    %c0_132 = arith.constant 0 : index
    %c0_133 = arith.constant 0 : index
    %312 = vector.load %arg7[%c0_132, %c0_133] : memref<32x8xf32, #tpu.memory_space<vmem>>, vector<32x8xf32>
    %cst_134 = arith.constant dense<0.000000e+00> : vector<8x8xf32>
    %313 = tpu.matmul %311, %312, %cst_134 {dimension_numbers = #tpu.dot_dimension_numbers<[1], [0], [0], [1], [0, 0, 1, 1], [], []>} : vector<8x32xf32>, vector<32x8xf32>, vector<8x8xf32> -> vector<8x8xf32>
    %c0_135 = arith.constant 0 : index
    %c0_136 = arith.constant 0 : index
    %314 = vector.load %arg8[%c0_135, %c0_136] : memref<1x8xf32, #tpu.memory_space<vmem>>, vector<1x8xf32>
    %315 = vector.broadcast %314 : vector<1x8xf32> to vector<8x8xf32>
    %316 = arith.addf %313, %315 : vector<8x8xf32>
    %c0_137 = arith.constant 0 : index
    %c0_138 = arith.constant 0 : index
    %317 = vector.load %arg9[%c0_137, %c0_138] : memref<8x8xf32, #tpu.memory_space<vmem>>, vector<8x8xf32>
    tpu.vector_store %arg9[%c0_137, %c0_138], %316 {strides = array<i32>} : memref<8x8xf32, #tpu.memory_space<vmem>>, vector<8x8xf32>,
    return
  }
}

</mosaic_0001>

<llo_original>
// kernel: tpu_custom_call.1
$region0: #{tpu_custom_call.1}
  #allocation0 [shape = 'u32[]', space=smem, size = 0x4, offset = 0x4, fixed_abs, tag = 'smem constant byte address 0x4 - core index']
  #allocation1 [shape = 'u32[144,128]{1,0:T(1,128)}', space=vmem, size = 0x12000, scoped, tag = 'internal scratch']
  #allocation2 [shape = 'f32[64,32]{1,0:T(8,128)}', space=vmem, size = 0x8000, scoped, tag = 'scratch operand']
  #allocation3 [shape = 'f32[64,32]{1,0:T(8,128)}', space=vmem, size = 0x8000, scoped, tag = 'scratch operand']
  #allocation4 [shape = 'f32[64,32]{1,0:T(8,128)}', space=vmem, size = 0x8000, scoped, tag = 'scratch operand']
  %s0 = inlined_call_operand.vmem [shape: f32[64,12], index: 0, kind: input, shape index: {}]
  %s1 = inlined_call_operand.vmem [shape: f32[64,4], index: 1, kind: input, shape index: {}]
  %s2 = inlined_call_operand.vmem [shape: f32[3,12,32], index: 2, kind: input, shape index: {}]
  %s3 = inlined_call_operand.vmem [shape: f32[3,4,32], index: 3, kind: input, shape index: {}]
  %s4 = inlined_call_operand.vmem [shape: f32[3,32,32], index: 4, kind: input, shape index: {}]
  %s5 = inlined_call_operand.vmem [shape: f32[3,1,32], index: 5, kind: input, shape index: {}]
  %s6 = inlined_call_operand.vmem [shape: f32[1,32], index: 6, kind: input, shape index: {}]
  %s7 = inlined_call_operand.vmem [shape: f32[32,8], index: 7, kind: input, shape index: {}]
  %s8 = inlined_call_operand.vmem [shape: f32[1,8], index: 8, kind: input, shape index: {}]
  %s9 = inlined_call_operand.hbm [shape: f32[8,8], index: 9, kind: output, shape index: {}]
  %s10 = sld [smem:[#allocation0]]
  $region46: #{tpu_custom_call.1} parent=0
    _
  %s12 = ssub.s32 1, %s10
  %s13 = scalar_select 0, %s12, %s10
  $region1: #{tpu_custom_call.1} parent=0
    #allocation5 [shape = 'u8[4096]{0}', space=vmem, size = 0x1000, scoped, tag = 'output window, operand 0, single buffered']
    #allocation6 [shape = 's32[1]{0}', space=sflag, size = 0x4, scoped, tag = 'scoped memory for tpu_custom_call.1']
    %14 = vsyncpa [#allocation6], 0
    // Predicated region
    $region2: #{tpu_custom_call.1} parent=1 // pred_check
      _
    $region3: #{tpu_custom_call.1} parent=1 // pred_check_branch
      %16 = sbr.rel (0) target = $region5
    $region4: #{tpu_custom_call.1} parent=1 // pred_region
      _
    $region5: #{tpu_custom_call.1} parent=1 // pred_fallthru
      _
    // Predicated region
    $region6: #{tpu_custom_call.1} parent=1 // pred_check
      _
    $region7: #{tpu_custom_call.1} parent=1 // pred_check_branch
      %18 = sbr.rel (0) target = $region9
    $region8: #{tpu_custom_call.1} parent=1 // pred_region
      _
    $region9: #{tpu_custom_call.1} parent=1 // pred_fallthru
      _
    // Predicated region
    $region10: #{tpu_custom_call.1} parent=1 // pred_check
      _
    $region11: #{tpu_custom_call.1} parent=1 // pred_check_branch
      %20 = sbr.rel (0) target = $region13
    $region12: #{tpu_custom_call.1} parent=1 // pred_region
      _
    $region13: #{tpu_custom_call.1} parent=1 // pred_fallthru
      _
    // Predicated region
    $region14: #{tpu_custom_call.1} parent=1 // pred_check
      _
    $region15: #{tpu_custom_call.1} parent=1 // pred_check_branch
      %22 = sbr.rel (0) target = $region17
    $region16: #{tpu_custom_call.1} parent=1 // pred_region
      _
    $region17: #{tpu_custom_call.1} parent=1 // pred_fallthru
      _
    // Predicated region
    $region18: #{tpu_custom_call.1} parent=1 // pred_check
      _
    $region19: #{tpu_custom_call.1} parent=1 // pred_check_branch
      %24 = sbr.rel (0) target = $region21
    $region20: #{tpu_custom_call.1} parent=1 // pred_region
      _
    $region21: #{tpu_custom_call.1} parent=1 // pred_fallthru
      _
    // Predicated region
    $region22: #{tpu_custom_call.1} parent=1 // pred_check
      _
    $region23: #{tpu_custom_call.1} parent=1 // pred_check_branch
      %26 = sbr.rel (0) target = $region25
    $region24: #{tpu_custom_call.1} parent=1 // pred_region
      _
    $region25: #{tpu_custom_call.1} parent=1 // pred_fallthru
      _
    // Predicated region
    $region26: #{tpu_custom_call.1} parent=1 // pred_check
      _
    $region27: #{tpu_custom_call.1} parent=1 // pred_check_branch
      %28 = sbr.rel (0) target = $region29
    $region28: #{tpu_custom_call.1} parent=1 // pred_region
      _
    $region29: #{tpu_custom_call.1} parent=1 // pred_fallthru
      _
    // Predicated region
    $region30: #{tpu_custom_call.1} parent=1 // pred_check
      _
    $region31: #{tpu_custom_call.1} parent=1 // pred_check_branch
      %30 = sbr.rel (0) target = $region33
    $region32: #{tpu_custom_call.1} parent=1 // pred_region
      _
    $region33: #{tpu_custom_call.1} parent=1 // pred_fallthru
      _
    // Predicated region
    $region34: #{tpu_custom_call.1} parent=1 // pred_check
      _
    $region35: #{tpu_custom_call.1} parent=1 // pred_check_branch
      %32 = sbr.rel (0) target = $region37
    $region36: #{tpu_custom_call.1} parent=1 // pred_region
      _
    $region37: #{tpu_custom_call.1} parent=1 // pred_fallthru
      _
    %v33 = vld [vmem:[%s0] sm:$0xff]
    %v34 = vld [vmem:[%s0 + $0x8] sm:$0xff]
    %v35 = vld [vmem:[%s0 + $0x10] sm:$0xff]
    %v36 = vld [vmem:[%s0 + $0x18] sm:$0xff]
    %v37 = vld [vmem:[%s0 + $0x20] sm:$0xff]
    %v38 = vld [vmem:[%s0 + $0x28] sm:$0xff]
    %v39 = vld [vmem:[%s0 + $0x30] sm:$0xff]
    %v40 = vld [vmem:[%s0 + $0x38] sm:$0xff]
    %v41 = vld [vmem:[%s1] sm:$0xff]
    %v42 = vld [vmem:[%s1 + $0x8] sm:$0xff]
    %v43 = vld [vmem:[%s1 + $0x10] sm:$0xff]
    %v44 = vld [vmem:[%s1 + $0x18] sm:$0xff]
    %v45 = vld [vmem:[%s1 + $0x20] sm:$0xff]
    %v46 = vld [vmem:[%s1 + $0x28] sm:$0xff]
    %v47 = vld [vmem:[%s1 + $0x30] sm:$0xff]
    %v48 = vld [vmem:[%s1 + $0x38] sm:$0xff]
    %v49 = vld [vmem:[%s2] sm:$0xff]
    %v50 = vld [vmem:[%s2 + $0x8] sm:$0xf]
    %v51 = vld [vmem:[%s3] sm:$0xf]
    %vm52 = vcmask 31744
    %v54 = vsel %vm52, %v41, 0
    %v57 = vsel %vm52, %v42, 0
    %v60 = vsel %vm52, %v43, 0
    %v63 = vsel %vm52, %v44, 0
    %v66 = vsel %vm52, %v45, 0
    %v69 = vsel %vm52, %v46, 0
    %v72 = vsel %vm52, %v47, 0
    %v75 = vsel %vm52, %v48, 0
    %vm77 = vcmask 1043456
    %v79 = vsel %vm77, %v51, 0
    %81 = vmatprep.subr.mxu0 0.0
    %82 = vmatpush1.msra.mxu0 %v79
    %83 = vmatprep.subr.mxu0 0.0
    %84 = vmatpush1.msra.mxu0 0.0
    %85 = vmatprep.subr.mxu0 0.0
    %86 = vmatpush1.msra.mxu0 0.0
    %87 = vmatprep.subr.mxu0 0.0
    %88 = vmatpush1.msra.mxu0 0.0
    %89 = vmatprep.subr.mxu0 0.0
    %90 = vmatpush1.msra.mxu0 0.0
    %91 = vmatprep.subr.mxu0 0.0
    %92 = vmatpush1.msra.mxu0 0.0
    %93 = vmatprep.subr.mxu0 0.0
    %94 = vmatpush1.msra.mxu0 0.0
    %95 = vmatprep.subr.mxu0 0.0
    %96 = vmatpush1.msra.mxu0 0.0
    %97 = vmatprep.subr.mxu0 0.0
    %98 = vmatpush1.msra.mxu0 0.0
    %99 = vmatprep.subr.mxu0 0.0
    %100 = vmatpush1.msra.mxu0 0.0
    %101 = vmatprep.subr.mxu0 0.0
    %102 = vmatpush1.msra.mxu0 0.0
    %103 = vmatprep.subr.mxu0 0.0
    %104 = vmatpush1.msra.mxu0 0.0
    %105 = vmatprep.subr.mxu0 0.0
    %106 = vmatpush1.msra.mxu0 0.0
    %107 = vmatprep.subr.mxu0 0.0
    %108 = vmatpush1.msra.mxu0 0.0
    %109 = vmatprep.subr.mxu0 0.0
    %110 = vmatpush1.msra.mxu0 0.0
    %111 = vmatprep.subr.mxu0 0.0
    %112 = vmatpush1.msra.mxu0 0.0
    %113 = vmatprep.subr.mxu0 0.0
    %114 = vmatpush1.msra.mxu0 0.0
    %115 = vmatprep.subr.mxu0 0.0
    %116 = vmatpush1.msra.mxu0 0.0
    %117 = vmatprep.subr.mxu0 0.0
    %118 = vmatpush1.msra.mxu0 0.0
    %119 = vmatprep.subr.mxu0 0.0
    %120 = vmatpush1.msra.mxu0 0.0
    %121 = vmatprep.subr.mxu0 0.0
    %122 = vmatpush1.msra.mxu0 0.0
    %123 = vmatprep.subr.mxu0 0.0
    %124 = vmatpush1.msra.mxu0 0.0
    %125 = vmatprep.subr.mxu0 0.0
    %126 = vmatpush1.msra.mxu0 0.0
    %127 = vmatprep.subr.mxu0 0.0
    %128 = vmatpush1.msra.mxu0 0.0
    %129 = vmatprep.subr.mxu0 0.0
    %130 = vmatpush1.msra.mxu0 0.0
    %131 = vmatprep.subr.mxu0 0.0
    %132 = vmatpush1.msra.mxu0 0.0
    %133 = vmatprep.subr.mxu0 0.0
    %134 = vmatpush1.msra.mxu0 0.0
    %135 = vmatprep.subr.mxu0 0.0
    %136 = vmatpush1.msra.mxu0 0.0
    %137 = vmatprep.subr.mxu0 0.0
    %138 = vmatpush1.msra.mxu0 0.0
    %139 = vmatprep.subr.mxu0 0.0
    %140 = vmatpush1.msra.mxu0 0.0
    %141 = vmatprep.subr.mxu0 0.0
    %142 = vmatpush1.msra.mxu0 0.0
    %143 = vmatprep.subr.mxu0 0.0
    %144 = vmatpush1.msra.mxu0 0.0
    %145 = vmatprep.mubr.f32.mxu0 0.0
    %146 = vmatmul.mubr.f32.gmra.mrb[0].mxu0 %v54
    %v147 = vpop.f32.mrb[0].mxu0
    %v148 = vadd.f32 0.0, %v147
    %v149 = vpop.f32.mrb[0].mxu0
    %150 = vmatprep.mubr.f32.mxu0 0.0
    %151 = vmatmul.mubr.f32.gmra.mrb[0].mxu0 %v57
    %v152 = vpop.f32.mrb[0].mxu0
    %v153 = vadd.f32 0.0, %v152
    %v154 = vpop.f32.mrb[0].mxu0
    %155 = vmatprep.mubr.f32.mxu0 0.0
    %156 = vmatmul.mubr.f32.gmra.mrb[0].mxu0 %v60
    %v157 = vpop.f32.mrb[0].mxu0
    %v158 = vadd.f32 0.0, %v157
    %v159 = vpop.f32.mrb[0].mxu0
    %160 = vmatprep.mubr.f32.mxu0 0.0
    %161 = vmatmul.mubr.f32.gmra.mrb[0].mxu0 %v63
    %v162 = vpop.f32.mrb[0].mxu0
    %v163 = vadd.f32 0.0, %v162
    %v164 = vpop.f32.mrb[0].mxu0
    %165 = vmatprep.mubr.f32.mxu0 0.0
    %166 = vmatmul.mubr.f32.gmra.mrb[0].mxu0 %v66
    %v167 = vpop.f32.mrb[0].mxu0
    %v168 = vadd.f32 0.0, %v167
    %v169 = vpop.f32.mrb[0].mxu0
    %170 = vmatprep.mubr.f32.mxu0 0.0
    %171 = vmatmul.mubr.f32.gmra.mrb[0].mxu0 %v69
    %v172 = vpop.f32.mrb[0].mxu0
    %v173 = vadd.f32 0.0, %v172
    %v174 = vpop.f32.mrb[0].mxu0
    %175 = vmatprep.mubr.f32.mxu0 0.0
    %176 = vmatmul.mubr.f32.gmra.mrb[0].mxu0 %v72
    %v177 = vpop.f32.mrb[0].mxu0
    %v178 = vadd.f32 0.0, %v177
    %v179 = vpop.f32.mrb[0].mxu0
    %180 = vmatprep.mubr.f32.mxu0 0.0
    %181 = vmatmul.mubr.f32.gmra.mrb[0].mxu0 %v75
    %v182 = vpop.f32.mrb[0].mxu0
    %v183 = vadd.f32 0.0, %v182
    %v184 = vpop.f32.mrb[0].mxu0
    %185 = vdwg.mxu0
    %vm186 = vcmask 97280
    %v188 = vsel %vm186, %v33, 0
    %v191 = vsel %vm186, %v34, 0
    %v194 = vsel %vm186, %v35, 0
    %v197 = vsel %vm186, %v36, 0
    %v200 = vsel %vm186, %v37, 0
    %v203 = vsel %vm186, %v38, 0
    %v206 = vsel %vm186, %v39, 0
    %v209 = vsel %vm186, %v40, 0
    %v212 = vsel %vm77, %v50, 0
    %214 = vmatprep.subr.mxu0 0.0
    %215 = vmatpush1.msra.mxu0 %v49
    %216 = vmatprep.subr.mxu0 0.0
    %217 = vmatpush1.msra.mxu0 %v212
    %218 = vmatprep.subr.mxu0 0.0
    %219 = vmatpush1.msra.mxu0 0.0
    %220 = vmatprep.subr.mxu0 0.0
    %221 = vmatpush1.msra.mxu0 0.0
    %222 = vmatprep.subr.mxu0 0.0
    %223 = vmatpush1.msra.mxu0 0.0
    %224 = vmatprep.subr.mxu0 0.0
    %225 = vmatpush1.msra.mxu0 0.0
    %226 = vmatprep.subr.mxu0 0.0
    %227 = vmatpush1.msra.mxu0 0.0
    %228 = vmatprep.subr.mxu0 0.0
    %229 = vmatpush1.msra.mxu0 0.0
    %230 = vmatprep.subr.mxu0 0.0
    %231 = vmatpush1.msra.mxu0 0.0
    %232 = vmatprep.subr.mxu0 0.0
    %233 = vmatpush1.msra.mxu0 0.0
    %234 = vmatprep.subr.mxu0 0.0
    %235 = vmatpush1.msra.mxu0 0.0
    %236 = vmatprep.subr.mxu0 0.0
    %237 = vmatpush1.msra.mxu0 0.0
    %238 = vmatprep.subr.mxu0 0.0
    %239 = vmatpush1.msra.mxu0 0.0
    %240 = vmatprep.subr.mxu0 0.0
    %241 = vmatpush1.msra.mxu0 0.0
    %242 = vmatprep.subr.mxu0 0.0
    %243 = vmatpush1.msra.mxu0 0.0
    %244 = vmatprep.subr.mxu0 0.0
    %245 = vmatpush1.msra.mxu0 0.0
    %246 = vmatprep.subr.mxu0 0.0
    %247 = vmatpush1.msra.mxu0 0.0
    %248 = vmatprep.subr.mxu0 0.0
    %249 = vmatpush1.msra.mxu0 0.0
    %250 = vmatprep.subr.mxu0 0.0
    %251 = vmatpush1.msra.mxu0 0.0
    %252 = vmatprep.subr.mxu0 0.0
    %253 = vmatpush1.msra.mxu0 0.0
    %254 = vmatprep.subr.mxu0 0.0
    %255 = vmatpush1.msra.mxu0 0.0
    %256 = vmatprep.subr.mxu0 0.0
    %257 = vmatpush1.msra.mxu0 0.0
    %258 = vmatprep.subr.mxu0 0.0
    %259 = vmatpush1.msra.mxu0 0.0
    %260 = vmatprep.subr.mxu0 0.0
    %261 = vmatpush1.msra.mxu0 0.0
    %262 = vmatprep.subr.mxu0 0.0
    %263 = vmatpush1.msra.mxu0 0.0
    %264 = vmatprep.subr.mxu0 0.0
    %265 = vmatpush1.msra.mxu0 0.0
    %266 = vmatprep.subr.mxu0 0.0
    %267 = vmatpush1.msra.mxu0 0.0
    %268 = vmatprep.subr.mxu0 0.0
    %269 = vmatpush1.msra.mxu0 0.0
    %270 = vmatprep.subr.mxu0 0.0
    %271 = vmatpush1.msra.mxu0 0.0
    %272 = vmatprep.subr.mxu0 0.0
    %273 = vmatpush1.msra.mxu0 0.0
    %274 = vmatprep.subr.mxu0 0.0
    %275 = vmatpush1.msra.mxu0 0.0
    %276 = vmatprep.subr.mxu0 0.0
    %277 = vmatpush1.msra.mxu0 0.0
    %278 = vmatprep.mubr.f32.mxu0 0.0
    %279 = vmatmul.mubr.f32.gmra.mrb[0].mxu0 %v188
    %v280 = vpop.f32.mrb[0].mxu0
    %v281 = vadd.f32 %v148, %v280
    %v282 = vpop.f32.mrb[0].mxu0
    %283 = vmatprep.mubr.f32.mxu0 0.0
    %284 = vmatmul.mubr.f32.gmra.mrb[0].mxu0 %v191
    %v285 = vpop.f32.mrb[0].mxu0
    %v286 = vadd.f32 %v153, %v285
    %v287 = vpop.f32.mrb[0].mxu0
    %288 = vmatprep.mubr.f32.mxu0 0.0
    %289 = vmatmul.mubr.f32.gmra.mrb[0].mxu0 %v194
    %v290 = vpop.f32.mrb[0].mxu0
    %v291 = vadd.f32 %v158, %v290
    %v292 = vpop.f32.mrb[0].mxu0
    %293 = vmatprep.mubr.f32.mxu0 0.0
    %294 = vmatmul.mubr.f32.gmra.mrb[0].mxu0 %v197
    %v295 = vpop.f32.mrb[0].mxu0
    %v296 = vadd.f32 %v163, %v295
    %v297 = vpop.f32.mrb[0].mxu0
    %298 = vmatprep.mubr.f32.mxu0 0.0
    %299 = vmatmul.mubr.f32.gmra.mrb[0].mxu0 %v200
    %v300 = vpop.f32.mrb[0].mxu0
    %v301 = vadd.f32 %v168, %v300
    %v302 = vpop.f32.mrb[0].mxu0
    %303 = vmatprep.mubr.f32.mxu0 0.0
    %304 = vmatmul.mubr.f32.gmra.mrb[0].mxu0 %v203
    %v305 = vpop.f32.mrb[0].mxu0
    %v306 = vadd.f32 %v173, %v305
    %v307 = vpop.f32.mrb[0].mxu0
    %308 = vmatprep.mubr.f32.mxu0 0.0
    %309 = vmatmul.mubr.f32.gmra.mrb[0].mxu0 %v206
    %v310 = vpop.f32.mrb[0].mxu0
    %v311 = vadd.f32 %v178, %v310
    %v312 = vpop.f32.mrb[0].mxu0
    %313 = vmatprep.mubr.f32.mxu0 0.0
    %314 = vmatmul.mubr.f32.gmra.mrb[0].mxu0 %v209
    %v315 = vpop.f32.mrb[0].mxu0
    %v316 = vadd.f32 %v183, %v315
    %v317 = vpop.f32.mrb[0].mxu0
    %318 = vdwg.mxu0
    %v319 = vld [vmem:[%s5] sm:$0x1]
    %v321 = vlaneseq
    %v322 = vshrl.u32 %v321, 7
    %v323 = vsub.s32 0, %v322
    %v324 = vrot.slane %v319, %v323
    %v326 = vadd.f32 %v281, %v324
    %v327 = vadd.f32 %v286, %v324
    %v328 = vadd.f32 %v291, %v324
    %v329 = vadd.f32 %v296, %v324
    %v330 = vadd.f32 %v301, %v324
    %v331 = vadd.f32 %v306, %v324
    %v332 = vadd.f32 %v311, %v324
    %v333 = vadd.f32 %v316, %v324
    %vm334 = vcmask 261120
    %335 = vst.msk [vmem:[#allocation2] sm:$0xff] %vm334, %v326
    %336 = vst.msk [vmem:[#allocation2 + $0x8] sm:$0xff] %vm334, %v327
    %337 = vst.msk [vmem:[#allocation2 + $0x10] sm:$0xff] %vm334, %v328
    %338 = vst.msk [vmem:[#allocation2 + $0x18] sm:$0xff] %vm334, %v329
    %339 = vst.msk [vmem:[#allocation2 + $0x20] sm:$0xff] %vm334, %v330
    %340 = vst.msk [vmem:[#allocation2 + $0x28] sm:$0xff] %vm334, %v331
    %341 = vst.msk [vmem:[#allocation2 + $0x30] sm:$0xff] %vm334, %v332
    %342 = vst.msk [vmem:[#allocation2 + $0x38] sm:$0xff] %vm334, %v333
    %s343 = scalar_lea.vmem %s2, 16
    %v344 = vld [vmem:[%s343] sm:$0xff]
    %v345 = vld [vmem:[%s343 + $0x8] sm:$0xf]
    %s346 = scalar_lea.vmem %s3, 4
    %v347 = vld [vmem:[%s346] sm:$0xf]
    %v349 = vsel %vm77, %v347, 0
    %351 = vmatprep.subr.mxu0 0.0
    %352 = vmatpush1.msra.mxu0 %v349
    %353 = vmatprep.subr.mxu0 0.0
    %354 = vmatpush1.msra.mxu0 0.0
    %355 = vmatprep.subr.mxu0 0.0
    %356 = vmatpush1.msra.mxu0 0.0
    %357 = vmatprep.subr.mxu0 0.0
    %358 = vmatpush1.msra.mxu0 0.0
    %359 = vmatprep.subr.mxu0 0.0
    %360 = vmatpush1.msra.mxu0 0.0
    %361 = vmatprep.subr.mxu0 0.0
    %362 = vmatpush1.msra.mxu0 0.0
    %363 = vmatprep.subr.mxu0 0.0
    %364 = vmatpush1.msra.mxu0 0.0
    %365 = vmatprep.subr.mxu0 0.0
    %366 = vmatpush1.msra.mxu0 0.0
    %367 = vmatprep.subr.mxu0 0.0
    %368 = vmatpush1.msra.mxu0 0.0
    %369 = vmatprep.subr.mxu0 0.0
    %370 = vmatpush1.msra.mxu0 0.0
    %371 = vmatprep.subr.mxu0 0.0
    %372 = vmatpush1.msra.mxu0 0.0
    %373 = vmatprep.subr.mxu0 0.0
    %374 = vmatpush1.msra.mxu0 0.0
    %375 = vmatprep.subr.mxu0 0.0
    %376 = vmatpush1.msra.mxu0 0.0
    %377 = vmatprep.subr.mxu0 0.0
    %378 = vmatpush1.msra.mxu0 0.0
    %379 = vmatprep.subr.mxu0 0.0
    %380 = vmatpush1.msra.mxu0 0.0
    %381 = vmatprep.subr.mxu0 0.0
    %382 = vmatpush1.msra.mxu0 0.0
    %383 = vmatprep.subr.mxu0 0.0
    %384 = vmatpush1.msra.mxu0 0.0
    %385 = vmatprep.subr.mxu0 0.0
    %386 = vmatpush1.msra.mxu0 0.0
    %387 = vmatprep.subr.mxu0 0.0
    %388 = vmatpush1.msra.mxu0 0.0
    %389 = vmatprep.subr.mxu0 0.0
    %390 = vmatpush1.msra.mxu0 0.0
    %391 = vmatprep.subr.mxu0 0.0
    %392 = vmatpush1.msra.mxu0 0.0
    %393 = vmatprep.subr.mxu0 0.0
    %394 = vmatpush1.msra.mxu0 0.0
    %395 = vmatprep.subr.mxu0 0.0
    %396 = vmatpush1.msra.mxu0 0.0
    %397 = vmatprep.subr.mxu0 0.0
    %398 = vmatpush1.msra.mxu0 0.0
    %399 = vmatprep.subr.mxu0 0.0
    %400 = vmatpush1.msra.mxu0 0.0
    %401 = vmatprep.subr.mxu0 0.0
    %402 = vmatpush1.msra.mxu0 0.0
    %403 = vmatprep.subr.mxu0 0.0
    %404 = vmatpush1.msra.mxu0 0.0
    %405 = vmatprep.subr.mxu0 0.0
    %406 = vmatpush1.msra.mxu0 0.0
    %407 = vmatprep.subr.mxu0 0.0
    %408 = vmatpush1.msra.mxu0 0.0
    %409 = vmatprep.subr.mxu0 0.0
    %410 = vmatpush1.msra.mxu0 0.0
    %411 = vmatprep.subr.mxu0 0.0
    %412 = vmatpush1.msra.mxu0 0.0
    %413 = vmatprep.subr.mxu0 0.0
    %414 = vmatpush1.msra.mxu0 0.0
    %415 = vmatprep.mubr.f32.mxu0 0.0
    %416 = vmatmul.mubr.f32.gmra.mrb[0].mxu0 %v54
    %v417 = vpop.f32.mrb[0].mxu0
    %v418 = vadd.f32 0.0, %v417
    %v419 = vpop.f32.mrb[0].mxu0
    %420 = vmatprep.mubr.f32.mxu0 0.0
    %421 = vmatmul.mubr.f32.gmra.mrb[0].mxu0 %v57
    %v422 = vpop.f32.mrb[0].mxu0
    %v423 = vadd.f32 0.0, %v422
    %v424 = vpop.f32.mrb[0].mxu0
    %425 = vmatprep.mubr.f32.mxu0 0.0
    %426 = vmatmul.mubr.f32.gmra.mrb[0].mxu0 %v60
    %v427 = vpop.f32.mrb[0].mxu0
    %v428 = vadd.f32 0.0, %v427
    %v429 = vpop.f32.mrb[0].mxu0
    %430 = vmatprep.mubr.f32.mxu0 0.0
    %431 = vmatmul.mubr.f32.gmra.mrb[0].mxu0 %v63
    %v432 = vpop.f32.mrb[0].mxu0
    %v433 = vadd.f32 0.0, %v432
    %v434 = vpop.f32.mrb[0].mxu0
    %435 = vmatprep.mubr.f32.mxu0 0.0
    %436 = vmatmul.mubr.f32.gmra.mrb[0].mxu0 %v66
    %v437 = vpop.f32.mrb[0].mxu0
    %v438 = vadd.f32 0.0, %v437
    %v439 = vpop.f32.mrb[0].mxu0
    %440 = vmatprep.mubr.f32.mxu0 0.0
    %441 = vmatmul.mubr.f32.gmra.mrb[0].mxu0 %v69
    %v442 = vpop.f32.mrb[0].mxu0
    %v443 = vadd.f32 0.0, %v442
    %v444 = vpop.f32.mrb[0].mxu0
    %445 = vmatprep.mubr.f32.mxu0 0.0
    %446 = vmatmul.mubr.f32.gmra.mrb[0].mxu0 %v72
    %v447 = vpop.f32.mrb[0].mxu0
    %v448 = vadd.f32 0.0, %v447
    %v449 = vpop.f32.mrb[0].mxu0
    %450 = vmatprep.mubr.f32.mxu0 0.0
    %451 = vmatmul.mubr.f32.gmra.mrb[0].mxu0 %v75
    %v452 = vpop.f32.mrb[0].mxu0
    %v453 = vadd.f32 0.0, %v452
    %v454 = vpop.f32.mrb[0].mxu0
    %455 = vdwg.mxu0
    %v457 = vsel %vm77, %v345, 0
    %459 = vmatprep.subr.mxu0 0.0
    %460 = vmatpush1.msra.mxu0 %v344
    %461 = vmatprep.subr.mxu0 0.0
    %462 = vmatpush1.msra.mxu0 %v457
    %463 = vmatprep.subr.mxu0 0.0
    %464 = vmatpush1.msra.mxu0 0.0
    %465 = vmatprep.subr.mxu0 0.0
    %466 = vmatpush1.msra.mxu0 0.0
    %467 = vmatprep.subr.mxu0 0.0
    %468 = vmatpush1.msra.mxu0 0.0
    %469 = vmatprep.subr.mxu0 0.0
    %470 = vmatpush1.msra.mxu0 0.0
    %471 = vmatprep.subr.mxu0 0.0
    %472 = vmatpush1.msra.mxu0 0.0
    %473 = vmatprep.subr.mxu0 0.0
    %474 = vmatpush1.msra.mxu0 0.0
    %475 = vmatprep.subr.mxu0 0.0
    %476 = vmatpush1.msra.mxu0 0.0
    %477 = vmatprep.subr.mxu0 0.0
    %478 = vmatpush1.msra.mxu0 0.0
    %479 = vmatprep.subr.mxu0 0.0
    %480 = vmatpush1.msra.mxu0 0.0
    %481 = vmatprep.subr.mxu0 0.0
    %482 = vmatpush1.msra.mxu0 0.0
    %483 = vmatprep.subr.mxu0 0.0
    %484 = vmatpush1.msra.mxu0 0.0
    %485 = vmatprep.subr.mxu0 0.0
    %486 = vmatpush1.msra.mxu0 0.0
    %487 = vmatprep.subr.mxu0 0.0
    %488 = vmatpush1.msra.mxu0 0.0
    %489 = vmatprep.subr.mxu0 0.0
    %490 = vmatpush1.msra.mxu0 0.0
    %491 = vmatprep.subr.mxu0 0.0
    %492 = vmatpush1.msra.mxu0 0.0
    %493 = vmatprep.subr.mxu0 0.0
    %494 = vmatpush1.msra.mxu0 0.0
    %495 = vmatprep.subr.mxu0 0.0
    %496 = vmatpush1.msra.mxu0 0.0
    %497 = vmatprep.subr.mxu0 0.0
    %498 = vmatpush1.msra.mxu0 0.0
    %499 = vmatprep.subr.mxu0 0.0
    %500 = vmatpush1.msra.mxu0 0.0
    %501 = vmatprep.subr.mxu0 0.0
    %502 = vmatpush1.msra.mxu0 0.0
    %503 = vmatprep.subr.mxu0 0.0
    %504 = vmatpush1.msra.mxu0 0.0
    %505 = vmatprep.subr.mxu0 0.0
    %506 = vmatpush1.msra.mxu0 0.0
    %507 = vmatprep.subr.mxu0 0.0
    %508 = vmatpush1.msra.mxu0 0.0
    %509 = vmatprep.subr.mxu0 0.0
    %510 = vmatpush1.msra.mxu0 0.0
    %511 = vmatprep.subr.mxu0 0.0
    %512 = vmatpush1.msra.mxu0 0.0
    %513 = vmatprep.subr.mxu0 0.0
    %514 = vmatpush1.msra.mxu0 0.0
    %515 = vmatprep.subr.mxu0 0.0
    %516 = vmatpush1.msra.mxu0 0.0
    %517 = vmatprep.subr.mxu0 0.0
    %518 = vmatpush1.msra.mxu0 0.0
    %519 = vmatprep.subr.mxu0 0.0
    %520 = vmatpush1.msra.mxu0 0.0
    %521 = vmatprep.subr.mxu0 0.0
    %522 = vmatpush1.msra.mxu0 0.0
    %523 = vmatprep.mubr.f32.mxu0 0.0
    %524 = vmatmul.mubr.f32.gmra.mrb[0].mxu0 %v188
    %v525 = vpop.f32.mrb[0].mxu0
    %v526 = vadd.f32 %v418, %v525
    %v527 = vpop.f32.mrb[0].mxu0
    %528 = vmatprep.mubr.f32.mxu0 0.0
    %529 = vmatmul.mubr.f32.gmra.mrb[0].mxu0 %v191
    %v530 = vpop.f32.mrb[0].mxu0
    %v531 = vadd.f32 %v423, %v530
    %v532 = vpop.f32.mrb[0].mxu0
    %533 = vmatprep.mubr.f32.mxu0 0.0
    %534 = vmatmul.mubr.f32.gmra.mrb[0].mxu0 %v194
    %v535 = vpop.f32.mrb[0].mxu0
    %v536 = vadd.f32 %v428, %v535
    %v537 = vpop.f32.mrb[0].mxu0
    %538 = vmatprep.mubr.f32.mxu0 0.0
    %539 = vmatmul.mubr.f32.gmra.mrb[0].mxu0 %v197
    %v540 = vpop.f32.mrb[0].mxu0
    %v541 = vadd.f32 %v433, %v540
    %v542 = vpop.f32.mrb[0].mxu0
    %543 = vmatprep.mubr.f32.mxu0 0.0
    %544 = vmatmul.mubr.f32.gmra.mrb[0].mxu0 %v200
    %v545 = vpop.f32.mrb[0].mxu0
    %v546 = vadd.f32 %v438, %v545
    %v547 = vpop.f32.mrb[0].mxu0
    %548 = vmatprep.mubr.f32.mxu0 0.0
    %549 = vmatmul.mubr.f32.gmra.mrb[0].mxu0 %v203
    %v550 = vpop.f32.mrb[0].mxu0
    %v551 = vadd.f32 %v443, %v550
    %v552 = vpop.f32.mrb[0].mxu0
    %553 = vmatprep.mubr.f32.mxu0 0.0
    %554 = vmatmul.mubr.f32.gmra.mrb[0].mxu0 %v206
    %v555 = vpop.f32.mrb[0].mxu0
    %v556 = vadd.f32 %v448, %v555
    %v557 = vpop.f32.mrb[0].mxu0
    %558 = vmatprep.mubr.f32.mxu0 0.0
    %559 = vmatmul.mubr.f32.gmra.mrb[0].mxu0 %v209
    %v560 = vpop.f32.mrb[0].mxu0
    %v561 = vadd.f32 %v453, %v560
    %v562 = vpop.f32.mrb[0].mxu0
    %563 = vdwg.mxu0
    %s564 = scalar_lea.vmem %s5, 1
    %v565 = vld [vmem:[%s564] sm:$0x1]
    %v567 = vlaneseq
    %v568 = vshrl.u32 %v567, 7
    %v569 = vsub.s32 0, %v568
    %v570 = vrot.slane %v565, %v569
    %v572 = vadd.f32 %v526, %v570
    %v573 = vadd.f32 %v531, %v570
    %v574 = vadd.f32 %v536, %v570
    %v575 = vadd.f32 %v541, %v570
    %v576 = vadd.f32 %v546, %v570
    %v577 = vadd.f32 %v551, %v570
    %v578 = vadd.f32 %v556, %v570
    %v579 = vadd.f32 %v561, %v570
    %580 = vst.msk [vmem:[#allocation3] sm:$0xff] %vm334, %v572
    %581 = vst.msk [vmem:[#allocation3 + $0x8] sm:$0xff] %vm334, %v573
    %582 = vst.msk [vmem:[#allocation3 + $0x10] sm:$0xff] %vm334, %v574
    %583 = vst.msk [vmem:[#allocation3 + $0x18] sm:$0xff] %vm334, %v575
    %584 = vst.msk [vmem:[#allocation3 + $0x20] sm:$0xff] %vm334, %v576
    %585 = vst.msk [vmem:[#allocation3 + $0x28] sm:$0xff] %vm334, %v577
    %586 = vst.msk [vmem:[#allocation3 + $0x30] sm:$0xff] %vm334, %v578
    %587 = vst.msk [vmem:[#allocation3 + $0x38] sm:$0xff] %vm334, %v579
    %s588 = scalar_lea.vmem %s2, 32
    %v589 = vld [vmem:[%s588] sm:$0xff]
    %v590 = vld [vmem:[%s588 + $0x8] sm:$0xf]
    %s591 = scalar_lea.vmem %s3, 8
    %v592 = vld [vmem:[%s591] sm:$0xf]
    %v594 = vsel %vm77, %v592, 0
    %596 = vmatprep.subr.mxu0 0.0
    %597 = vmatpush1.msra.mxu0 %v594
    %598 = vmatprep.subr.mxu0 0.0
    %599 = vmatpush1.msra.mxu0 0.0
    %600 = vmatprep.subr.mxu0 0.0
    %601 = vmatpush1.msra.mxu0 0.0
    %602 = vmatprep.subr.mxu0 0.0
    %603 = vmatpush1.msra.mxu0 0.0
    %604 = vmatprep.subr.mxu0 0.0
    %605 = vmatpush1.msra.mxu0 0.0
    %606 = vmatprep.subr.mxu0 0.0
    %607 = vmatpush1.msra.mxu0 0.0
    %608 = vmatprep.subr.mxu0 0.0
    %609 = vmatpush1.msra.mxu0 0.0
    %610 = vmatprep.subr.mxu0 0.0
    %611 = vmatpush1.msra.mxu0 0.0
    %612 = vmatprep.subr.mxu0 0.0
    %613 = vmatpush1.msra.mxu0 0.0
    %614 = vmatprep.subr.mxu0 0.0
    %615 = vmatpush1.msra.mxu0 0.0
    %616 = vmatprep.subr.mxu0 0.0
    %617 = vmatpush1.msra.mxu0 0.0
    %618 = vmatprep.subr.mxu0 0.0
    %619 = vmatpush1.msra.mxu0 0.0
    %620 = vmatprep.subr.mxu0 0.0
    %621 = vmatpush1.msra.mxu0 0.0
    %622 = vmatprep.subr.mxu0 0.0
    %623 = vmatpush1.msra.mxu0 0.0
    %624 = vmatprep.subr.mxu0 0.0
    %625 = vmatpush1.msra.mxu0 0.0
    %626 = vmatprep.subr.mxu0 0.0
    %627 = vmatpush1.msra.mxu0 0.0
    %628 = vmatprep.subr.mxu0 0.0
    %629 = vmatpush1.msra.mxu0 0.0
    %630 = vmatprep.subr.mxu0 0.0
    %631 = vmatpush1.msra.mxu0 0.0
    %632 = vmatprep.subr.mxu0 0.0
    %633 = vmatpush1.msra.mxu0 0.0
    %634 = vmatprep.subr.mxu0 0.0
    %635 = vmatpush1.msra.mxu0 0.0
    %636 = vmatprep.subr.mxu0 0.0
    %637 = vmatpush1.msra.mxu0 0.0
    %638 = vmatprep.subr.mxu0 0.0
    %639 = vmatpush1.msra.mxu0 0.0
    %640 = vmatprep.subr.mxu0 0.0
    %641 = vmatpush1.msra.mxu0 0.0
    %642 = vmatprep.subr.mxu0 0.0
    %643 = vmatpush1.msra.mxu0 0.0
    %644 = vmatprep.subr.mxu0 0.0
    %645 = vmatpush1.msra.mxu0 0.0
    %646 = vmatprep.subr.mxu0 0.0
    %647 = vmatpush1.msra.mxu0 0.0
    %648 = vmatprep.subr.mxu0 0.0
    %649 = vmatpush1.msra.mxu0 0.0
    %650 = vmatprep.subr.mxu0 0.0
    %651 = vmatpush1.msra.mxu0 0.0
    %652 = vmatprep.subr.mxu0 0.0
    %653 = vmatpush1.msra.mxu0 0.0
    %654 = vmatprep.subr.mxu0 0.0
    %655 = vmatpush1.msra.mxu0 0.0
    %656 = vmatprep.subr.mxu0 0.0
    %657 = vmatpush1.msra.mxu0 0.0
    %658 = vmatprep.subr.mxu0 0.0
    %659 = vmatpush1.msra.mxu0 0.0
    %660 = vmatprep.mubr.f32.mxu0 0.0
    %661 = vmatmul.mubr.f32.gmra.mrb[0].mxu0 %v54
    %v662 = vpop.f32.mrb[0].mxu0
    %v663 = vadd.f32 0.0, %v662
    %v664 = vpop.f32.mrb[0].mxu0
    %665 = vmatprep.mubr.f32.mxu0 0.0
    %666 = vmatmul.mubr.f32.gmra.mrb[0].mxu0 %v57
    %v667 = vpop.f32.mrb[0].mxu0
    %v668 = vadd.f32 0.0, %v667
    %v669 = vpop.f32.mrb[0].mxu0
    %670 = vmatprep.mubr.f32.mxu0 0.0
    %671 = vmatmul.mubr.f32.gmra.mrb[0].mxu0 %v60
    %v672 = vpop.f32.mrb[0].mxu0
    %v673 = vadd.f32 0.0, %v672
    %v674 = vpop.f32.mrb[0].mxu0
    %675 = vmatprep.mubr.f32.mxu0 0.0
    %676 = vmatmul.mubr.f32.gmra.mrb[0].mxu0 %v63
    %v677 = vpop.f32.mrb[0].mxu0
    %v678 = vadd.f32 0.0, %v677
    %v679 = vpop.f32.mrb[0].mxu0
    %680 = vmatprep.mubr.f32.mxu0 0.0
    %681 = vmatmul.mubr.f32.gmra.mrb[0].mxu0 %v66
    %v682 = vpop.f32.mrb[0].mxu0
    %v683 = vadd.f32 0.0, %v682
    %v684 = vpop.f32.mrb[0].mxu0
    %685 = vmatprep.mubr.f32.mxu0 0.0
    %686 = vmatmul.mubr.f32.gmra.mrb[0].mxu0 %v69
    %v687 = vpop.f32.mrb[0].mxu0
    %v688 = vadd.f32 0.0, %v687
    %v689 = vpop.f32.mrb[0].mxu0
    %690 = vmatprep.mubr.f32.mxu0 0.0
    %691 = vmatmul.mubr.f32.gmra.mrb[0].mxu0 %v72
    %v692 = vpop.f32.mrb[0].mxu0
    %v693 = vadd.f32 0.0, %v692
    %v694 = vpop.f32.mrb[0].mxu0
    %695 = vmatprep.mubr.f32.mxu0 0.0
    %696 = vmatmul.mubr.f32.gmra.mrb[0].mxu0 %v75
    %v697 = vpop.f32.mrb[0].mxu0
    %v698 = vadd.f32 0.0, %v697
    %v699 = vpop.f32.mrb[0].mxu0
    %700 = vdwg.mxu0
    %v702 = vsel %vm77, %v590, 0
    %704 = vmatprep.subr.mxu0 0.0
    %705 = vmatpush1.msra.mxu0 %v589
    %706 = vmatprep.subr.mxu0 0.0
    %707 = vmatpush1.msra.mxu0 %v702
    %708 = vmatprep.subr.mxu0 0.0
    %709 = vmatpush1.msra.mxu0 0.0
    %710 = vmatprep.subr.mxu0 0.0
    %711 = vmatpush1.msra.mxu0 0.0
    %712 = vmatprep.subr.mxu0 0.0
    %713 = vmatpush1.msra.mxu0 0.0
    %714 = vmatprep.subr.mxu0 0.0
    %715 = vmatpush1.msra.mxu0 0.0
    %716 = vmatprep.subr.mxu0 0.0
    %717 = vmatpush1.msra.mxu0 0.0
    %718 = vmatprep.subr.mxu0 0.0
    %719 = vmatpush1.msra.mxu0 0.0
    %720 = vmatprep.subr.mxu0 0.0
    %721 = vmatpush1.msra.mxu0 0.0
    %722 = vmatprep.subr.mxu0 0.0
    %723 = vmatpush1.msra.mxu0 0.0
    %724 = vmatprep.subr.mxu0 0.0
    %725 = vmatpush1.msra.mxu0 0.0
    %726 = vmatprep.subr.mxu0 0.0
    %727 = vmatpush1.msra.mxu0 0.0
    %728 = vmatprep.subr.mxu0 0.0
    %729 = vmatpush1.msra.mxu0 0.0
    %730 = vmatprep.subr.mxu0 0.0
    %731 = vmatpush1.msra.mxu0 0.0
    %732 = vmatprep.subr.mxu0 0.0
    %733 = vmatpush1.msra.mxu0 0.0
    %734 = vmatprep.subr.mxu0 0.0
    %735 = vmatpush1.msra.mxu0 0.0
    %736 = vmatprep.subr.mxu0 0.0
    %737 = vmatpush1.msra.mxu0 0.0
    %738 = vmatprep.subr.mxu0 0.0
    %739 = vmatpush1.msra.mxu0 0.0
    %740 = vmatprep.subr.mxu0 0.0
    %741 = vmatpush1.msra.mxu0 0.0
    %742 = vmatprep.subr.mxu0 0.0
    %743 = vmatpush1.msra.mxu0 0.0
    %744 = vmatprep.subr.mxu0 0.0
    %745 = vmatpush1.msra.mxu0 0.0
    %746 = vmatprep.subr.mxu0 0.0
    %747 = vmatpush1.msra.mxu0 0.0
    %748 = vmatprep.subr.mxu0 0.0
    %749 = vmatpush1.msra.mxu0 0.0
    %750 = vmatprep.subr.mxu0 0.0
    %751 = vmatpush1.msra.mxu0 0.0
    %752 = vmatprep.subr.mxu0 0.0
    %753 = vmatpush1.msra.mxu0 0.0
    %754 = vmatprep.subr.mxu0 0.0
    %755 = vmatpush1.msra.mxu0 0.0
    %756 = vmatprep.subr.mxu0 0.0
    %757 = vmatpush1.msra.mxu0 0.0
    %758 = vmatprep.subr.mxu0 0.0
    %759 = vmatpush1.msra.mxu0 0.0
    %760 = vmatprep.subr.mxu0 0.0
    %761 = vmatpush1.msra.mxu0 0.0
    %762 = vmatprep.subr.mxu0 0.0
    %763 = vmatpush1.msra.mxu0 0.0
    %764 = vmatprep.subr.mxu0 0.0
    %765 = vmatpush1.msra.mxu0 0.0
    %766 = vmatprep.subr.mxu0 0.0
    %767 = vmatpush1.msra.mxu0 0.0
    %768 = vmatprep.mubr.f32.mxu0 0.0
    %769 = vmatmul.mubr.f32.gmra.mrb[0].mxu0 %v188
    %v770 = vpop.f32.mrb[0].mxu0
    %v771 = vadd.f32 %v663, %v770
    %v772 = vpop.f32.mrb[0].mxu0
    %773 = vmatprep.mubr.f32.mxu0 0.0
    %774 = vmatmul.mubr.f32.gmra.mrb[0].mxu0 %v191
    %v775 = vpop.f32.mrb[0].mxu0
    %v776 = vadd.f32 %v668, %v775
    %v777 = vpop.f32.mrb[0].mxu0
    %778 = vmatprep.mubr.f32.mxu0 0.0
    %779 = vmatmul.mubr.f32.gmra.mrb[0].mxu0 %v194
    %v780 = vpop.f32.mrb[0].mxu0
    %v781 = vadd.f32 %v673, %v780
    %v782 = vpop.f32.mrb[0].mxu0
    %783 = vmatprep.mubr.f32.mxu0 0.0
    %784 = vmatmul.mubr.f32.gmra.mrb[0].mxu0 %v197
    %v785 = vpop.f32.mrb[0].mxu0
    %v786 = vadd.f32 %v678, %v785
    %v787 = vpop.f32.mrb[0].mxu0
    %788 = vmatprep.mubr.f32.mxu0 0.0
    %789 = vmatmul.mubr.f32.gmra.mrb[0].mxu0 %v200
    %v790 = vpop.f32.mrb[0].mxu0
    %v791 = vadd.f32 %v683, %v790
    %v792 = vpop.f32.mrb[0].mxu0
    %793 = vmatprep.mubr.f32.mxu0 0.0
    %794 = vmatmul.mubr.f32.gmra.mrb[0].mxu0 %v203
    %v795 = vpop.f32.mrb[0].mxu0
    %v796 = vadd.f32 %v688, %v795
    %v797 = vpop.f32.mrb[0].mxu0
    %798 = vmatprep.mubr.f32.mxu0 0.0
    %799 = vmatmul.mubr.f32.gmra.mrb[0].mxu0 %v206
    %v800 = vpop.f32.mrb[0].mxu0
    %v801 = vadd.f32 %v693, %v800
    %v802 = vpop.f32.mrb[0].mxu0
    %803 = vmatprep.mubr.f32.mxu0 0.0
    %804 = vmatmul.mubr.f32.gmra.mrb[0].mxu0 %v209
    %v805 = vpop.f32.mrb[0].mxu0
    %v806 = vadd.f32 %v698, %v805
    %v807 = vpop.f32.mrb[0].mxu0
    %808 = vdwg.mxu0
    %s809 = scalar_lea.vmem %s5, 2
    %v810 = vld [vmem:[%s809] sm:$0x1]
    %v812 = vlaneseq
    %v813 = vshrl.u32 %v812, 7
    %v814 = vsub.s32 0, %v813
    %v815 = vrot.slane %v810, %v814
    %v817 = vadd.f32 %v771, %v815
    %v818 = vadd.f32 %v776, %v815
    %v819 = vadd.f32 %v781, %v815
    %v820 = vadd.f32 %v786, %v815
    %v821 = vadd.f32 %v791, %v815
    %v822 = vadd.f32 %v796, %v815
    %v823 = vadd.f32 %v801, %v815
    %v824 = vadd.f32 %v806, %v815
    %825 = vst.msk [vmem:[#allocation4] sm:$0xff] %vm334, %v817
    %826 = vst.msk [vmem:[#allocation4 + $0x8] sm:$0xff] %vm334, %v818
    %827 = vst.msk [vmem:[#allocation4 + $0x10] sm:$0xff] %vm334, %v819
    %828 = vst.msk [vmem:[#allocation4 + $0x18] sm:$0xff] %vm334, %v820
    %829 = vst.msk [vmem:[#allocation4 + $0x20] sm:$0xff] %vm334, %v821
    %830 = vst.msk [vmem:[#allocation4 + $0x28] sm:$0xff] %vm334, %v822
    %831 = vst.msk [vmem:[#allocation4 + $0x30] sm:$0xff] %vm334, %v823
    %832 = vst.msk [vmem:[#allocation4 + $0x38] sm:$0xff] %vm334, %v824
    %v833 = vld [vmem:[%s4] sm:$0xff]
    %v834 = vld [vmem:[%s4 + $0x8] sm:$0xff]
    %v835 = vld [vmem:[%s4 + $0x10] sm:$0xff]
    %v836 = vld [vmem:[%s4 + $0x18] sm:$0xff]
    %s837 = scalar_lea.vmem %s4, 32
    %v838 = vld [vmem:[%s837] sm:$0xff]
    %v839 = vld [vmem:[%s837 + $0x8] sm:$0xff]
    %v840 = vld [vmem:[%s837 + $0x10] sm:$0xff]
    %v841 = vld [vmem:[%s837 + $0x18] sm:$0xff]
    %s842 = scalar_lea.vmem %s4, 64
    %v843 = vld [vmem:[%s842] sm:$0xff]
    %v844 = vld [vmem:[%s842 + $0x8] sm:$0xff]
    %v845 = vld [vmem:[%s842 + $0x10] sm:$0xff]
    %v846 = vld [vmem:[%s842 + $0x18] sm:$0xff]
    %v847 = vld [vmem:[%s6] sm:$0x1]
    %v849 = vsel %vm334, 0.0, 0
    %851 = vmatprep.subr.mxu0 0.0
    %852 = vmatpush1.msra.mxu0 %v833
    %853 = vmatprep.subr.mxu0 0.0
    %854 = vmatpush1.msra.mxu0 %v834
    %855 = vmatprep.subr.mxu0 0.0
    %856 = vmatpush1.msra.mxu0 %v835
    %857 = vmatprep.subr.mxu0 0.0
    %858 = vmatpush1.msra.mxu0 %v836
    %859 = vmatprep.subr.mxu0 0.0
    %860 = vmatpush1.msra.mxu0 0.0
    %861 = vmatprep.subr.mxu0 0.0
    %862 = vmatpush1.msra.mxu0 0.0
    %863 = vmatprep.subr.mxu0 0.0
    %864 = vmatpush1.msra.mxu0 0.0
    %865 = vmatprep.subr.mxu0 0.0
    %866 = vmatpush1.msra.mxu0 0.0
    %867 = vmatprep.subr.mxu0 0.0
    %868 = vmatpush1.msra.mxu0 0.0
    %869 = vmatprep.subr.mxu0 0.0
    %870 = vmatpush1.msra.mxu0 0.0
    %871 = vmatprep.subr.mxu0 0.0
    %872 = vmatpush1.msra.mxu0 0.0
    %873 = vmatprep.subr.mxu0 0.0
    %874 = vmatpush1.msra.mxu0 0.0
    %875 = vmatprep.subr.mxu0 0.0
    %876 = vmatpush1.msra.mxu0 0.0
    %877 = vmatprep.subr.mxu0 0.0
    %878 = vmatpush1.msra.mxu0 0.0
    %879 = vmatprep.subr.mxu0 0.0
    %880 = vmatpush1.msra.mxu0 0.0
    %881 = vmatprep.subr.mxu0 0.0
    %882 = vmatpush1.msra.mxu0 0.0
    %883 = vmatprep.subr.mxu0 0.0
    %884 = vmatpush1.msra.mxu0 0.0
    %885 = vmatprep.subr.mxu0 0.0
    %886 = vmatpush1.msra.mxu0 0.0
    %887 = vmatprep.subr.mxu0 0.0
    %888 = vmatpush1.msra.mxu0 0.0
    %889 = vmatprep.subr.mxu0 0.0
    %890 = vmatpush1.msra.mxu0 0.0
    %891 = vmatprep.subr.mxu0 0.0
    %892 = vmatpush1.msra.mxu0 0.0
    %893 = vmatprep.subr.mxu0 0.0
    %894 = vmatpush1.msra.mxu0 0.0
    %895 = vmatprep.subr.mxu0 0.0
    %896 = vmatpush1.msra.mxu0 0.0
    %897 = vmatprep.subr.mxu0 0.0
    %898 = vmatpush1.msra.mxu0 0.0
    %899 = vmatprep.subr.mxu0 0.0
    %900 = vmatpush1.msra.mxu0 0.0
    %901 = vmatprep.subr.mxu0 0.0
    %902 = vmatpush1.msra.mxu0 0.0
    %903 = vmatprep.subr.mxu0 0.0
    %904 = vmatpush1.msra.mxu0 0.0
    %905 = vmatprep.subr.mxu0 0.0
    %906 = vmatpush1.msra.mxu0 0.0
    %907 = vmatprep.subr.mxu0 0.0
    %908 = vmatpush1.msra.mxu0 0.0
    %909 = vmatprep.subr.mxu0 0.0
    %910 = vmatpush1.msra.mxu0 0.0
    %911 = vmatprep.subr.mxu0 0.0
    %912 = vmatpush1.msra.mxu0 0.0
    %913 = vmatprep.subr.mxu0 0.0
    %914 = vmatpush1.msra.mxu0 0.0
    %915 = vmatprep.mubr.f32.mxu0 0.0
    %916 = vmatmul.mubr.f32.gmra.mrb[0].mxu0 %v849
    %v917 = vpop.f32.mrb[0].mxu0
    %v918 = vadd.f32 0.0, %v917
    %v919 = vpop.f32.mrb[0].mxu0
    %920 = vdwg.mxu0
    %921 = vmatprep.subr.mxu0 0.0
    %922 = vmatpush1.msra.mxu0 %v838
    %923 = vmatprep.subr.mxu0 0.0
    %924 = vmatpush1.msra.mxu0 %v839
    %925 = vmatprep.subr.mxu0 0.0
    %926 = vmatpush1.msra.mxu0 %v840
    %927 = vmatprep.subr.mxu0 0.0
    %928 = vmatpush1.msra.mxu0 %v841
    %929 = vmatprep.subr.mxu0 0.0
    %930 = vmatpush1.msra.mxu0 0.0
    %931 = vmatprep.subr.mxu0 0.0
    %932 = vmatpush1.msra.mxu0 0.0
    %933 = vmatprep.subr.mxu0 0.0
    %934 = vmatpush1.msra.mxu0 0.0
    %935 = vmatprep.subr.mxu0 0.0
    %936 = vmatpush1.msra.mxu0 0.0
    %937 = vmatprep.subr.mxu0 0.0
    %938 = vmatpush1.msra.mxu0 0.0
    %939 = vmatprep.subr.mxu0 0.0
    %940 = vmatpush1.msra.mxu0 0.0
    %941 = vmatprep.subr.mxu0 0.0
    %942 = vmatpush1.msra.mxu0 0.0
    %943 = vmatprep.subr.mxu0 0.0
    %944 = vmatpush1.msra.mxu0 0.0
    %945 = vmatprep.subr.mxu0 0.0
    %946 = vmatpush1.msra.mxu0 0.0
    %947 = vmatprep.subr.mxu0 0.0
    %948 = vmatpush1.msra.mxu0 0.0
    %949 = vmatprep.subr.mxu0 0.0
    %950 = vmatpush1.msra.mxu0 0.0
    %951 = vmatprep.subr.mxu0 0.0
    %952 = vmatpush1.msra.mxu0 0.0
    %953 = vmatprep.subr.mxu0 0.0
    %954 = vmatpush1.msra.mxu0 0.0
    %955 = vmatprep.subr.mxu0 0.0
    %956 = vmatpush1.msra.mxu0 0.0
    %957 = vmatprep.subr.mxu0 0.0
    %958 = vmatpush1.msra.mxu0 0.0
    %959 = vmatprep.subr.mxu0 0.0
    %960 = vmatpush1.msra.mxu0 0.0
    %961 = vmatprep.subr.mxu0 0.0
    %962 = vmatpush1.msra.mxu0 0.0
    %963 = vmatprep.subr.mxu0 0.0
    %964 = vmatpush1.msra.mxu0 0.0
    %965 = vmatprep.subr.mxu0 0.0
    %966 = vmatpush1.msra.mxu0 0.0
    %967 = vmatprep.subr.mxu0 0.0
    %968 = vmatpush1.msra.mxu0 0.0
    %969 = vmatprep.subr.mxu0 0.0
    %970 = vmatpush1.msra.mxu0 0.0
    %971 = vmatprep.subr.mxu0 0.0
    %972 = vmatpush1.msra.mxu0 0.0
    %973 = vmatprep.subr.mxu0 0.0
    %974 = vmatpush1.msra.mxu0 0.0
    %975 = vmatprep.subr.mxu0 0.0
    %976 = vmatpush1.msra.mxu0 0.0
    %977 = vmatprep.subr.mxu0 0.0
    %978 = vmatpush1.msra.mxu0 0.0
    %979 = vmatprep.subr.mxu0 0.0
    %980 = vmatpush1.msra.mxu0 0.0
    %981 = vmatprep.subr.mxu0 0.0
    %982 = vmatpush1.msra.mxu0 0.0
    %983 = vmatprep.subr.mxu0 0.0
    %984 = vmatpush1.msra.mxu0 0.0
    %985 = vmatprep.mubr.f32.mxu0 0.0
    %986 = vmatmul.mubr.f32.gmra.mrb[0].mxu0 %v849
    %v987 = vpop.f32.mrb[0].mxu0
    %v988 = vadd.f32 0.0, %v987
    %v989 = vpop.f32.mrb[0].mxu0
    %990 = vdwg.mxu0
    %v992 = vlaneseq
    %v993 = vshrl.u32 %v992, 7
    %v994 = vsub.s32 0, %v993
    %v995 = vrot.slane %v847, %v994
    %997 = vmatprep.subr.mxu0 0.0
    %998 = vmatpush1.msra.mxu0 %v843
    %999 = vmatprep.subr.mxu0 0.0
    %1000 = vmatpush1.msra.mxu0 %v844
    %1001 = vmatprep.subr.mxu0 0.0
    %1002 = vmatpush1.msra.mxu0 %v845
    %1003 = vmatprep.subr.mxu0 0.0
    %1004 = vmatpush1.msra.mxu0 %v846
    %1005 = vmatprep.subr.mxu0 0.0
    %1006 = vmatpush1.msra.mxu0 0.0
    %1007 = vmatprep.subr.mxu0 0.0
    %1008 = vmatpush1.msra.mxu0 0.0
    %1009 = vmatprep.subr.mxu0 0.0
    %1010 = vmatpush1.msra.mxu0 0.0
    %1011 = vmatprep.subr.mxu0 0.0
    %1012 = vmatpush1.msra.mxu0 0.0
    %1013 = vmatprep.subr.mxu0 0.0
    %1014 = vmatpush1.msra.mxu0 0.0
    %1015 = vmatprep.subr.mxu0 0.0
    %1016 = vmatpush1.msra.mxu0 0.0
    %1017 = vmatprep.subr.mxu0 0.0
    %1018 = vmatpush1.msra.mxu0 0.0
    %1019 = vmatprep.subr.mxu0 0.0
    %1020 = vmatpush1.msra.mxu0 0.0
    %1021 = vmatprep.subr.mxu0 0.0
    %1022 = vmatpush1.msra.mxu0 0.0
    %1023 = vmatprep.subr.mxu0 0.0
    %1024 = vmatpush1.msra.mxu0 0.0
    %1025 = vmatprep.subr.mxu0 0.0
    %1026 = vmatpush1.msra.mxu0 0.0
    %1027 = vmatprep.subr.mxu0 0.0
    %1028 = vmatpush1.msra.mxu0 0.0
    %1029 = vmatprep.subr.mxu0 0.0
    %1030 = vmatpush1.msra.mxu0 0.0
    %1031 = vmatprep.subr.mxu0 0.0
    %1032 = vmatpush1.msra.mxu0 0.0
    %1033 = vmatprep.subr.mxu0 0.0
    %1034 = vmatpush1.msra.mxu0 0.0
    %1035 = vmatprep.subr.mxu0 0.0
    %1036 = vmatpush1.msra.mxu0 0.0
    %1037 = vmatprep.subr.mxu0 0.0
    %1038 = vmatpush1.msra.mxu0 0.0
    %1039 = vmatprep.subr.mxu0 0.0
    %1040 = vmatpush1.msra.mxu0 0.0
    %1041 = vmatprep.subr.mxu0 0.0
    %1042 = vmatpush1.msra.mxu0 0.0
    %1043 = vmatprep.subr.mxu0 0.0
    %1044 = vmatpush1.msra.mxu0 0.0
    %1045 = vmatprep.subr.mxu0 0.0
    %1046 = vmatpush1.msra.mxu0 0.0
    %1047 = vmatprep.subr.mxu0 0.0
    %1048 = vmatpush1.msra.mxu0 0.0
    %1049 = vmatprep.subr.mxu0 0.0
    %1050 = vmatpush1.msra.mxu0 0.0
    %1051 = vmatprep.subr.mxu0 0.0
    %1052 = vmatpush1.msra.mxu0 0.0
    %1053 = vmatprep.subr.mxu0 0.0
    %1054 = vmatpush1.msra.mxu0 0.0
    %1055 = vmatprep.subr.mxu0 0.0
    %1056 = vmatpush1.msra.mxu0 0.0
    %1057 = vmatprep.subr.mxu0 0.0
    %1058 = vmatpush1.msra.mxu0 0.0
    %1059 = vmatprep.subr.mxu0 0.0
    %1060 = vmatpush1.msra.mxu0 0.0
    %1061 = vmatprep.mubr.f32.mxu0 0.0
    %1062 = vmatmul.mubr.f32.gmra.mrb[0].mxu0 %v849
    %v1063 = vpop.f32.mrb[0].mxu0
    %v1064 = vadd.f32 %v995, %v1063
    %v1065 = vpop.f32.mrb[0].mxu0
    %1066 = vdwg.mxu0
    %v1067 = vld [vmem:[#allocation2] sm:$0xff]
    %v1068 = vadd.f32 %v1067, %v918
    %v1069 = vxor.u32 %v1068, 2147483648
    %v1070 = vmul.f32 %v1069, 1.442695
    %v1071 = vpow.pop %v1070
    %v1072 = vadd.f32 %v1071, 1.0
    %v1073 = vrcp.pop %v1072
    %v1074 = vmul.f32 1.0, %v1073
    %v1075 = vld [vmem:[#allocation3] sm:$0xff]
    %v1076 = vadd.f32 %v1075, %v988
    %v1077 = vxor.u32 %v1076, 2147483648
    %v1078 = vmul.f32 %v1077, 1.442695
    %v1079 = vpow.pop %v1078
    %v1080 = vadd.f32 %v1079, 1.0
    %v1081 = vrcp.pop %v1080
    %v1082 = vmul.f32 1.0, %v1081
    %v1083 = vld [vmem:[#allocation4] sm:$0xff]
    %v1084 = vmul.f32 %v1074, %v1064
    %v1085 = vadd.f32 %v1083, %v1084
    %v1086 = vtanh.pop %v1085
    %v1087 = vsub.f32 1.0, %v1082
    %v1088 = vmul.f32 %v1087, %v1086
    %v1089 = vmul.f32 %v1082, 0.0
    %v1090 = vadd.f32 %v1088, %v1089
    %v1092 = vsel %vm334, %v1090, 0
    %1094 = vmatprep.subr.mxu0 0.0
    %1095 = vmatpush1.msra.mxu0 %v833
    %1096 = vmatprep.subr.mxu0 0.0
    %1097 = vmatpush1.msra.mxu0 %v834
    %1098 = vmatprep.subr.mxu0 0.0
    %1099 = vmatpush1.msra.mxu0 %v835
    %1100 = vmatprep.subr.mxu0 0.0
    %1101 = vmatpush1.msra.mxu0 %v836
    %1102 = vmatprep.subr.mxu0 0.0
    %1103 = vmatpush1.msra.mxu0 0.0
    %1104 = vmatprep.subr.mxu0 0.0
    %1105 = vmatpush1.msra.mxu0 0.0
    %1106 = vmatprep.subr.mxu0 0.0
    %1107 = vmatpush1.msra.mxu0 0.0
    %1108 = vmatprep.subr.mxu0 0.0
    %1109 = vmatpush1.msra.mxu0 0.0
    %1110 = vmatprep.subr.mxu0 0.0
    %1111 = vmatpush1.msra.mxu0 0.0
    %1112 = vmatprep.subr.mxu0 0.0
    %1113 = vmatpush1.msra.mxu0 0.0
    %1114 = vmatprep.subr.mxu0 0.0
    %1115 = vmatpush1.msra.mxu0 0.0
    %1116 = vmatprep.subr.mxu0 0.0
    %1117 = vmatpush1.msra.mxu0 0.0
    %1118 = vmatprep.subr.mxu0 0.0
    %1119 = vmatpush1.msra.mxu0 0.0
    %1120 = vmatprep.subr.mxu0 0.0
    %1121 = vmatpush1.msra.mxu0 0.0
    %1122 = vmatprep.subr.mxu0 0.0
    %1123 = vmatpush1.msra.mxu0 0.0
    %1124 = vmatprep.subr.mxu0 0.0
    %1125 = vmatpush1.msra.mxu0 0.0
    %1126 = vmatprep.subr.mxu0 0.0
    %1127 = vmatpush1.msra.mxu0 0.0
    %1128 = vmatprep.subr.mxu0 0.0
    %1129 = vmatpush1.msra.mxu0 0.0
    %1130 = vmatprep.subr.mxu0 0.0
    %1131 = vmatpush1.msra.mxu0 0.0
    %1132 = vmatprep.subr.mxu0 0.0
    %1133 = vmatpush1.msra.mxu0 0.0
    %1134 = vmatprep.subr.mxu0 0.0
    %1135 = vmatpush1.msra.mxu0 0.0
    %1136 = vmatprep.subr.mxu0 0.0
    %1137 = vmatpush1.msra.mxu0 0.0
    %1138 = vmatprep.subr.mxu0 0.0
    %1139 = vmatpush1.msra.mxu0 0.0
    %1140 = vmatprep.subr.mxu0 0.0
    %1141 = vmatpush1.msra.mxu0 0.0
    %1142 = vmatprep.subr.mxu0 0.0
    %1143 = vmatpush1.msra.mxu0 0.0
    %1144 = vmatprep.subr.mxu0 0.0
    %1145 = vmatpush1.msra.mxu0 0.0
    %1146 = vmatprep.subr.mxu0 0.0
    %1147 = vmatpush1.msra.mxu0 0.0
    %1148 = vmatprep.subr.mxu0 0.0
    %1149 = vmatpush1.msra.mxu0 0.0
    %1150 = vmatprep.subr.mxu0 0.0
    %1151 = vmatpush1.msra.mxu0 0.0
    %1152 = vmatprep.subr.mxu0 0.0
    %1153 = vmatpush1.msra.mxu0 0.0
    %1154 = vmatprep.subr.mxu0 0.0
    %1155 = vmatpush1.msra.mxu0 0.0
    %1156 = vmatprep.subr.mxu0 0.0
    %1157 = vmatpush1.msra.mxu0 0.0
    %1158 = vmatprep.mubr.f32.mxu0 0.0
    %1159 = vmatmul.mubr.f32.gmra.mrb[0].mxu0 %v1092
    %v1160 = vpop.f32.mrb[0].mxu0
    %v1161 = vadd.f32 0.0, %v1160
    %v1162 = vpop.f32.mrb[0].mxu0
    %1163 = vdwg.mxu0
    %1164 = vmatprep.subr.mxu0 0.0
    %1165 = vmatpush1.msra.mxu0 %v838
    %1166 = vmatprep.subr.mxu0 0.0
    %1167 = vmatpush1.msra.mxu0 %v839
    %1168 = vmatprep.subr.mxu0 0.0
    %1169 = vmatpush1.msra.mxu0 %v840
    %1170 = vmatprep.subr.mxu0 0.0
    %1171 = vmatpush1.msra.mxu0 %v841
    %1172 = vmatprep.subr.mxu0 0.0
    %1173 = vmatpush1.msra.mxu0 0.0
    %1174 = vmatprep.subr.mxu0 0.0
    %1175 = vmatpush1.msra.mxu0 0.0
    %1176 = vmatprep.subr.mxu0 0.0
    %1177 = vmatpush1.msra.mxu0 0.0
    %1178 = vmatprep.subr.mxu0 0.0
    %1179 = vmatpush1.msra.mxu0 0.0
    %1180 = vmatprep.subr.mxu0 0.0
    %1181 = vmatpush1.msra.mxu0 0.0
    %1182 = vmatprep.subr.mxu0 0.0
    %1183 = vmatpush1.msra.mxu0 0.0
    %1184 = vmatprep.subr.mxu0 0.0
    %1185 = vmatpush1.msra.mxu0 0.0
    %1186 = vmatprep.subr.mxu0 0.0
    %1187 = vmatpush1.msra.mxu0 0.0
    %1188 = vmatprep.subr.mxu0 0.0
    %1189 = vmatpush1.msra.mxu0 0.0
    %1190 = vmatprep.subr.mxu0 0.0
    %1191 = vmatpush1.msra.mxu0 0.0
    %1192 = vmatprep.subr.mxu0 0.0
    %1193 = vmatpush1.msra.mxu0 0.0
    %1194 = vmatprep.subr.mxu0 0.0
    %1195 = vmatpush1.msra.mxu0 0.0
    %1196 = vmatprep.subr.mxu0 0.0
    %1197 = vmatpush1.msra.mxu0 0.0
    %1198 = vmatprep.subr.mxu0 0.0
    %1199 = vmatpush1.msra.mxu0 0.0
    %1200 = vmatprep.subr.mxu0 0.0
    %1201 = vmatpush1.msra.mxu0 0.0
    %1202 = vmatprep.subr.mxu0 0.0
    %1203 = vmatpush1.msra.mxu0 0.0
    %1204 = vmatprep.subr.mxu0 0.0
    %1205 = vmatpush1.msra.mxu0 0.0
    %1206 = vmatprep.subr.mxu0 0.0
    %1207 = vmatpush1.msra.mxu0 0.0
    %1208 = vmatprep.subr.mxu0 0.0
    %1209 = vmatpush1.msra.mxu0 0.0
    %1210 = vmatprep.subr.mxu0 0.0
    %1211 = vmatpush1.msra.mxu0 0.0
    %1212 = vmatprep.subr.mxu0 0.0
    %1213 = vmatpush1.msra.mxu0 0.0
    %1214 = vmatprep.subr.mxu0 0.0
    %1215 = vmatpush1.msra.mxu0 0.0
    %1216 = vmatprep.subr.mxu0 0.0
    %1217 = vmatpush1.msra.mxu0 0.0
    %1218 = vmatprep.subr.mxu0 0.0
    %1219 = vmatpush1.msra.mxu0 0.0
    %1220 = vmatprep.subr.mxu0 0.0
    %1221 = vmatpush1.msra.mxu0 0.0
    %1222 = vmatprep.subr.mxu0 0.0
    %1223 = vmatpush1.msra.mxu0 0.0
    %1224 = vmatprep.subr.mxu0 0.0
    %1225 = vmatpush1.msra.mxu0 0.0
    %1226 = vmatprep.subr.mxu0 0.0
    %1227 = vmatpush1.msra.mxu0 0.0
    %1228 = vmatprep.mubr.f32.mxu0 0.0
    %1229 = vmatmul.mubr.f32.gmra.mrb[0].mxu0 %v1092
    %v1230 = vpop.f32.mrb[0].mxu0
    %v1231 = vadd.f32 0.0, %v1230
    %v1232 = vpop.f32.mrb[0].mxu0
    %1233 = vdwg.mxu0
    %1234 = vmatprep.subr.mxu0 0.0
    %1235 = vmatpush1.msra.mxu0 %v843
    %1236 = vmatprep.subr.mxu0 0.0
    %1237 = vmatpush1.msra.mxu0 %v844
    %1238 = vmatprep.subr.mxu0 0.0
    %1239 = vmatpush1.msra.mxu0 %v845
    %1240 = vmatprep.subr.mxu0 0.0
    %1241 = vmatpush1.msra.mxu0 %v846
    %1242 = vmatprep.subr.mxu0 0.0
    %1243 = vmatpush1.msra.mxu0 0.0
    %1244 = vmatprep.subr.mxu0 0.0
    %1245 = vmatpush1.msra.mxu0 0.0
    %1246 = vmatprep.subr.mxu0 0.0
    %1247 = vmatpush1.msra.mxu0 0.0
    %1248 = vmatprep.subr.mxu0 0.0
    %1249 = vmatpush1.msra.mxu0 0.0
    %1250 = vmatprep.subr.mxu0 0.0
    %1251 = vmatpush1.msra.mxu0 0.0
    %1252 = vmatprep.subr.mxu0 0.0
    %1253 = vmatpush1.msra.mxu0 0.0
    %1254 = vmatprep.subr.mxu0 0.0
    %1255 = vmatpush1.msra.mxu0 0.0
    %1256 = vmatprep.subr.mxu0 0.0
    %1257 = vmatpush1.msra.mxu0 0.0
    %1258 = vmatprep.subr.mxu0 0.0
    %1259 = vmatpush1.msra.mxu0 0.0
    %1260 = vmatprep.subr.mxu0 0.0
    %1261 = vmatpush1.msra.mxu0 0.0
    %1262 = vmatprep.subr.mxu0 0.0
    %1263 = vmatpush1.msra.mxu0 0.0
    %1264 = vmatprep.subr.mxu0 0.0
    %1265 = vmatpush1.msra.mxu0 0.0
    %1266 = vmatprep.subr.mxu0 0.0
    %1267 = vmatpush1.msra.mxu0 0.0
    %1268 = vmatprep.subr.mxu0 0.0
    %1269 = vmatpush1.msra.mxu0 0.0
    %1270 = vmatprep.subr.mxu0 0.0
    %1271 = vmatpush1.msra.mxu0 0.0
    %1272 = vmatprep.subr.mxu0 0.0
    %1273 = vmatpush1.msra.mxu0 0.0
    %1274 = vmatprep.subr.mxu0 0.0
    %1275 = vmatpush1.msra.mxu0 0.0
    %1276 = vmatprep.subr.mxu0 0.0
    %1277 = vmatpush1.msra.mxu0 0.0
    %1278 = vmatprep.subr.mxu0 0.0
    %1279 = vmatpush1.msra.mxu0 0.0
    %1280 = vmatprep.subr.mxu0 0.0
    %1281 = vmatpush1.msra.mxu0 0.0
    %1282 = vmatprep.subr.mxu0 0.0
    %1283 = vmatpush1.msra.mxu0 0.0
    %1284 = vmatprep.subr.mxu0 0.0
    %1285 = vmatpush1.msra.mxu0 0.0
    %1286 = vmatprep.subr.mxu0 0.0
    %1287 = vmatpush1.msra.mxu0 0.0
    %1288 = vmatprep.subr.mxu0 0.0
    %1289 = vmatpush1.msra.mxu0 0.0
    %1290 = vmatprep.subr.mxu0 0.0
    %1291 = vmatpush1.msra.mxu0 0.0
    %1292 = vmatprep.subr.mxu0 0.0
    %1293 = vmatpush1.msra.mxu0 0.0
    %1294 = vmatprep.subr.mxu0 0.0
    %1295 = vmatpush1.msra.mxu0 0.0
    %1296 = vmatprep.subr.mxu0 0.0
    %1297 = vmatpush1.msra.mxu0 0.0
    %1298 = vmatprep.mubr.f32.mxu0 0.0
    %1299 = vmatmul.mubr.f32.gmra.mrb[0].mxu0 %v1092
    %v1300 = vpop.f32.mrb[0].mxu0
    %v1301 = vadd.f32 %v995, %v1300
    %v1302 = vpop.f32.mrb[0].mxu0
    %1303 = vdwg.mxu0
    %s1304 = scalar_lea.vmem [#allocation2], 8
    %v1305 = vld [vmem:[%s1304] sm:$0xff]
    %v1306 = vadd.f32 %v1305, %v1161
    %v1307 = vxor.u32 %v1306, 2147483648
    %v1308 = vmul.f32 %v1307, 1.442695
    %v1309 = vpow.pop %v1308
    %v1310 = vadd.f32 %v1309, 1.0
    %v1311 = vrcp.pop %v1310
    %v1312 = vmul.f32 1.0, %v1311
    %s1313 = scalar_lea.vmem [#allocation3], 8
    %v1314 = vld [vmem:[%s1313] sm:$0xff]
    %v1315 = vadd.f32 %v1314, %v1231
    %v1316 = vxor.u32 %v1315, 2147483648
    %v1317 = vmul.f32 %v1316, 1.442695
    %v1318 = vpow.pop %v1317
    %v1319 = vadd.f32 %v1318, 1.0
    %v1320 = vrcp.pop %v1319
    %v1321 = vmul.f32 1.0, %v1320
    %s1322 = scalar_lea.vmem [#allocation4], 8
    %v1323 = vld [vmem:[%s1322] sm:$0xff]
    %v1324 = vmul.f32 %v1312, %v1301
    %v1325 = vadd.f32 %v1323, %v1324
    %v1326 = vtanh.pop %v1325
    %v1327 = vsub.f32 1.0, %v1321
    %v1328 = vmul.f32 %v1327, %v1326
    %v1329 = vmul.f32 %v1321, %v1090
    %v1330 = vadd.f32 %v1328, %v1329
    %v1332 = vsel %vm334, %v1330, 0
    %1334 = vmatprep.subr.mxu0 0.0
    %1335 = vmatpush1.msra.mxu0 %v833
    %1336 = vmatprep.subr.mxu0 0.0
    %1337 = vmatpush1.msra.mxu0 %v834
    %1338 = vmatprep.subr.mxu0 0.0
    %1339 = vmatpush1.msra.mxu0 %v835
    %1340 = vmatprep.subr.mxu0 0.0
    %1341 = vmatpush1.msra.mxu0 %v836
    %1342 = vmatprep.subr.mxu0 0.0
    %1343 = vmatpush1.msra.mxu0 0.0
    %1344 = vmatprep.subr.mxu0 0.0
    %1345 = vmatpush1.msra.mxu0 0.0
    %1346 = vmatprep.subr.mxu0 0.0
    %1347 = vmatpush1.msra.mxu0 0.0
    %1348 = vmatprep.subr.mxu0 0.0
    %1349 = vmatpush1.msra.mxu0 0.0
    %1350 = vmatprep.subr.mxu0 0.0
    %1351 = vmatpush1.msra.mxu0 0.0
    %1352 = vmatprep.subr.mxu0 0.0
    %1353 = vmatpush1.msra.mxu0 0.0
    %1354 = vmatprep.subr.mxu0 0.0
    %1355 = vmatpush1.msra.mxu0 0.0
    %1356 = vmatprep.subr.mxu0 0.0
    %1357 = vmatpush1.msra.mxu0 0.0
    %1358 = vmatprep.subr.mxu0 0.0
    %1359 = vmatpush1.msra.mxu0 0.0
    %1360 = vmatprep.subr.mxu0 0.0
    %1361 = vmatpush1.msra.mxu0 0.0
    %1362 = vmatprep.subr.mxu0 0.0
    %1363 = vmatpush1.msra.mxu0 0.0
    %1364 = vmatprep.subr.mxu0 0.0
    %1365 = vmatpush1.msra.mxu0 0.0
    %1366 = vmatprep.subr.mxu0 0.0
    %1367 = vmatpush1.msra.mxu0 0.0
    %1368 = vmatprep.subr.mxu0 0.0
    %1369 = vmatpush1.msra.mxu0 0.0
    %1370 = vmatprep.subr.mxu0 0.0
    %1371 = vmatpush1.msra.mxu0 0.0
    %1372 = vmatprep.subr.mxu0 0.0
    %1373 = vmatpush1.msra.mxu0 0.0
    %1374 = vmatprep.subr.mxu0 0.0
    %1375 = vmatpush1.msra.mxu0 0.0
    %1376 = vmatprep.subr.mxu0 0.0
    %1377 = vmatpush1.msra.mxu0 0.0
    %1378 = vmatprep.subr.mxu0 0.0
    %1379 = vmatpush1.msra.mxu0 0.0
    %1380 = vmatprep.subr.mxu0 0.0
    %1381 = vmatpush1.msra.mxu0 0.0
    %1382 = vmatprep.subr.mxu0 0.0
    %1383 = vmatpush1.msra.mxu0 0.0
    %1384 = vmatprep.subr.mxu0 0.0
    %1385 = vmatpush1.msra.mxu0 0.0
    %1386 = vmatprep.subr.mxu0 0.0
    %1387 = vmatpush1.msra.mxu0 0.0
    %1388 = vmatprep.subr.mxu0 0.0
    %1389 = vmatpush1.msra.mxu0 0.0
    %1390 = vmatprep.subr.mxu0 0.0
    %1391 = vmatpush1.msra.mxu0 0.0
    %1392 = vmatprep.subr.mxu0 0.0
    %1393 = vmatpush1.msra.mxu0 0.0
    %1394 = vmatprep.subr.mxu0 0.0
    %1395 = vmatpush1.msra.mxu0 0.0
    %1396 = vmatprep.subr.mxu0 0.0
    %1397 = vmatpush1.msra.mxu0 0.0
    %1398 = vmatprep.mubr.f32.mxu0 0.0
    %1399 = vmatmul.mubr.f32.gmra.mrb[0].mxu0 %v1332
    %v1400 = vpop.f32.mrb[0].mxu0
    %v1401 = vadd.f32 0.0, %v1400
    %v1402 = vpop.f32.mrb[0].mxu0
    %1403 = vdwg.mxu0
    %1404 = vmatprep.subr.mxu0 0.0
    %1405 = vmatpush1.msra.mxu0 %v838
    %1406 = vmatprep.subr.mxu0 0.0
    %1407 = vmatpush1.msra.mxu0 %v839
    %1408 = vmatprep.subr.mxu0 0.0
    %1409 = vmatpush1.msra.mxu0 %v840
    %1410 = vmatprep.subr.mxu0 0.0
    %1411 = vmatpush1.msra.mxu0 %v841
    %1412 = vmatprep.subr.mxu0 0.0
    %1413 = vmatpush1.msra.mxu0 0.0
    %1414 = vmatprep.subr.mxu0 0.0
    %1415 = vmatpush1.msra.mxu0 0.0
    %1416 = vmatprep.subr.mxu0 0.0
    %1417 = vmatpush1.msra.mxu0 0.0
    %1418 = vmatprep.subr.mxu0 0.0
    %1419 = vmatpush1.msra.mxu0 0.0
    %1420 = vmatprep.subr.mxu0 0.0
    %1421 = vmatpush1.msra.mxu0 0.0
    %1422 = vmatprep.subr.mxu0 0.0
    %1423 = vmatpush1.msra.mxu0 0.0
    %1424 = vmatprep.subr.mxu0 0.0
    %1425 = vmatpush1.msra.mxu0 0.0
    %1426 = vmatprep.subr.mxu0 0.0
    %1427 = vmatpush1.msra.mxu0 0.0
    %1428 = vmatprep.subr.mxu0 0.0
    %1429 = vmatpush1.msra.mxu0 0.0
    %1430 = vmatprep.subr.mxu0 0.0
    %1431 = vmatpush1.msra.mxu0 0.0
    %1432 = vmatprep.subr.mxu0 0.0
    %1433 = vmatpush1.msra.mxu0 0.0
    %1434 = vmatprep.subr.mxu0 0.0
    %1435 = vmatpush1.msra.mxu0 0.0
    %1436 = vmatprep.subr.mxu0 0.0
    %1437 = vmatpush1.msra.mxu0 0.0
    %1438 = vmatprep.subr.mxu0 0.0
    %1439 = vmatpush1.msra.mxu0 0.0
    %1440 = vmatprep.subr.mxu0 0.0
    %1441 = vmatpush1.msra.mxu0 0.0
    %1442 = vmatprep.subr.mxu0 0.0
    %1443 = vmatpush1.msra.mxu0 0.0
    %1444 = vmatprep.subr.mxu0 0.0
    %1445 = vmatpush1.msra.mxu0 0.0
    %1446 = vmatprep.subr.mxu0 0.0
    %1447 = vmatpush1.msra.mxu0 0.0
    %1448 = vmatprep.subr.mxu0 0.0
    %1449 = vmatpush1.msra.mxu0 0.0
    %1450 = vmatprep.subr.mxu0 0.0
    %1451 = vmatpush1.msra.mxu0 0.0
    %1452 = vmatprep.subr.mxu0 0.0
    %1453 = vmatpush1.msra.mxu0 0.0
    %1454 = vmatprep.subr.mxu0 0.0
    %1455 = vmatpush1.msra.mxu0 0.0
    %1456 = vmatprep.subr.mxu0 0.0
    %1457 = vmatpush1.msra.mxu0 0.0
    %1458 = vmatprep.subr.mxu0 0.0
    %1459 = vmatpush1.msra.mxu0 0.0
    %1460 = vmatprep.subr.mxu0 0.0
    %1461 = vmatpush1.msra.mxu0 0.0
    %1462 = vmatprep.subr.mxu0 0.0
    %1463 = vmatpush1.msra.mxu0 0.0
    %1464 = vmatprep.subr.mxu0 0.0
    %1465 = vmatpush1.msra.mxu0 0.0
    %1466 = vmatprep.subr.mxu0 0.0
    %1467 = vmatpush1.msra.mxu0 0.0
    %1468 = vmatprep.mubr.f32.mxu0 0.0
    %1469 = vmatmul.mubr.f32.gmra.mrb[0].mxu0 %v1332
    %v1470 = vpop.f32.mrb[0].mxu0
    %v1471 = vadd.f32 0.0, %v1470
    %v1472 = vpop.f32.mrb[0].mxu0
    %1473 = vdwg.mxu0
    %1474 = vmatprep.subr.mxu0 0.0
    %1475 = vmatpush1.msra.mxu0 %v843
    %1476 = vmatprep.subr.mxu0 0.0
    %1477 = vmatpush1.msra.mxu0 %v844
    %1478 = vmatprep.subr.mxu0 0.0
    %1479 = vmatpush1.msra.mxu0 %v845
    %1480 = vmatprep.subr.mxu0 0.0
    %1481 = vmatpush1.msra.mxu0 %v846
    %1482 = vmatprep.subr.mxu0 0.0
    %1483 = vmatpush1.msra.mxu0 0.0
    %1484 = vmatprep.subr.mxu0 0.0
    %1485 = vmatpush1.msra.mxu0 0.0
    %1486 = vmatprep.subr.mxu0 0.0
    %1487 = vmatpush1.msra.mxu0 0.0
    %1488 = vmatprep.subr.mxu0 0.0
    %1489 = vmatpush1.msra.mxu0 0.0
    %1490 = vmatprep.subr.mxu0 0.0
    %1491 = vmatpush1.msra.mxu0 0.0
    %1492 = vmatprep.subr.mxu0 0.0
    %1493 = vmatpush1.msra.mxu0 0.0
    %1494 = vmatprep.subr.mxu0 0.0
    %1495 = vmatpush1.msra.mxu0 0.0
    %1496 = vmatprep.subr.mxu0 0.0
    %1497 = vmatpush1.msra.mxu0 0.0
    %1498 = vmatprep.subr.mxu0 0.0
    %1499 = vmatpush1.msra.mxu0 0.0
    %1500 = vmatprep.subr.mxu0 0.0
    %1501 = vmatpush1.msra.mxu0 0.0
    %1502 = vmatprep.subr.mxu0 0.0
    %1503 = vmatpush1.msra.mxu0 0.0
    %1504 = vmatprep.subr.mxu0 0.0
    %1505 = vmatpush1.msra.mxu0 0.0
    %1506 = vmatprep.subr.mxu0 0.0
    %1507 = vmatpush1.msra.mxu0 0.0
    %1508 = vmatprep.subr.mxu0 0.0
    %1509 = vmatpush1.msra.mxu0 0.0
    %1510 = vmatprep.subr.mxu0 0.0
    %1511 = vmatpush1.msra.mxu0 0.0
    %1512 = vmatprep.subr.mxu0 0.0
    %1513 = vmatpush1.msra.mxu0 0.0
    %1514 = vmatprep.subr.mxu0 0.0
    %1515 = vmatpush1.msra.mxu0 0.0
    %1516 = vmatprep.subr.mxu0 0.0
    %1517 = vmatpush1.msra.mxu0 0.0
    %1518 = vmatprep.subr.mxu0 0.0
    %1519 = vmatpush1.msra.mxu0 0.0
    %1520 = vmatprep.subr.mxu0 0.0
    %1521 = vmatpush1.msra.mxu0 0.0
    %1522 = vmatprep.subr.mxu0 0.0
    %1523 = vmatpush1.msra.mxu0 0.0
    %1524 = vmatprep.subr.mxu0 0.0
    %1525 = vmatpush1.msra.mxu0 0.0
    %1526 = vmatprep.subr.mxu0 0.0
    %1527 = vmatpush1.msra.mxu0 0.0
    %1528 = vmatprep.subr.mxu0 0.0
    %1529 = vmatpush1.msra.mxu0 0.0
    %1530 = vmatprep.subr.mxu0 0.0
    %1531 = vmatpush1.msra.mxu0 0.0
    %1532 = vmatprep.subr.mxu0 0.0
    %1533 = vmatpush1.msra.mxu0 0.0
    %1534 = vmatprep.subr.mxu0 0.0
    %1535 = vmatpush1.msra.mxu0 0.0
    %1536 = vmatprep.subr.mxu0 0.0
    %1537 = vmatpush1.msra.mxu0 0.0
    %1538 = vmatprep.mubr.f32.mxu0 0.0
    %1539 = vmatmul.mubr.f32.gmra.mrb[0].mxu0 %v1332
    %v1540 = vpop.f32.mrb[0].mxu0
    %v1541 = vadd.f32 %v995, %v1540
    %v1542 = vpop.f32.mrb[0].mxu0
    %1543 = vdwg.mxu0
    %s1544 = scalar_lea.vmem [#allocation2], 16
    %v1545 = vld [vmem:[%s1544] sm:$0xff]
    %v1546 = vadd.f32 %v1545, %v1401
    %v1547 = vxor.u32 %v1546, 2147483648
    %v1548 = vmul.f32 %v1547, 1.442695
    %v1549 = vpow.pop %v1548
    %v1550 = vadd.f32 %v1549, 1.0
    %v1551 = vrcp.pop %v1550
    %v1552 = vmul.f32 1.0, %v1551
    %s1553 = scalar_lea.vmem [#allocation3], 16
    %v1554 = vld [vmem:[%s1553] sm:$0xff]
    %v1555 = vadd.f32 %v1554, %v1471
    %v1556 = vxor.u32 %v1555, 2147483648
    %v1557 = vmul.f32 %v1556, 1.442695
    %v1558 = vpow.pop %v1557
    %v1559 = vadd.f32 %v1558, 1.0
    %v1560 = vrcp.pop %v1559
    %v1561 = vmul.f32 1.0, %v1560
    %s1562 = scalar_lea.vmem [#allocation4], 16
    %v1563 = vld [vmem:[%s1562] sm:$0xff]
    %v1564 = vmul.f32 %v1552, %v1541
    %v1565 = vadd.f32 %v1563, %v1564
    %v1566 = vtanh.pop %v1565
    %v1567 = vsub.f32 1.0, %v1561
    %v1568 = vmul.f32 %v1567, %v1566
    %v1569 = vmul.f32 %v1561, %v1330
    %v1570 = vadd.f32 %v1568, %v1569
    %v1572 = vsel %vm334, %v1570, 0
    %1574 = vmatprep.subr.mxu0 0.0
    %1575 = vmatpush1.msra.mxu0 %v833
    %1576 = vmatprep.subr.mxu0 0.0
    %1577 = vmatpush1.msra.mxu0 %v834
    %1578 = vmatprep.subr.mxu0 0.0
    %1579 = vmatpush1.msra.mxu0 %v835
    %1580 = vmatprep.subr.mxu0 0.0
    %1581 = vmatpush1.msra.mxu0 %v836
    %1582 = vmatprep.subr.mxu0 0.0
    %1583 = vmatpush1.msra.mxu0 0.0
    %1584 = vmatprep.subr.mxu0 0.0
    %1585 = vmatpush1.msra.mxu0 0.0
    %1586 = vmatprep.subr.mxu0 0.0
    %1587 = vmatpush1.msra.mxu0 0.0
    %1588 = vmatprep.subr.mxu0 0.0
    %1589 = vmatpush1.msra.mxu0 0.0
    %1590 = vmatprep.subr.mxu0 0.0
    %1591 = vmatpush1.msra.mxu0 0.0
    %1592 = vmatprep.subr.mxu0 0.0
    %1593 = vmatpush1.msra.mxu0 0.0
    %1594 = vmatprep.subr.mxu0 0.0
    %1595 = vmatpush1.msra.mxu0 0.0
    %1596 = vmatprep.subr.mxu0 0.0
    %1597 = vmatpush1.msra.mxu0 0.0
    %1598 = vmatprep.subr.mxu0 0.0
    %1599 = vmatpush1.msra.mxu0 0.0
    %1600 = vmatprep.subr.mxu0 0.0
    %1601 = vmatpush1.msra.mxu0 0.0
    %1602 = vmatprep.subr.mxu0 0.0
    %1603 = vmatpush1.msra.mxu0 0.0
    %1604 = vmatprep.subr.mxu0 0.0
    %1605 = vmatpush1.msra.mxu0 0.0
    %1606 = vmatprep.subr.mxu0 0.0
    %1607 = vmatpush1.msra.mxu0 0.0
    %1608 = vmatprep.subr.mxu0 0.0
    %1609 = vmatpush1.msra.mxu0 0.0
    %1610 = vmatprep.subr.mxu0 0.0
    %1611 = vmatpush1.msra.mxu0 0.0
    %1612 = vmatprep.subr.mxu0 0.0
    %1613 = vmatpush1.msra.mxu0 0.0
    %1614 = vmatprep.subr.mxu0 0.0
    %1615 = vmatpush1.msra.mxu0 0.0
    %1616 = vmatprep.subr.mxu0 0.0
    %1617 = vmatpush1.msra.mxu0 0.0
    %1618 = vmatprep.subr.mxu0 0.0
    %1619 = vmatpush1.msra.mxu0 0.0
    %1620 = vmatprep.subr.mxu0 0.0
    %1621 = vmatpush1.msra.mxu0 0.0
    %1622 = vmatprep.subr.mxu0 0.0
    %1623 = vmatpush1.msra.mxu0 0.0
    %1624 = vmatprep.subr.mxu0 0.0
    %1625 = vmatpush1.msra.mxu0 0.0
    %1626 = vmatprep.subr.mxu0 0.0
    %1627 = vmatpush1.msra.mxu0 0.0
    %1628 = vmatprep.subr.mxu0 0.0
    %1629 = vmatpush1.msra.mxu0 0.0
    %1630 = vmatprep.subr.mxu0 0.0
    %1631 = vmatpush1.msra.mxu0 0.0
    %1632 = vmatprep.subr.mxu0 0.0
    %1633 = vmatpush1.msra.mxu0 0.0
    %1634 = vmatprep.subr.mxu0 0.0
    %1635 = vmatpush1.msra.mxu0 0.0
    %1636 = vmatprep.subr.mxu0 0.0
    %1637 = vmatpush1.msra.mxu0 0.0
    %1638 = vmatprep.mubr.f32.mxu0 0.0
    %1639 = vmatmul.mubr.f32.gmra.mrb[0].mxu0 %v1572
    %v1640 = vpop.f32.mrb[0].mxu0
    %v1641 = vadd.f32 0.0, %v1640
    %v1642 = vpop.f32.mrb[0].mxu0
    %1643 = vdwg.mxu0
    %1644 = vmatprep.subr.mxu0 0.0
    %1645 = vmatpush1.msra.mxu0 %v838
    %1646 = vmatprep.subr.mxu0 0.0
    %1647 = vmatpush1.msra.mxu0 %v839
    %1648 = vmatprep.subr.mxu0 0.0
    %1649 = vmatpush1.msra.mxu0 %v840
    %1650 = vmatprep.subr.mxu0 0.0
    %1651 = vmatpush1.msra.mxu0 %v841
    %1652 = vmatprep.subr.mxu0 0.0
    %1653 = vmatpush1.msra.mxu0 0.0
    %1654 = vmatprep.subr.mxu0 0.0
    %1655 = vmatpush1.msra.mxu0 0.0
    %1656 = vmatprep.subr.mxu0 0.0
    %1657 = vmatpush1.msra.mxu0 0.0
    %1658 = vmatprep.subr.mxu0 0.0
    %1659 = vmatpush1.msra.mxu0 0.0
    %1660 = vmatprep.subr.mxu0 0.0
    %1661 = vmatpush1.msra.mxu0 0.0
    %1662 = vmatprep.subr.mxu0 0.0
    %1663 = vmatpush1.msra.mxu0 0.0
    %1664 = vmatprep.subr.mxu0 0.0
    %1665 = vmatpush1.msra.mxu0 0.0
    %1666 = vmatprep.subr.mxu0 0.0
    %1667 = vmatpush1.msra.mxu0 0.0
    %1668 = vmatprep.subr.mxu0 0.0
    %1669 = vmatpush1.msra.mxu0 0.0
    %1670 = vmatprep.subr.mxu0 0.0
    %1671 = vmatpush1.msra.mxu0 0.0
    %1672 = vmatprep.subr.mxu0 0.0
    %1673 = vmatpush1.msra.mxu0 0.0
    %1674 = vmatprep.subr.mxu0 0.0
    %1675 = vmatpush1.msra.mxu0 0.0
    %1676 = vmatprep.subr.mxu0 0.0
    %1677 = vmatpush1.msra.mxu0 0.0
    %1678 = vmatprep.subr.mxu0 0.0
    %1679 = vmatpush1.msra.mxu0 0.0
    %1680 = vmatprep.subr.mxu0 0.0
    %1681 = vmatpush1.msra.mxu0 0.0
    %1682 = vmatprep.subr.mxu0 0.0
    %1683 = vmatpush1.msra.mxu0 0.0
    %1684 = vmatprep.subr.mxu0 0.0
    %1685 = vmatpush1.msra.mxu0 0.0
    %1686 = vmatprep.subr.mxu0 0.0
    %1687 = vmatpush1.msra.mxu0 0.0
    %1688 = vmatprep.subr.mxu0 0.0
    %1689 = vmatpush1.msra.mxu0 0.0
    %1690 = vmatprep.subr.mxu0 0.0
    %1691 = vmatpush1.msra.mxu0 0.0
    %1692 = vmatprep.subr.mxu0 0.0
    %1693 = vmatpush1.msra.mxu0 0.0
    %1694 = vmatprep.subr.mxu0 0.0
    %1695 = vmatpush1.msra.mxu0 0.0
    %1696 = vmatprep.subr.mxu0 0.0
    %1697 = vmatpush1.msra.mxu0 0.0
    %1698 = vmatprep.subr.mxu0 0.0
    %1699 = vmatpush1.msra.mxu0 0.0
    %1700 = vmatprep.subr.mxu0 0.0
    %1701 = vmatpush1.msra.mxu0 0.0
    %1702 = vmatprep.subr.mxu0 0.0
    %1703 = vmatpush1.msra.mxu0 0.0
    %1704 = vmatprep.subr.mxu0 0.0
    %1705 = vmatpush1.msra.mxu0 0.0
    %1706 = vmatprep.subr.mxu0 0.0
    %1707 = vmatpush1.msra.mxu0 0.0
    %1708 = vmatprep.mubr.f32.mxu0 0.0
    %1709 = vmatmul.mubr.f32.gmra.mrb[0].mxu0 %v1572
    %v1710 = vpop.f32.mrb[0].mxu0
    %v1711 = vadd.f32 0.0, %v1710
    %v1712 = vpop.f32.mrb[0].mxu0
    %1713 = vdwg.mxu0
    %1714 = vmatprep.subr.mxu0 0.0
    %1715 = vmatpush1.msra.mxu0 %v843
    %1716 = vmatprep.subr.mxu0 0.0
    %1717 = vmatpush1.msra.mxu0 %v844
    %1718 = vmatprep.subr.mxu0 0.0
    %1719 = vmatpush1.msra.mxu0 %v845
    %1720 = vmatprep.subr.mxu0 0.0
    %1721 = vmatpush1.msra.mxu0 %v846
    %1722 = vmatprep.subr.mxu0 0.0
    %1723 = vmatpush1.msra.mxu0 0.0
    %1724 = vmatprep.subr.mxu0 0.0
    %1725 = vmatpush1.msra.mxu0 0.0
    %1726 = vmatprep.subr.mxu0 0.0
    %1727 = vmatpush1.msra.mxu0 0.0
    %1728 = vmatprep.subr.mxu0 0.0
    %1729 = vmatpush1.msra.mxu0 0.0
    %1730 = vmatprep.subr.mxu0 0.0
    %1731 = vmatpush1.msra.mxu0 0.0
    %1732 = vmatprep.subr.mxu0 0.0
    %1733 = vmatpush1.msra.mxu0 0.0
    %1734 = vmatprep.subr.mxu0 0.0
    %1735 = vmatpush1.msra.mxu0 0.0
    %1736 = vmatprep.subr.mxu0 0.0
    %1737 = vmatpush1.msra.mxu0 0.0
    %1738 = vmatprep.subr.mxu0 0.0
    %1739 = vmatpush1.msra.mxu0 0.0
    %1740 = vmatprep.subr.mxu0 0.0
    %1741 = vmatpush1.msra.mxu0 0.0
    %1742 = vmatprep.subr.mxu0 0.0
    %1743 = vmatpush1.msra.mxu0 0.0
    %1744 = vmatprep.subr.mxu0 0.0
    %1745 = vmatpush1.msra.mxu0 0.0
    %1746 = vmatprep.subr.mxu0 0.0
    %1747 = vmatpush1.msra.mxu0 0.0
    %1748 = vmatprep.subr.mxu0 0.0
    %1749 = vmatpush1.msra.mxu0 0.0
    %1750 = vmatprep.subr.mxu0 0.0
    %1751 = vmatpush1.msra.mxu0 0.0
    %1752 = vmatprep.subr.mxu0 0.0
    %1753 = vmatpush1.msra.mxu0 0.0
    %1754 = vmatprep.subr.mxu0 0.0
    %1755 = vmatpush1.msra.mxu0 0.0
    %1756 = vmatprep.subr.mxu0 0.0
    %1757 = vmatpush1.msra.mxu0 0.0
    %1758 = vmatprep.subr.mxu0 0.0
    %1759 = vmatpush1.msra.mxu0 0.0
    %1760 = vmatprep.subr.mxu0 0.0
    %1761 = vmatpush1.msra.mxu0 0.0
    %1762 = vmatprep.subr.mxu0 0.0
    %1763 = vmatpush1.msra.mxu0 0.0
    %1764 = vmatprep.subr.mxu0 0.0
    %1765 = vmatpush1.msra.mxu0 0.0
    %1766 = vmatprep.subr.mxu0 0.0
    %1767 = vmatpush1.msra.mxu0 0.0
    %1768 = vmatprep.subr.mxu0 0.0
    %1769 = vmatpush1.msra.mxu0 0.0
    %1770 = vmatprep.subr.mxu0 0.0
    %1771 = vmatpush1.msra.mxu0 0.0
    %1772 = vmatprep.subr.mxu0 0.0
    %1773 = vmatpush1.msra.mxu0 0.0
    %1774 = vmatprep.subr.mxu0 0.0
    %1775 = vmatpush1.msra.mxu0 0.0
    %1776 = vmatprep.subr.mxu0 0.0
    %1777 = vmatpush1.msra.mxu0 0.0
    %1778 = vmatprep.mubr.f32.mxu0 0.0
    %1779 = vmatmul.mubr.f32.gmra.mrb[0].mxu0 %v1572
    %v1780 = vpop.f32.mrb[0].mxu0
    %v1781 = vadd.f32 %v995, %v1780
    %v1782 = vpop.f32.mrb[0].mxu0
    %1783 = vdwg.mxu0
    %s1784 = scalar_lea.vmem [#allocation2], 24
    %v1785 = vld [vmem:[%s1784] sm:$0xff]
    %v1786 = vadd.f32 %v1785, %v1641
    %v1787 = vxor.u32 %v1786, 2147483648
    %v1788 = vmul.f32 %v1787, 1.442695
    %v1789 = vpow.pop %v1788
    %v1790 = vadd.f32 %v1789, 1.0
    %v1791 = vrcp.pop %v1790
    %v1792 = vmul.f32 1.0, %v1791
    %s1793 = scalar_lea.vmem [#allocation3], 24
    %v1794 = vld [vmem:[%s1793] sm:$0xff]
    %v1795 = vadd.f32 %v1794, %v1711
    %v1796 = vxor.u32 %v1795, 2147483648
    %v1797 = vmul.f32 %v1796, 1.442695
    %v1798 = vpow.pop %v1797
    %v1799 = vadd.f32 %v1798, 1.0
    %v1800 = vrcp.pop %v1799
    %v1801 = vmul.f32 1.0, %v1800
    %s1802 = scalar_lea.vmem [#allocation4], 24
    %v1803 = vld [vmem:[%s1802] sm:$0xff]
    %v1804 = vmul.f32 %v1792, %v1781
    %v1805 = vadd.f32 %v1803, %v1804
    %v1806 = vtanh.pop %v1805
    %v1807 = vsub.f32 1.0, %v1801
    %v1808 = vmul.f32 %v1807, %v1806
    %v1809 = vmul.f32 %v1801, %v1570
    %v1810 = vadd.f32 %v1808, %v1809
    %v1812 = vsel %vm334, %v1810, 0
    %1814 = vmatprep.subr.mxu0 0.0
    %1815 = vmatpush1.msra.mxu0 %v833
    %1816 = vmatprep.subr.mxu0 0.0
    %1817 = vmatpush1.msra.mxu0 %v834
    %1818 = vmatprep.subr.mxu0 0.0
    %1819 = vmatpush1.msra.mxu0 %v835
    %1820 = vmatprep.subr.mxu0 0.0
    %1821 = vmatpush1.msra.mxu0 %v836
    %1822 = vmatprep.subr.mxu0 0.0
    %1823 = vmatpush1.msra.mxu0 0.0
    %1824 = vmatprep.subr.mxu0 0.0
    %1825 = vmatpush1.msra.mxu0 0.0
    %1826 = vmatprep.subr.mxu0 0.0
    %1827 = vmatpush1.msra.mxu0 0.0
    %1828 = vmatprep.subr.mxu0 0.0
    %1829 = vmatpush1.msra.mxu0 0.0
    %1830 = vmatprep.subr.mxu0 0.0
    %1831 = vmatpush1.msra.mxu0 0.0
    %1832 = vmatprep.subr.mxu0 0.0
    %1833 = vmatpush1.msra.mxu0 0.0
    %1834 = vmatprep.subr.mxu0 0.0
    %1835 = vmatpush1.msra.mxu0 0.0
    %1836 = vmatprep.subr.mxu0 0.0
    %1837 = vmatpush1.msra.mxu0 0.0
    %1838 = vmatprep.subr.mxu0 0.0
    %1839 = vmatpush1.msra.mxu0 0.0
    %1840 = vmatprep.subr.mxu0 0.0
    %1841 = vmatpush1.msra.mxu0 0.0
    %1842 = vmatprep.subr.mxu0 0.0
    %1843 = vmatpush1.msra.mxu0 0.0
    %1844 = vmatprep.subr.mxu0 0.0
    %1845 = vmatpush1.msra.mxu0 0.0
    %1846 = vmatprep.subr.mxu0 0.0
    %1847 = vmatpush1.msra.mxu0 0.0
    %1848 = vmatprep.subr.mxu0 0.0
    %1849 = vmatpush1.msra.mxu0 0.0
    %1850 = vmatprep.subr.mxu0 0.0
    %1851 = vmatpush1.msra.mxu0 0.0
    %1852 = vmatprep.subr.mxu0 0.0
    %1853 = vmatpush1.msra.mxu0 0.0
    %1854 = vmatprep.subr.mxu0 0.0
    %1855 = vmatpush1.msra.mxu0 0.0
    %1856 = vmatprep.subr.mxu0 0.0
    %1857 = vmatpush1.msra.mxu0 0.0
    %1858 = vmatprep.subr.mxu0 0.0
    %1859 = vmatpush1.msra.mxu0 0.0
    %1860 = vmatprep.subr.mxu0 0.0
    %1861 = vmatpush1.msra.mxu0 0.0
    %1862 = vmatprep.subr.mxu0 0.0
    %1863 = vmatpush1.msra.mxu0 0.0
    %1864 = vmatprep.subr.mxu0 0.0
    %1865 = vmatpush1.msra.mxu0 0.0
    %1866 = vmatprep.subr.mxu0 0.0
    %1867 = vmatpush1.msra.mxu0 0.0
    %1868 = vmatprep.subr.mxu0 0.0
    %1869 = vmatpush1.msra.mxu0 0.0
    %1870 = vmatprep.subr.mxu0 0.0
    %1871 = vmatpush1.msra.mxu0 0.0
    %1872 = vmatprep.subr.mxu0 0.0
    %1873 = vmatpush1.msra.mxu0 0.0
    %1874 = vmatprep.subr.mxu0 0.0
    %1875 = vmatpush1.msra.mxu0 0.0
    %1876 = vmatprep.subr.mxu0 0.0
    %1877 = vmatpush1.msra.mxu0 0.0
    %1878 = vmatprep.mubr.f32.mxu0 0.0
    %1879 = vmatmul.mubr.f32.gmra.mrb[0].mxu0 %v1812
    %v1880 = vpop.f32.mrb[0].mxu0
    %v1881 = vadd.f32 0.0, %v1880
    %v1882 = vpop.f32.mrb[0].mxu0
    %1883 = vdwg.mxu0
    %1884 = vmatprep.subr.mxu0 0.0
    %1885 = vmatpush1.msra.mxu0 %v838
    %1886 = vmatprep.subr.mxu0 0.0
    %1887 = vmatpush1.msra.mxu0 %v839
    %1888 = vmatprep.subr.mxu0 0.0
    %1889 = vmatpush1.msra.mxu0 %v840
    %1890 = vmatprep.subr.mxu0 0.0
    %1891 = vmatpush1.msra.mxu0 %v841
    %1892 = vmatprep.subr.mxu0 0.0
    %1893 = vmatpush1.msra.mxu0 0.0
    %1894 = vmatprep.subr.mxu0 0.0
    %1895 = vmatpush1.msra.mxu0 0.0
    %1896 = vmatprep.subr.mxu0 0.0
    %1897 = vmatpush1.msra.mxu0 0.0
    %1898 = vmatprep.subr.mxu0 0.0
    %1899 = vmatpush1.msra.mxu0 0.0
    %1900 = vmatprep.subr.mxu0 0.0
    %1901 = vmatpush1.msra.mxu0 0.0
    %1902 = vmatprep.subr.mxu0 0.0
    %1903 = vmatpush1.msra.mxu0 0.0
    %1904 = vmatprep.subr.mxu0 0.0
    %1905 = vmatpush1.msra.mxu0 0.0
    %1906 = vmatprep.subr.mxu0 0.0
    %1907 = vmatpush1.msra.mxu0 0.0
    %1908 = vmatprep.subr.mxu0 0.0
    %1909 = vmatpush1.msra.mxu0 0.0
    %1910 = vmatprep.subr.mxu0 0.0
    %1911 = vmatpush1.msra.mxu0 0.0
    %1912 = vmatprep.subr.mxu0 0.0
    %1913 = vmatpush1.msra.mxu0 0.0
    %1914 = vmatprep.subr.mxu0 0.0
    %1915 = vmatpush1.msra.mxu0 0.0
    %1916 = vmatprep.subr.mxu0 0.0
    %1917 = vmatpush1.msra.mxu0 0.0
    %1918 = vmatprep.subr.mxu0 0.0
    %1919 = vmatpush1.msra.mxu0 0.0
    %1920 = vmatprep.subr.mxu0 0.0
    %1921 = vmatpush1.msra.mxu0 0.0
    %1922 = vmatprep.subr.mxu0 0.0
    %1923 = vmatpush1.msra.mxu0 0.0
    %1924 = vmatprep.subr.mxu0 0.0
    %1925 = vmatpush1.msra.mxu0 0.0
    %1926 = vmatprep.subr.mxu0 0.0
    %1927 = vmatpush1.msra.mxu0 0.0
    %1928 = vmatprep.subr.mxu0 0.0
    %1929 = vmatpush1.msra.mxu0 0.0
    %1930 = vmatprep.subr.mxu0 0.0
    %1931 = vmatpush1.msra.mxu0 0.0
    %1932 = vmatprep.subr.mxu0 0.0
    %1933 = vmatpush1.msra.mxu0 0.0
    %1934 = vmatprep.subr.mxu0 0.0
    %1935 = vmatpush1.msra.mxu0 0.0
    %1936 = vmatprep.subr.mxu0 0.0
    %1937 = vmatpush1.msra.mxu0 0.0
    %1938 = vmatprep.subr.mxu0 0.0
    %1939 = vmatpush1.msra.mxu0 0.0
    %1940 = vmatprep.subr.mxu0 0.0
    %1941 = vmatpush1.msra.mxu0 0.0
    %1942 = vmatprep.subr.mxu0 0.0
    %1943 = vmatpush1.msra.mxu0 0.0
    %1944 = vmatprep.subr.mxu0 0.0
    %1945 = vmatpush1.msra.mxu0 0.0
    %1946 = vmatprep.subr.mxu0 0.0
    %1947 = vmatpush1.msra.mxu0 0.0
    %1948 = vmatprep.mubr.f32.mxu0 0.0
    %1949 = vmatmul.mubr.f32.gmra.mrb[0].mxu0 %v1812
    %v1950 = vpop.f32.mrb[0].mxu0
    %v1951 = vadd.f32 0.0, %v1950
    %v1952 = vpop.f32.mrb[0].mxu0
    %1953 = vdwg.mxu0
    %1954 = vmatprep.subr.mxu0 0.0
    %1955 = vmatpush1.msra.mxu0 %v843
    %1956 = vmatprep.subr.mxu0 0.0
    %1957 = vmatpush1.msra.mxu0 %v844
    %1958 = vmatprep.subr.mxu0 0.0
    %1959 = vmatpush1.msra.mxu0 %v845
    %1960 = vmatprep.subr.mxu0 0.0
    %1961 = vmatpush1.msra.mxu0 %v846
    %1962 = vmatprep.subr.mxu0 0.0
    %1963 = vmatpush1.msra.mxu0 0.0
    %1964 = vmatprep.subr.mxu0 0.0
    %1965 = vmatpush1.msra.mxu0 0.0
    %1966 = vmatprep.subr.mxu0 0.0
    %1967 = vmatpush1.msra.mxu0 0.0
    %1968 = vmatprep.subr.mxu0 0.0
    %1969 = vmatpush1.msra.mxu0 0.0
    %1970 = vmatprep.subr.mxu0 0.0
    %1971 = vmatpush1.msra.mxu0 0.0
    %1972 = vmatprep.subr.mxu0 0.0
    %1973 = vmatpush1.msra.mxu0 0.0
    %1974 = vmatprep.subr.mxu0 0.0
    %1975 = vmatpush1.msra.mxu0 0.0
    %1976 = vmatprep.subr.mxu0 0.0
    %1977 = vmatpush1.msra.mxu0 0.0
    %1978 = vmatprep.subr.mxu0 0.0
    %1979 = vmatpush1.msra.mxu0 0.0
    %1980 = vmatprep.subr.mxu0 0.0
    %1981 = vmatpush1.msra.mxu0 0.0
    %1982 = vmatprep.subr.mxu0 0.0
    %1983 = vmatpush1.msra.mxu0 0.0
    %1984 = vmatprep.subr.mxu0 0.0
    %1985 = vmatpush1.msra.mxu0 0.0
    %1986 = vmatprep.subr.mxu0 0.0
    %1987 = vmatpush1.msra.mxu0 0.0
    %1988 = vmatprep.subr.mxu0 0.0
    %1989 = vmatpush1.msra.mxu0 0.0
    %1990 = vmatprep.subr.mxu0 0.0
    %1991 = vmatpush1.msra.mxu0 0.0
    %1992 = vmatprep.subr.mxu0 0.0
    %1993 = vmatpush1.msra.mxu0 0.0
    %1994 = vmatprep.subr.mxu0 0.0
    %1995 = vmatpush1.msra.mxu0 0.0
    %1996 = vmatprep.subr.mxu0 0.0
    %1997 = vmatpush1.msra.mxu0 0.0
    %1998 = vmatprep.subr.mxu0 0.0
    %1999 = vmatpush1.msra.mxu0 0.0
    %2000 = vmatprep.subr.mxu0 0.0
    %2001 = vmatpush1.msra.mxu0 0.0
    %2002 = vmatprep.subr.mxu0 0.0
    %2003 = vmatpush1.msra.mxu0 0.0
    %2004 = vmatprep.subr.mxu0 0.0
    %2005 = vmatpush1.msra.mxu0 0.0
    %2006 = vmatprep.subr.mxu0 0.0
    %2007 = vmatpush1.msra.mxu0 0.0
    %2008 = vmatprep.subr.mxu0 0.0
    %2009 = vmatpush1.msra.mxu0 0.0
    %2010 = vmatprep.subr.mxu0 0.0
    %2011 = vmatpush1.msra.mxu0 0.0
    %2012 = vmatprep.subr.mxu0 0.0
    %2013 = vmatpush1.msra.mxu0 0.0
    %2014 = vmatprep.subr.mxu0 0.0
    %2015 = vmatpush1.msra.mxu0 0.0
    %2016 = vmatprep.subr.mxu0 0.0
    %2017 = vmatpush1.msra.mxu0 0.0
    %2018 = vmatprep.mubr.f32.mxu0 0.0
    %2019 = vmatmul.mubr.f32.gmra.mrb[0].mxu0 %v1812
    %v2020 = vpop.f32.mrb[0].mxu0
    %v2021 = vadd.f32 %v995, %v2020
    %v2022 = vpop.f32.mrb[0].mxu0
    %2023 = vdwg.mxu0
    %s2024 = scalar_lea.vmem [#allocation2], 32
    %v2025 = vld [vmem:[%s2024] sm:$0xff]
    %v2026 = vadd.f32 %v2025, %v1881
    %v2027 = vxor.u32 %v2026, 2147483648
    %v2028 = vmul.f32 %v2027, 1.442695
    %v2029 = vpow.pop %v2028
    %v2030 = vadd.f32 %v2029, 1.0
    %v2031 = vrcp.pop %v2030
    %v2032 = vmul.f32 1.0, %v2031
    %s2033 = scalar_lea.vmem [#allocation3], 32
    %v2034 = vld [vmem:[%s2033] sm:$0xff]
    %v2035 = vadd.f32 %v2034, %v1951
    %v2036 = vxor.u32 %v2035, 2147483648
    %v2037 = vmul.f32 %v2036, 1.442695
    %v2038 = vpow.pop %v2037
    %v2039 = vadd.f32 %v2038, 1.0
    %v2040 = vrcp.pop %v2039
    %v2041 = vmul.f32 1.0, %v2040
    %s2042 = scalar_lea.vmem [#allocation4], 32
    %v2043 = vld [vmem:[%s2042] sm:$0xff]
    %v2044 = vmul.f32 %v2032, %v2021
    %v2045 = vadd.f32 %v2043, %v2044
    %v2046 = vtanh.pop %v2045
    %v2047 = vsub.f32 1.0, %v2041
    %v2048 = vmul.f32 %v2047, %v2046
    %v2049 = vmul.f32 %v2041, %v1810
    %v2050 = vadd.f32 %v2048, %v2049
    %v2052 = vsel %vm334, %v2050, 0
    %2054 = vmatprep.subr.mxu0 0.0
    %2055 = vmatpush1.msra.mxu0 %v833
    %2056 = vmatprep.subr.mxu0 0.0
    %2057 = vmatpush1.msra.mxu0 %v834
    %2058 = vmatprep.subr.mxu0 0.0
    %2059 = vmatpush1.msra.mxu0 %v835
    %2060 = vmatprep.subr.mxu0 0.0
    %2061 = vmatpush1.msra.mxu0 %v836
    %2062 = vmatprep.subr.mxu0 0.0
    %2063 = vmatpush1.msra.mxu0 0.0
    %2064 = vmatprep.subr.mxu0 0.0
    %2065 = vmatpush1.msra.mxu0 0.0
    %2066 = vmatprep.subr.mxu0 0.0
    %2067 = vmatpush1.msra.mxu0 0.0
    %2068 = vmatprep.subr.mxu0 0.0
    %2069 = vmatpush1.msra.mxu0 0.0
    %2070 = vmatprep.subr.mxu0 0.0
    %2071 = vmatpush1.msra.mxu0 0.0
    %2072 = vmatprep.subr.mxu0 0.0
    %2073 = vmatpush1.msra.mxu0 0.0
    %2074 = vmatprep.subr.mxu0 0.0
    %2075 = vmatpush1.msra.mxu0 0.0
    %2076 = vmatprep.subr.mxu0 0.0
    %2077 = vmatpush1.msra.mxu0 0.0
    %2078 = vmatprep.subr.mxu0 0.0
    %2079 = vmatpush1.msra.mxu0 0.0
    %2080 = vmatprep.subr.mxu0 0.0
    %2081 = vmatpush1.msra.mxu0 0.0
    %2082 = vmatprep.subr.mxu0 0.0
    %2083 = vmatpush1.msra.mxu0 0.0
    %2084 = vmatprep.subr.mxu0 0.0
    %2085 = vmatpush1.msra.mxu0 0.0
    %2086 = vmatprep.subr.mxu0 0.0
    %2087 = vmatpush1.msra.mxu0 0.0
    %2088 = vmatprep.subr.mxu0 0.0
    %2089 = vmatpush1.msra.mxu0 0.0
    %2090 = vmatprep.subr.mxu0 0.0
    %2091 = vmatpush1.msra.mxu0 0.0
    %2092 = vmatprep.subr.mxu0 0.0
    %2093 = vmatpush1.msra.mxu0 0.0
    %2094 = vmatprep.subr.mxu0 0.0
    %2095 = vmatpush1.msra.mxu0 0.0
    %2096 = vmatprep.subr.mxu0 0.0
    %2097 = vmatpush1.msra.mxu0 0.0
    %2098 = vmatprep.subr.mxu0 0.0
    %2099 = vmatpush1.msra.mxu0 0.0
    %2100 = vmatprep.subr.mxu0 0.0
    %2101 = vmatpush1.msra.mxu0 0.0
    %2102 = vmatprep.subr.mxu0 0.0
    %2103 = vmatpush1.msra.mxu0 0.0
    %2104 = vmatprep.subr.mxu0 0.0
    %2105 = vmatpush1.msra.mxu0 0.0
    %2106 = vmatprep.subr.mxu0 0.0
    %2107 = vmatpush1.msra.mxu0 0.0
    %2108 = vmatprep.subr.mxu0 0.0
    %2109 = vmatpush1.msra.mxu0 0.0
    %2110 = vmatprep.subr.mxu0 0.0
    %2111 = vmatpush1.msra.mxu0 0.0
    %2112 = vmatprep.subr.mxu0 0.0
    %2113 = vmatpush1.msra.mxu0 0.0
    %2114 = vmatprep.subr.mxu0 0.0
    %2115 = vmatpush1.msra.mxu0 0.0
    %2116 = vmatprep.subr.mxu0 0.0
    %2117 = vmatpush1.msra.mxu0 0.0
    %2118 = vmatprep.mubr.f32.mxu0 0.0
    %2119 = vmatmul.mubr.f32.gmra.mrb[0].mxu0 %v2052
    %v2120 = vpop.f32.mrb[0].mxu0
    %v2121 = vadd.f32 0.0, %v2120
    %v2122 = vpop.f32.mrb[0].mxu0
    %2123 = vdwg.mxu0
    %2124 = vmatprep.subr.mxu0 0.0
    %2125 = vmatpush1.msra.mxu0 %v838
    %2126 = vmatprep.subr.mxu0 0.0
    %2127 = vmatpush1.msra.mxu0 %v839
    %2128 = vmatprep.subr.mxu0 0.0
    %2129 = vmatpush1.msra.mxu0 %v840
    %2130 = vmatprep.subr.mxu0 0.0
    %2131 = vmatpush1.msra.mxu0 %v841
    %2132 = vmatprep.subr.mxu0 0.0
    %2133 = vmatpush1.msra.mxu0 0.0
    %2134 = vmatprep.subr.mxu0 0.0
    %2135 = vmatpush1.msra.mxu0 0.0
    %2136 = vmatprep.subr.mxu0 0.0
    %2137 = vmatpush1.msra.mxu0 0.0
    %2138 = vmatprep.subr.mxu0 0.0
    %2139 = vmatpush1.msra.mxu0 0.0
    %2140 = vmatprep.subr.mxu0 0.0
    %2141 = vmatpush1.msra.mxu0 0.0
    %2142 = vmatprep.subr.mxu0 0.0
    %2143 = vmatpush1.msra.mxu0 0.0
    %2144 = vmatprep.subr.mxu0 0.0
    %2145 = vmatpush1.msra.mxu0 0.0
    %2146 = vmatprep.subr.mxu0 0.0
    %2147 = vmatpush1.msra.mxu0 0.0
    %2148 = vmatprep.subr.mxu0 0.0
    %2149 = vmatpush1.msra.mxu0 0.0
    %2150 = vmatprep.subr.mxu0 0.0
    %2151 = vmatpush1.msra.mxu0 0.0
    %2152 = vmatprep.subr.mxu0 0.0
    %2153 = vmatpush1.msra.mxu0 0.0
    %2154 = vmatprep.subr.mxu0 0.0
    %2155 = vmatpush1.msra.mxu0 0.0
    %2156 = vmatprep.subr.mxu0 0.0
    %2157 = vmatpush1.msra.mxu0 0.0
    %2158 = vmatprep.subr.mxu0 0.0
    %2159 = vmatpush1.msra.mxu0 0.0
    %2160 = vmatprep.subr.mxu0 0.0
    %2161 = vmatpush1.msra.mxu0 0.0
    %2162 = vmatprep.subr.mxu0 0.0
    %2163 = vmatpush1.msra.mxu0 0.0
    %2164 = vmatprep.subr.mxu0 0.0
    %2165 = vmatpush1.msra.mxu0 0.0
    %2166 = vmatprep.subr.mxu0 0.0
    %2167 = vmatpush1.msra.mxu0 0.0
    %2168 = vmatprep.subr.mxu0 0.0
    %2169 = vmatpush1.msra.mxu0 0.0
    %2170 = vmatprep.subr.mxu0 0.0
    %2171 = vmatpush1.msra.mxu0 0.0
    %2172 = vmatprep.subr.mxu0 0.0
    %2173 = vmatpush1.msra.mxu0 0.0
    %2174 = vmatprep.subr.mxu0 0.0
    %2175 = vmatpush1.msra.mxu0 0.0
    %2176 = vmatprep.subr.mxu0 0.0
    %2177 = vmatpush1.msra.mxu0 0.0
    %2178 = vmatprep.subr.mxu0 0.0
    %2179 = vmatpush1.msra.mxu0 0.0
    %2180 = vmatprep.subr.mxu0 0.0
    %2181 = vmatpush1.msra.mxu0 0.0
    %2182 = vmatprep.subr.mxu0 0.0
    %2183 = vmatpush1.msra.mxu0 0.0
    %2184 = vmatprep.subr.mxu0 0.0
    %2185 = vmatpush1.msra.mxu0 0.0
    %2186 = vmatprep.subr.mxu0 0.0
    %2187 = vmatpush1.msra.mxu0 0.0
    %2188 = vmatprep.mubr.f32.mxu0 0.0
    %2189 = vmatmul.mubr.f32.gmra.mrb[0].mxu0 %v2052
    %v2190 = vpop.f32.mrb[0].mxu0
    %v2191 = vadd.f32 0.0, %v2190
    %v2192 = vpop.f32.mrb[0].mxu0
    %2193 = vdwg.mxu0
    %2194 = vmatprep.subr.mxu0 0.0
    %2195 = vmatpush1.msra.mxu0 %v843
    %2196 = vmatprep.subr.mxu0 0.0
    %2197 = vmatpush1.msra.mxu0 %v844
    %2198 = vmatprep.subr.mxu0 0.0
    %2199 = vmatpush1.msra.mxu0 %v845
    %2200 = vmatprep.subr.mxu0 0.0
    %2201 = vmatpush1.msra.mxu0 %v846
    %2202 = vmatprep.subr.mxu0 0.0
    %2203 = vmatpush1.msra.mxu0 0.0
    %2204 = vmatprep.subr.mxu0 0.0
    %2205 = vmatpush1.msra.mxu0 0.0
    %2206 = vmatprep.subr.mxu0 0.0
    %2207 = vmatpush1.msra.mxu0 0.0
    %2208 = vmatprep.subr.mxu0 0.0
    %2209 = vmatpush1.msra.mxu0 0.0
    %2210 = vmatprep.subr.mxu0 0.0
    %2211 = vmatpush1.msra.mxu0 0.0
    %2212 = vmatprep.subr.mxu0 0.0
    %2213 = vmatpush1.msra.mxu0 0.0
    %2214 = vmatprep.subr.mxu0 0.0
    %2215 = vmatpush1.msra.mxu0 0.0
    %2216 = vmatprep.subr.mxu0 0.0
    %2217 = vmatpush1.msra.mxu0 0.0
    %2218 = vmatprep.subr.mxu0 0.0
    %2219 = vmatpush1.msra.mxu0 0.0
    %2220 = vmatprep.subr.mxu0 0.0
    %2221 = vmatpush1.msra.mxu0 0.0
    %2222 = vmatprep.subr.mxu0 0.0
    %2223 = vmatpush1.msra.mxu0 0.0
    %2224 = vmatprep.subr.mxu0 0.0
    %2225 = vmatpush1.msra.mxu0 0.0
    %2226 = vmatprep.subr.mxu0 0.0
    %2227 = vmatpush1.msra.mxu0 0.0
    %2228 = vmatprep.subr.mxu0 0.0
    %2229 = vmatpush1.msra.mxu0 0.0
    %2230 = vmatprep.subr.mxu0 0.0
    %2231 = vmatpush1.msra.mxu0 0.0
    %2232 = vmatprep.subr.mxu0 0.0
    %2233 = vmatpush1.msra.mxu0 0.0
    %2234 = vmatprep.subr.mxu0 0.0
    %2235 = vmatpush1.msra.mxu0 0.0
    %2236 = vmatprep.subr.mxu0 0.0
    %2237 = vmatpush1.msra.mxu0 0.0
    %2238 = vmatprep.subr.mxu0 0.0
    %2239 = vmatpush1.msra.mxu0 0.0
    %2240 = vmatprep.subr.mxu0 0.0
    %2241 = vmatpush1.msra.mxu0 0.0
    %2242 = vmatprep.subr.mxu0 0.0
    %2243 = vmatpush1.msra.mxu0 0.0
    %2244 = vmatprep.subr.mxu0 0.0
    %2245 = vmatpush1.msra.mxu0 0.0
    %2246 = vmatprep.subr.mxu0 0.0
    %2247 = vmatpush1.msra.mxu0 0.0
    %2248 = vmatprep.subr.mxu0 0.0
    %2249 = vmatpush1.msra.mxu0 0.0
    %2250 = vmatprep.subr.mxu0 0.0
    %2251 = vmatpush1.msra.mxu0 0.0
    %2252 = vmatprep.subr.mxu0 0.0
    %2253 = vmatpush1.msra.mxu0 0.0
    %2254 = vmatprep.subr.mxu0 0.0
    %2255 = vmatpush1.msra.mxu0 0.0
    %2256 = vmatprep.subr.mxu0 0.0
    %2257 = vmatpush1.msra.mxu0 0.0
    %2258 = vmatprep.mubr.f32.mxu0 0.0
    %2259 = vmatmul.mubr.f32.gmra.mrb[0].mxu0 %v2052
    %v2260 = vpop.f32.mrb[0].mxu0
    %v2261 = vadd.f32 %v995, %v2260
    %v2262 = vpop.f32.mrb[0].mxu0
    %2263 = vdwg.mxu0
    %s2264 = scalar_lea.vmem [#allocation2], 40
    %v2265 = vld [vmem:[%s2264] sm:$0xff]
    %v2266 = vadd.f32 %v2265, %v2121
    %v2267 = vxor.u32 %v2266, 2147483648
    %v2268 = vmul.f32 %v2267, 1.442695
    %v2269 = vpow.pop %v2268
    %v2270 = vadd.f32 %v2269, 1.0
    %v2271 = vrcp.pop %v2270
    %v2272 = vmul.f32 1.0, %v2271
    %s2273 = scalar_lea.vmem [#allocation3], 40
    %v2274 = vld [vmem:[%s2273] sm:$0xff]
    %v2275 = vadd.f32 %v2274, %v2191
    %v2276 = vxor.u32 %v2275, 2147483648
    %v2277 = vmul.f32 %v2276, 1.442695
    %v2278 = vpow.pop %v2277
    %v2279 = vadd.f32 %v2278, 1.0
    %v2280 = vrcp.pop %v2279
    %v2281 = vmul.f32 1.0, %v2280
    %s2282 = scalar_lea.vmem [#allocation4], 40
    %v2283 = vld [vmem:[%s2282] sm:$0xff]
    %v2284 = vmul.f32 %v2272, %v2261
    %v2285 = vadd.f32 %v2283, %v2284
    %v2286 = vtanh.pop %v2285
    %v2287 = vsub.f32 1.0, %v2281
    %v2288 = vmul.f32 %v2287, %v2286
    %v2289 = vmul.f32 %v2281, %v2050
    %v2290 = vadd.f32 %v2288, %v2289
    %v2292 = vsel %vm334, %v2290, 0
    %2294 = vmatprep.subr.mxu0 0.0
    %2295 = vmatpush1.msra.mxu0 %v833
    %2296 = vmatprep.subr.mxu0 0.0
    %2297 = vmatpush1.msra.mxu0 %v834
    %2298 = vmatprep.subr.mxu0 0.0
    %2299 = vmatpush1.msra.mxu0 %v835
    %2300 = vmatprep.subr.mxu0 0.0
    %2301 = vmatpush1.msra.mxu0 %v836
    %2302 = vmatprep.subr.mxu0 0.0
    %2303 = vmatpush1.msra.mxu0 0.0
    %2304 = vmatprep.subr.mxu0 0.0
    %2305 = vmatpush1.msra.mxu0 0.0
    %2306 = vmatprep.subr.mxu0 0.0
    %2307 = vmatpush1.msra.mxu0 0.0
    %2308 = vmatprep.subr.mxu0 0.0
    %2309 = vmatpush1.msra.mxu0 0.0
    %2310 = vmatprep.subr.mxu0 0.0
    %2311 = vmatpush1.msra.mxu0 0.0
    %2312 = vmatprep.subr.mxu0 0.0
    %2313 = vmatpush1.msra.mxu0 0.0
    %2314 = vmatprep.subr.mxu0 0.0
    %2315 = vmatpush1.msra.mxu0 0.0
    %2316 = vmatprep.subr.mxu0 0.0
    %2317 = vmatpush1.msra.mxu0 0.0
    %2318 = vmatprep.subr.mxu0 0.0
    %2319 = vmatpush1.msra.mxu0 0.0
    %2320 = vmatprep.subr.mxu0 0.0
    %2321 = vmatpush1.msra.mxu0 0.0
    %2322 = vmatprep.subr.mxu0 0.0
    %2323 = vmatpush1.msra.mxu0 0.0
    %2324 = vmatprep.subr.mxu0 0.0
    %2325 = vmatpush1.msra.mxu0 0.0
    %2326 = vmatprep.subr.mxu0 0.0
    %2327 = vmatpush1.msra.mxu0 0.0
    %2328 = vmatprep.subr.mxu0 0.0
    %2329 = vmatpush1.msra.mxu0 0.0
    %2330 = vmatprep.subr.mxu0 0.0
    %2331 = vmatpush1.msra.mxu0 0.0
    %2332 = vmatprep.subr.mxu0 0.0
    %2333 = vmatpush1.msra.mxu0 0.0
    %2334 = vmatprep.subr.mxu0 0.0
    %2335 = vmatpush1.msra.mxu0 0.0
    %2336 = vmatprep.subr.mxu0 0.0
    %2337 = vmatpush1.msra.mxu0 0.0
    %2338 = vmatprep.subr.mxu0 0.0
    %2339 = vmatpush1.msra.mxu0 0.0
    %2340 = vmatprep.subr.mxu0 0.0
    %2341 = vmatpush1.msra.mxu0 0.0
    %2342 = vmatprep.subr.mxu0 0.0
    %2343 = vmatpush1.msra.mxu0 0.0
    %2344 = vmatprep.subr.mxu0 0.0
    %2345 = vmatpush1.msra.mxu0 0.0
    %2346 = vmatprep.subr.mxu0 0.0
    %2347 = vmatpush1.msra.mxu0 0.0
    %2348 = vmatprep.subr.mxu0 0.0
    %2349 = vmatpush1.msra.mxu0 0.0
    %2350 = vmatprep.subr.mxu0 0.0
    %2351 = vmatpush1.msra.mxu0 0.0
    %2352 = vmatprep.subr.mxu0 0.0
    %2353 = vmatpush1.msra.mxu0 0.0
    %2354 = vmatprep.subr.mxu0 0.0
    %2355 = vmatpush1.msra.mxu0 0.0
    %2356 = vmatprep.subr.mxu0 0.0
    %2357 = vmatpush1.msra.mxu0 0.0
    %2358 = vmatprep.mubr.f32.mxu0 0.0
    %2359 = vmatmul.mubr.f32.gmra.mrb[0].mxu0 %v2292
    %v2360 = vpop.f32.mrb[0].mxu0
    %v2361 = vadd.f32 0.0, %v2360
    %v2362 = vpop.f32.mrb[0].mxu0
    %2363 = vdwg.mxu0
    %2364 = vmatprep.subr.mxu0 0.0
    %2365 = vmatpush1.msra.mxu0 %v838
    %2366 = vmatprep.subr.mxu0 0.0
    %2367 = vmatpush1.msra.mxu0 %v839
    %2368 = vmatprep.subr.mxu0 0.0
    %2369 = vmatpush1.msra.mxu0 %v840
    %2370 = vmatprep.subr.mxu0 0.0
    %2371 = vmatpush1.msra.mxu0 %v841
    %2372 = vmatprep.subr.mxu0 0.0
    %2373 = vmatpush1.msra.mxu0 0.0
    %2374 = vmatprep.subr.mxu0 0.0
    %2375 = vmatpush1.msra.mxu0 0.0
    %2376 = vmatprep.subr.mxu0 0.0
    %2377 = vmatpush1.msra.mxu0 0.0
    %2378 = vmatprep.subr.mxu0 0.0
    %2379 = vmatpush1.msra.mxu0 0.0
    %2380 = vmatprep.subr.mxu0 0.0
    %2381 = vmatpush1.msra.mxu0 0.0
    %2382 = vmatprep.subr.mxu0 0.0
    %2383 = vmatpush1.msra.mxu0 0.0
    %2384 = vmatprep.subr.mxu0 0.0
    %2385 = vmatpush1.msra.mxu0 0.0
    %2386 = vmatprep.subr.mxu0 0.0
    %2387 = vmatpush1.msra.mxu0 0.0
    %2388 = vmatprep.subr.mxu0 0.0
    %2389 = vmatpush1.msra.mxu0 0.0
    %2390 = vmatprep.subr.mxu0 0.0
    %2391 = vmatpush1.msra.mxu0 0.0
    %2392 = vmatprep.subr.mxu0 0.0
    %2393 = vmatpush1.msra.mxu0 0.0
    %2394 = vmatprep.subr.mxu0 0.0
    %2395 = vmatpush1.msra.mxu0 0.0
    %2396 = vmatprep.subr.mxu0 0.0
    %2397 = vmatpush1.msra.mxu0 0.0
    %2398 = vmatprep.subr.mxu0 0.0
    %2399 = vmatpush1.msra.mxu0 0.0
    %2400 = vmatprep.subr.mxu0 0.0
    %2401 = vmatpush1.msra.mxu0 0.0
    %2402 = vmatprep.subr.mxu0 0.0
    %2403 = vmatpush1.msra.mxu0 0.0
    %2404 = vmatprep.subr.mxu0 0.0
    %2405 = vmatpush1.msra.mxu0 0.0
    %2406 = vmatprep.subr.mxu0 0.0
    %2407 = vmatpush1.msra.mxu0 0.0
    %2408 = vmatprep.subr.mxu0 0.0
    %2409 = vmatpush1.msra.mxu0 0.0
    %2410 = vmatprep.subr.mxu0 0.0
    %2411 = vmatpush1.msra.mxu0 0.0
    %2412 = vmatprep.subr.mxu0 0.0
    %2413 = vmatpush1.msra.mxu0 0.0
    %2414 = vmatprep.subr.mxu0 0.0
    %2415 = vmatpush1.msra.mxu0 0.0
    %2416 = vmatprep.subr.mxu0 0.0
    %2417 = vmatpush1.msra.mxu0 0.0
    %2418 = vmatprep.subr.mxu0 0.0
    %2419 = vmatpush1.msra.mxu0 0.0
    %2420 = vmatprep.subr.mxu0 0.0
    %2421 = vmatpush1.msra.mxu0 0.0
    %2422 = vmatprep.subr.mxu0 0.0
    %2423 = vmatpush1.msra.mxu0 0.0
    %2424 = vmatprep.subr.mxu0 0.0
    %2425 = vmatpush1.msra.mxu0 0.0
    %2426 = vmatprep.subr.mxu0 0.0
    %2427 = vmatpush1.msra.mxu0 0.0
    %2428 = vmatprep.mubr.f32.mxu0 0.0
    %2429 = vmatmul.mubr.f32.gmra.mrb[0].mxu0 %v2292
    %v2430 = vpop.f32.mrb[0].mxu0
    %v2431 = vadd.f32 0.0, %v2430
    %v2432 = vpop.f32.mrb[0].mxu0
    %2433 = vdwg.mxu0
    %2434 = vmatprep.subr.mxu0 0.0
    %2435 = vmatpush1.msra.mxu0 %v843
    %2436 = vmatprep.subr.mxu0 0.0
    %2437 = vmatpush1.msra.mxu0 %v844
    %2438 = vmatprep.subr.mxu0 0.0
    %2439 = vmatpush1.msra.mxu0 %v845
    %2440 = vmatprep.subr.mxu0 0.0
    %2441 = vmatpush1.msra.mxu0 %v846
    %2442 = vmatprep.subr.mxu0 0.0
    %2443 = vmatpush1.msra.mxu0 0.0
    %2444 = vmatprep.subr.mxu0 0.0
    %2445 = vmatpush1.msra.mxu0 0.0
    %2446 = vmatprep.subr.mxu0 0.0
    %2447 = vmatpush1.msra.mxu0 0.0
    %2448 = vmatprep.subr.mxu0 0.0
    %2449 = vmatpush1.msra.mxu0 0.0
    %2450 = vmatprep.subr.mxu0 0.0
    %2451 = vmatpush1.msra.mxu0 0.0
    %2452 = vmatprep.subr.mxu0 0.0
    %2453 = vmatpush1.msra.mxu0 0.0
    %2454 = vmatprep.subr.mxu0 0.0
    %2455 = vmatpush1.msra.mxu0 0.0
    %2456 = vmatprep.subr.mxu0 0.0
    %2457 = vmatpush1.msra.mxu0 0.0
    %2458 = vmatprep.subr.mxu0 0.0
    %2459 = vmatpush1.msra.mxu0 0.0
    %2460 = vmatprep.subr.mxu0 0.0
    %2461 = vmatpush1.msra.mxu0 0.0
    %2462 = vmatprep.subr.mxu0 0.0
    %2463 = vmatpush1.msra.mxu0 0.0
    %2464 = vmatprep.subr.mxu0 0.0
    %2465 = vmatpush1.msra.mxu0 0.0
    %2466 = vmatprep.subr.mxu0 0.0
    %2467 = vmatpush1.msra.mxu0 0.0
    %2468 = vmatprep.subr.mxu0 0.0
    %2469 = vmatpush1.msra.mxu0 0.0
    %2470 = vmatprep.subr.mxu0 0.0
    %2471 = vmatpush1.msra.mxu0 0.0
    %2472 = vmatprep.subr.mxu0 0.0
    %2473 = vmatpush1.msra.mxu0 0.0
    %2474 = vmatprep.subr.mxu0 0.0
    %2475 = vmatpush1.msra.mxu0 0.0
    %2476 = vmatprep.subr.mxu0 0.0
    %2477 = vmatpush1.msra.mxu0 0.0
    %2478 = vmatprep.subr.mxu0 0.0
    %2479 = vmatpush1.msra.mxu0 0.0
    %2480 = vmatprep.subr.mxu0 0.0
    %2481 = vmatpush1.msra.mxu0 0.0
    %2482 = vmatprep.subr.mxu0 0.0
    %2483 = vmatpush1.msra.mxu0 0.0
    %2484 = vmatprep.subr.mxu0 0.0
    %2485 = vmatpush1.msra.mxu0 0.0
    %2486 = vmatprep.subr.mxu0 0.0
    %2487 = vmatpush1.msra.mxu0 0.0
    %2488 = vmatprep.subr.mxu0 0.0
    %2489 = vmatpush1.msra.mxu0 0.0
    %2490 = vmatprep.subr.mxu0 0.0
    %2491 = vmatpush1.msra.mxu0 0.0
    %2492 = vmatprep.subr.mxu0 0.0
    %2493 = vmatpush1.msra.mxu0 0.0
    %2494 = vmatprep.subr.mxu0 0.0
    %2495 = vmatpush1.msra.mxu0 0.0
    %2496 = vmatprep.subr.mxu0 0.0
    %2497 = vmatpush1.msra.mxu0 0.0
    %2498 = vmatprep.mubr.f32.mxu0 0.0
    %2499 = vmatmul.mubr.f32.gmra.mrb[0].mxu0 %v2292
    %v2500 = vpop.f32.mrb[0].mxu0
    %v2501 = vadd.f32 %v995, %v2500
    %v2502 = vpop.f32.mrb[0].mxu0
    %2503 = vdwg.mxu0
    %s2504 = scalar_lea.vmem [#allocation2], 48
    %v2505 = vld [vmem:[%s2504] sm:$0xff]
    %v2506 = vadd.f32 %v2505, %v2361
    %v2507 = vxor.u32 %v2506, 2147483648
    %v2508 = vmul.f32 %v2507, 1.442695
    %v2509 = vpow.pop %v2508
    %v2510 = vadd.f32 %v2509, 1.0
    %v2511 = vrcp.pop %v2510
    %v2512 = vmul.f32 1.0, %v2511
    %s2513 = scalar_lea.vmem [#allocation3], 48
    %v2514 = vld [vmem:[%s2513] sm:$0xff]
    %v2515 = vadd.f32 %v2514, %v2431
    %v2516 = vxor.u32 %v2515, 2147483648
    %v2517 = vmul.f32 %v2516, 1.442695
    %v2518 = vpow.pop %v2517
    %v2519 = vadd.f32 %v2518, 1.0
    %v2520 = vrcp.pop %v2519
    %v2521 = vmul.f32 1.0, %v2520
    %s2522 = scalar_lea.vmem [#allocation4], 48
    %v2523 = vld [vmem:[%s2522] sm:$0xff]
    %v2524 = vmul.f32 %v2512, %v2501
    %v2525 = vadd.f32 %v2523, %v2524
    %v2526 = vtanh.pop %v2525
    %v2527 = vsub.f32 1.0, %v2521
    %v2528 = vmul.f32 %v2527, %v2526
    %v2529 = vmul.f32 %v2521, %v2290
    %v2530 = vadd.f32 %v2528, %v2529
    %v2532 = vsel %vm334, %v2530, 0
    %2534 = vmatprep.subr.mxu0 0.0
    %2535 = vmatpush1.msra.mxu0 %v833
    %2536 = vmatprep.subr.mxu0 0.0
    %2537 = vmatpush1.msra.mxu0 %v834
    %2538 = vmatprep.subr.mxu0 0.0
    %2539 = vmatpush1.msra.mxu0 %v835
    %2540 = vmatprep.subr.mxu0 0.0
    %2541 = vmatpush1.msra.mxu0 %v836
    %2542 = vmatprep.subr.mxu0 0.0
    %2543 = vmatpush1.msra.mxu0 0.0
    %2544 = vmatprep.subr.mxu0 0.0
    %2545 = vmatpush1.msra.mxu0 0.0
    %2546 = vmatprep.subr.mxu0 0.0
    %2547 = vmatpush1.msra.mxu0 0.0
    %2548 = vmatprep.subr.mxu0 0.0
    %2549 = vmatpush1.msra.mxu0 0.0
    %2550 = vmatprep.subr.mxu0 0.0
    %2551 = vmatpush1.msra.mxu0 0.0
    %2552 = vmatprep.subr.mxu0 0.0
    %2553 = vmatpush1.msra.mxu0 0.0
    %2554 = vmatprep.subr.mxu0 0.0
    %2555 = vmatpush1.msra.mxu0 0.0
    %2556 = vmatprep.subr.mxu0 0.0
    %2557 = vmatpush1.msra.mxu0 0.0
    %2558 = vmatprep.subr.mxu0 0.0
    %2559 = vmatpush1.msra.mxu0 0.0
    %2560 = vmatprep.subr.mxu0 0.0
    %2561 = vmatpush1.msra.mxu0 0.0
    %2562 = vmatprep.subr.mxu0 0.0
    %2563 = vmatpush1.msra.mxu0 0.0
    %2564 = vmatprep.subr.mxu0 0.0
    %2565 = vmatpush1.msra.mxu0 0.0
    %2566 = vmatprep.subr.mxu0 0.0
    %2567 = vmatpush1.msra.mxu0 0.0
    %2568 = vmatprep.subr.mxu0 0.0
    %2569 = vmatpush1.msra.mxu0 0.0
    %2570 = vmatprep.subr.mxu0 0.0
    %2571 = vmatpush1.msra.mxu0 0.0
    %2572 = vmatprep.subr.mxu0 0.0
    %2573 = vmatpush1.msra.mxu0 0.0
    %2574 = vmatprep.subr.mxu0 0.0
    %2575 = vmatpush1.msra.mxu0 0.0
    %2576 = vmatprep.subr.mxu0 0.0
    %2577 = vmatpush1.msra.mxu0 0.0
    %2578 = vmatprep.subr.mxu0 0.0
    %2579 = vmatpush1.msra.mxu0 0.0
    %2580 = vmatprep.subr.mxu0 0.0
    %2581 = vmatpush1.msra.mxu0 0.0
    %2582 = vmatprep.subr.mxu0 0.0
    %2583 = vmatpush1.msra.mxu0 0.0
    %2584 = vmatprep.subr.mxu0 0.0
    %2585 = vmatpush1.msra.mxu0 0.0
    %2586 = vmatprep.subr.mxu0 0.0
    %2587 = vmatpush1.msra.mxu0 0.0
    %2588 = vmatprep.subr.mxu0 0.0
    %2589 = vmatpush1.msra.mxu0 0.0
    %2590 = vmatprep.subr.mxu0 0.0
    %2591 = vmatpush1.msra.mxu0 0.0
    %2592 = vmatprep.subr.mxu0 0.0
    %2593 = vmatpush1.msra.mxu0 0.0
    %2594 = vmatprep.subr.mxu0 0.0
    %2595 = vmatpush1.msra.mxu0 0.0
    %2596 = vmatprep.subr.mxu0 0.0
    %2597 = vmatpush1.msra.mxu0 0.0
    %2598 = vmatprep.mubr.f32.mxu0 0.0
    %2599 = vmatmul.mubr.f32.gmra.mrb[0].mxu0 %v2532
    %v2600 = vpop.f32.mrb[0].mxu0
    %v2601 = vadd.f32 0.0, %v2600
    %v2602 = vpop.f32.mrb[0].mxu0
    %2603 = vdwg.mxu0
    %2604 = vmatprep.subr.mxu0 0.0
    %2605 = vmatpush1.msra.mxu0 %v838
    %2606 = vmatprep.subr.mxu0 0.0
    %2607 = vmatpush1.msra.mxu0 %v839
    %2608 = vmatprep.subr.mxu0 0.0
    %2609 = vmatpush1.msra.mxu0 %v840
    %2610 = vmatprep.subr.mxu0 0.0
    %2611 = vmatpush1.msra.mxu0 %v841
    %2612 = vmatprep.subr.mxu0 0.0
    %2613 = vmatpush1.msra.mxu0 0.0
    %2614 = vmatprep.subr.mxu0 0.0
    %2615 = vmatpush1.msra.mxu0 0.0
    %2616 = vmatprep.subr.mxu0 0.0
    %2617 = vmatpush1.msra.mxu0 0.0
    %2618 = vmatprep.subr.mxu0 0.0
    %2619 = vmatpush1.msra.mxu0 0.0
    %2620 = vmatprep.subr.mxu0 0.0
    %2621 = vmatpush1.msra.mxu0 0.0
    %2622 = vmatprep.subr.mxu0 0.0
    %2623 = vmatpush1.msra.mxu0 0.0
    %2624 = vmatprep.subr.mxu0 0.0
    %2625 = vmatpush1.msra.mxu0 0.0
    %2626 = vmatprep.subr.mxu0 0.0
    %2627 = vmatpush1.msra.mxu0 0.0
    %2628 = vmatprep.subr.mxu0 0.0
    %2629 = vmatpush1.msra.mxu0 0.0
    %2630 = vmatprep.subr.mxu0 0.0
    %2631 = vmatpush1.msra.mxu0 0.0
    %2632 = vmatprep.subr.mxu0 0.0
    %2633 = vmatpush1.msra.mxu0 0.0
    %2634 = vmatprep.subr.mxu0 0.0
    %2635 = vmatpush1.msra.mxu0 0.0
    %2636 = vmatprep.subr.mxu0 0.0
    %2637 = vmatpush1.msra.mxu0 0.0
    %2638 = vmatprep.subr.mxu0 0.0
    %2639 = vmatpush1.msra.mxu0 0.0
    %2640 = vmatprep.subr.mxu0 0.0
    %2641 = vmatpush1.msra.mxu0 0.0
    %2642 = vmatprep.subr.mxu0 0.0
    %2643 = vmatpush1.msra.mxu0 0.0
    %2644 = vmatprep.subr.mxu0 0.0
    %2645 = vmatpush1.msra.mxu0 0.0
    %2646 = vmatprep.subr.mxu0 0.0
    %2647 = vmatpush1.msra.mxu0 0.0
    %2648 = vmatprep.subr.mxu0 0.0
    %2649 = vmatpush1.msra.mxu0 0.0
    %2650 = vmatprep.subr.mxu0 0.0
    %2651 = vmatpush1.msra.mxu0 0.0
    %2652 = vmatprep.subr.mxu0 0.0
    %2653 = vmatpush1.msra.mxu0 0.0
    %2654 = vmatprep.subr.mxu0 0.0
    %2655 = vmatpush1.msra.mxu0 0.0
    %2656 = vmatprep.subr.mxu0 0.0
    %2657 = vmatpush1.msra.mxu0 0.0
    %2658 = vmatprep.subr.mxu0 0.0
    %2659 = vmatpush1.msra.mxu0 0.0
    %2660 = vmatprep.subr.mxu0 0.0
    %2661 = vmatpush1.msra.mxu0 0.0
    %2662 = vmatprep.subr.mxu0 0.0
    %2663 = vmatpush1.msra.mxu0 0.0
    %2664 = vmatprep.subr.mxu0 0.0
    %2665 = vmatpush1.msra.mxu0 0.0
    %2666 = vmatprep.subr.mxu0 0.0
    %2667 = vmatpush1.msra.mxu0 0.0
    %2668 = vmatprep.mubr.f32.mxu0 0.0
    %2669 = vmatmul.mubr.f32.gmra.mrb[0].mxu0 %v2532
    %v2670 = vpop.f32.mrb[0].mxu0
    %v2671 = vadd.f32 0.0, %v2670
    %v2672 = vpop.f32.mrb[0].mxu0
    %2673 = vdwg.mxu0
    %2674 = vmatprep.subr.mxu0 0.0
    %2675 = vmatpush1.msra.mxu0 %v843
    %2676 = vmatprep.subr.mxu0 0.0
    %2677 = vmatpush1.msra.mxu0 %v844
    %2678 = vmatprep.subr.mxu0 0.0
    %2679 = vmatpush1.msra.mxu0 %v845
    %2680 = vmatprep.subr.mxu0 0.0
    %2681 = vmatpush1.msra.mxu0 %v846
    %2682 = vmatprep.subr.mxu0 0.0
    %2683 = vmatpush1.msra.mxu0 0.0
    %2684 = vmatprep.subr.mxu0 0.0
    %2685 = vmatpush1.msra.mxu0 0.0
    %2686 = vmatprep.subr.mxu0 0.0
    %2687 = vmatpush1.msra.mxu0 0.0
    %2688 = vmatprep.subr.mxu0 0.0
    %2689 = vmatpush1.msra.mxu0 0.0
    %2690 = vmatprep.subr.mxu0 0.0
    %2691 = vmatpush1.msra.mxu0 0.0
    %2692 = vmatprep.subr.mxu0 0.0
    %2693 = vmatpush1.msra.mxu0 0.0
    %2694 = vmatprep.subr.mxu0 0.0
    %2695 = vmatpush1.msra.mxu0 0.0
    %2696 = vmatprep.subr.mxu0 0.0
    %2697 = vmatpush1.msra.mxu0 0.0
    %2698 = vmatprep.subr.mxu0 0.0
    %2699 = vmatpush1.msra.mxu0 0.0
    %2700 = vmatprep.subr.mxu0 0.0
    %2701 = vmatpush1.msra.mxu0 0.0
    %2702 = vmatprep.subr.mxu0 0.0
    %2703 = vmatpush1.msra.mxu0 0.0
    %2704 = vmatprep.subr.mxu0 0.0
    %2705 = vmatpush1.msra.mxu0 0.0
    %2706 = vmatprep.subr.mxu0 0.0
    %2707 = vmatpush1.msra.mxu0 0.0
    %2708 = vmatprep.subr.mxu0 0.0
    %2709 = vmatpush1.msra.mxu0 0.0
    %2710 = vmatprep.subr.mxu0 0.0
    %2711 = vmatpush1.msra.mxu0 0.0
    %2712 = vmatprep.subr.mxu0 0.0
    %2713 = vmatpush1.msra.mxu0 0.0
    %2714 = vmatprep.subr.mxu0 0.0
    %2715 = vmatpush1.msra.mxu0 0.0
    %2716 = vmatprep.subr.mxu0 0.0
    %2717 = vmatpush1.msra.mxu0 0.0
    %2718 = vmatprep.subr.mxu0 0.0
    %2719 = vmatpush1.msra.mxu0 0.0
    %2720 = vmatprep.subr.mxu0 0.0
    %2721 = vmatpush1.msra.mxu0 0.0
    %2722 = vmatprep.subr.mxu0 0.0
    %2723 = vmatpush1.msra.mxu0 0.0
    %2724 = vmatprep.subr.mxu0 0.0
    %2725 = vmatpush1.msra.mxu0 0.0
    %2726 = vmatprep.subr.mxu0 0.0
    %2727 = vmatpush1.msra.mxu0 0.0
    %2728 = vmatprep.subr.mxu0 0.0
    %2729 = vmatpush1.msra.mxu0 0.0
    %2730 = vmatprep.subr.mxu0 0.0
    %2731 = vmatpush1.msra.mxu0 0.0
    %2732 = vmatprep.subr.mxu0 0.0
    %2733 = vmatpush1.msra.mxu0 0.0
    %2734 = vmatprep.subr.mxu0 0.0
    %2735 = vmatpush1.msra.mxu0 0.0
    %2736 = vmatprep.subr.mxu0 0.0
    %2737 = vmatpush1.msra.mxu0 0.0
    %2738 = vmatprep.mubr.f32.mxu0 0.0
    %2739 = vmatmul.mubr.f32.gmra.mrb[0].mxu0 %v2532
    %v2740 = vpop.f32.mrb[0].mxu0
    %v2741 = vadd.f32 %v995, %v2740
    %v2742 = vpop.f32.mrb[0].mxu0
    %2743 = vdwg.mxu0
    %s2744 = scalar_lea.vmem [#allocation2], 56
    %v2745 = vld [vmem:[%s2744] sm:$0xff]
    %v2746 = vadd.f32 %v2745, %v2601
    %v2747 = vxor.u32 %v2746, 2147483648
    %v2748 = vmul.f32 %v2747, 1.442695
    %v2749 = vpow.pop %v2748
    %v2750 = vadd.f32 %v2749, 1.0
    %v2751 = vrcp.pop %v2750
    %v2752 = vmul.f32 1.0, %v2751
    %s2753 = scalar_lea.vmem [#allocation3], 56
    %v2754 = vld [vmem:[%s2753] sm:$0xff]
    %v2755 = vadd.f32 %v2754, %v2671
    %v2756 = vxor.u32 %v2755, 2147483648
    %v2757 = vmul.f32 %v2756, 1.442695
    %v2758 = vpow.pop %v2757
    %v2759 = vadd.f32 %v2758, 1.0
    %v2760 = vrcp.pop %v2759
    %v2761 = vmul.f32 1.0, %v2760
    %s2762 = scalar_lea.vmem [#allocation4], 56
    %v2763 = vld [vmem:[%s2762] sm:$0xff]
    %v2764 = vmul.f32 %v2752, %v2741
    %v2765 = vadd.f32 %v2763, %v2764
    %v2766 = vtanh.pop %v2765
    %v2767 = vsub.f32 1.0, %v2761
    %v2768 = vmul.f32 %v2767, %v2766
    %v2769 = vmul.f32 %v2761, %v2530
    %v2770 = vadd.f32 %v2768, %v2769
    %v2771 = vmax.f32 %v2770, 0.0
    %v2772 = vld [vmem:[%s7] sm:$0xff]
    %v2773 = vld [vmem:[%s7 + $0x8] sm:$0xff]
    %v2774 = vld [vmem:[%s7 + $0x10] sm:$0xff]
    %v2775 = vld [vmem:[%s7 + $0x18] sm:$0xff]
    %v2776 = vld [vmem:[%s8] sm:$0x1]
    %v2778 = vlaneseq
    %v2779 = vshrl.u32 %v2778, 7
    %v2780 = vsub.s32 0, %v2779
    %v2781 = vrot.slane %v2776, %v2780
    %v2784 = vsel %vm334, %v2771, 0
    %2786 = vmatprep.subr.mxu0 0.0
    %2787 = vmatpush1.msra.mxu0 %v2772
    %2788 = vmatprep.subr.mxu0 0.0
    %2789 = vmatpush1.msra.mxu0 %v2773
    %2790 = vmatprep.subr.mxu0 0.0
    %2791 = vmatpush1.msra.mxu0 %v2774
    %2792 = vmatprep.subr.mxu0 0.0
    %2793 = vmatpush1.msra.mxu0 %v2775
    %2794 = vmatprep.subr.mxu0 0.0
    %2795 = vmatpush1.msra.mxu0 0.0
    %2796 = vmatprep.subr.mxu0 0.0
    %2797 = vmatpush1.msra.mxu0 0.0
    %2798 = vmatprep.subr.mxu0 0.0
    %2799 = vmatpush1.msra.mxu0 0.0
    %2800 = vmatprep.subr.mxu0 0.0
    %2801 = vmatpush1.msra.mxu0 0.0
    %2802 = vmatprep.subr.mxu0 0.0
    %2803 = vmatpush1.msra.mxu0 0.0
    %2804 = vmatprep.subr.mxu0 0.0
    %2805 = vmatpush1.msra.mxu0 0.0
    %2806 = vmatprep.subr.mxu0 0.0
    %2807 = vmatpush1.msra.mxu0 0.0
    %2808 = vmatprep.subr.mxu0 0.0
    %2809 = vmatpush1.msra.mxu0 0.0
    %2810 = vmatprep.subr.mxu0 0.0
    %2811 = vmatpush1.msra.mxu0 0.0
    %2812 = vmatprep.subr.mxu0 0.0
    %2813 = vmatpush1.msra.mxu0 0.0
    %2814 = vmatprep.subr.mxu0 0.0
    %2815 = vmatpush1.msra.mxu0 0.0
    %2816 = vmatprep.subr.mxu0 0.0
    %2817 = vmatpush1.msra.mxu0 0.0
    %2818 = vmatprep.subr.mxu0 0.0
    %2819 = vmatpush1.msra.mxu0 0.0
    %2820 = vmatprep.subr.mxu0 0.0
    %2821 = vmatpush1.msra.mxu0 0.0
    %2822 = vmatprep.subr.mxu0 0.0
    %2823 = vmatpush1.msra.mxu0 0.0
    %2824 = vmatprep.subr.mxu0 0.0
    %2825 = vmatpush1.msra.mxu0 0.0
    %2826 = vmatprep.subr.mxu0 0.0
    %2827 = vmatpush1.msra.mxu0 0.0
    %2828 = vmatprep.subr.mxu0 0.0
    %2829 = vmatpush1.msra.mxu0 0.0
    %2830 = vmatprep.subr.mxu0 0.0
    %2831 = vmatpush1.msra.mxu0 0.0
    %2832 = vmatprep.subr.mxu0 0.0
    %2833 = vmatpush1.msra.mxu0 0.0
    %2834 = vmatprep.subr.mxu0 0.0
    %2835 = vmatpush1.msra.mxu0 0.0
    %2836 = vmatprep.subr.mxu0 0.0
    %2837 = vmatpush1.msra.mxu0 0.0
    %2838 = vmatprep.subr.mxu0 0.0
    %2839 = vmatpush1.msra.mxu0 0.0
    %2840 = vmatprep.subr.mxu0 0.0
    %2841 = vmatpush1.msra.mxu0 0.0
    %2842 = vmatprep.subr.mxu0 0.0
    %2843 = vmatpush1.msra.mxu0 0.0
    %2844 = vmatprep.subr.mxu0 0.0
    %2845 = vmatpush1.msra.mxu0 0.0
    %2846 = vmatprep.subr.mxu0 0.0
    %2847 = vmatpush1.msra.mxu0 0.0
    %2848 = vmatprep.subr.mxu0 0.0
    %2849 = vmatpush1.msra.mxu0 0.0
    %2850 = vmatprep.mubr.f32.mxu0 0.0
    %2851 = vmatmul.mubr.f32.gmra.mrb[0].mxu0 %v2784
    %v2852 = vpop.f32.mrb[0].mxu0
    %v2853 = vadd.f32 %v2781, %v2852
    %v2854 = vpop.f32.mrb[0].mxu0
    %2855 = vdwg.mxu0
    %vm2856 = vcmask 64512
    %2857 = vst.msk [vmem:[#allocation5] sm:$0xff] %vm2856, %v2853
    // Predicated region
    $region38: #{tpu_custom_call.1} parent=1 // pred_check
      _
    $region39: #{tpu_custom_call.1} parent=1 // pred_check_branch
      %2859 = sbr.rel (0) target = $region41
    $region40: #{tpu_custom_call.1} parent=1 // pred_region
      %s2861 = ssub.s32 128, 128
      %2862 = vsyncadd [#allocation6], %s2861
      %s2864 = sshll.u32 [#allocation5], 4
      %s2865 = int_to_ptr.vmem [resolvable:$true] %s2864
      %2867 = dma.vmem_to_hbm [thread:$0]  %s2865, 128, %s9, [#allocation6]
    $region41: #{tpu_custom_call.1} parent=1 // pred_fallthru
      _
    // Predicated region
    $region42: #{tpu_custom_call.1} parent=1 // pred_check
      _
    $region43: #{tpu_custom_call.1} parent=1 // pred_check_branch
      %2869 = sbr.rel (0) target = $region45
    $region44: #{tpu_custom_call.1} parent=1 // pred_region
      %2870 = dma.done [#allocation6], 128
    $region45: #{tpu_custom_call.1} parent=1 // pred_fallthru
      _
    %2871 = vsyncpa [#allocation6], 1

</llo_original>
